<compile_context>
chip_gen: v6e
topology: v6e:2x2x1
jax: 0.10.0
libtpu: 0.0.40
codegen_flags: <defaults>
</compile_context>

<pallas_src>
import jax
import jax.numpy as jnp
from jax.experimental import pallas as pl
from jax.experimental.pallas import tpu as pltpu


# ----------------------------- fused Pallas kernel --------------------------

def _bilstm_encoder_kernel(xs_ref, w_fwd_ref, b_fwd_ref, w_bwd_ref, b_bwd_ref,
                           fc_h_w_ref, fc_h_b_ref, fc_c_w_ref, fc_c_b_ref,
                           out_fwd_ref, out_bwd_ref, hid_ref, cell_ref):
    """Whole bidirectional-LSTM encoder in one kernel.

    xs_ref:      [S, B, E]    embedded input sequence
    w_*_ref:     [(E+H), 4H]  stacked [W_ih^T ; W_hh^T], gate order (i, f, g, o)
    b_*_ref:     [1, 4H]      folded (b_ih + b_hh)
    fc_*_w_ref:  [2H, H]      fc weight, pre-transposed
    fc_*_b_ref:  [1, H]
    out_fwd_ref: [S, B, H]    forward hidden state per timestep
    out_bwd_ref: [S, B, H]    backward hidden state per timestep
    hid_ref:     [B, H]       fc_hidden(cat(h_fwd_final, h_bwd_final))
    cell_ref:    [B, H]       fc_cell  (cat(c_fwd_final, c_bwd_final))
    """
    S, B, E = xs_ref.shape
    H = hid_ref.shape[-1]

    # ---- hoist loop-invariant loads / broadcasts ---------------------------
    w_fwd = w_fwd_ref[...]                                   # [(E+H), 4H]
    w_bwd = w_bwd_ref[...]
    b_fwd = jnp.broadcast_to(b_fwd_ref[...], (B, 4 * H))     # broadcast once
    b_bwd = jnp.broadcast_to(b_bwd_ref[...], (B, 4 * H))

    def cell_step(x, h, c, w, b):
        # gates = [x, h] @ [W_ih^T ; W_hh^T] + (b_ih + b_hh)   (single MXU dot)
        xh = jnp.concatenate([x, h], axis=1)                  # [B, E+H]
        gates = jnp.dot(xh, w, preferred_element_type=jnp.float32) + b
        i = jax.nn.sigmoid(gates[:, 0:H])
        f = jax.nn.sigmoid(gates[:, H:2 * H])
        g = jnp.tanh(gates[:, 2 * H:3 * H])
        o = jax.nn.sigmoid(gates[:, 3 * H:4 * H])
        c_new = f * c + i * g
        h_new = o * jnp.tanh(c_new)
        return h_new, c_new

    zeros = jnp.zeros((B, H), jnp.float32)
    hf, cf = zeros, zeros        # forward  direction state
    hb, cb = zeros, zeros        # backward direction state

    # S is small and static -> fully unrolled; the fwd and bwd steps inside one
    # iteration are independent, letting MXU / VPU / EUP work overlap.
    for t in range(S):
        tb = S - 1 - t
        hf, cf = cell_step(xs_ref[t], hf, cf, w_fwd, b_fwd)
        out_fwd_ref[t, :, :] = hf
        hb, cb = cell_step(xs_ref[tb], hb, cb, w_bwd, b_bwd)
        out_bwd_ref[tb, :, :] = hb

    # ---- fc_hidden / fc_cell heads (cat(fwd, bwd) along features) ----------
    hcat = jnp.concatenate([hf, hb], axis=1)                  # [B, 2H]
    ccat = jnp.concatenate([cf, cb], axis=1)
    hid_ref[...] = (jnp.dot(hcat, fc_h_w_ref[...],
                            preferred_element_type=jnp.float32)
                    + fc_h_b_ref[...])
    cell_ref[...] = (jnp.dot(ccat, fc_c_w_ref[...],
                             preferred_element_type=jnp.float32)
                     + fc_c_b_ref[...])


# -------------------------------- wrapper -----------------------------------

def encoder_forward(params, tokens):
    """tokens: [B, S] int32 -> (output [B, S, 2H], hidden [1, B, H], cell [1, B, H]).

    Matches PyTorch encoder.forward with bidirectional=True, layers=1,
    batch_first=True.
    """
    emb = jnp.take(params["embed"], tokens, axis=0)           # [B, S, E]
    xs = jnp.swapaxes(emb, 0, 1)                              # [S, B, E]
    S, B, E = xs.shape
    H = params["fc_hidden_b"].shape[1]

    vmem = pl.BlockSpec(memory_space=pltpu.MemorySpace.VMEM)
    out_fwd, out_bwd, hidden, cell = pl.pallas_call(
        _bilstm_encoder_kernel,
        out_shape=(jax.ShapeDtypeStruct((S, B, H), jnp.float32),
                   jax.ShapeDtypeStruct((S, B, H), jnp.float32),
                   jax.ShapeDtypeStruct((B, H), jnp.float32),
                   jax.ShapeDtypeStruct((B, H), jnp.float32)),
        in_specs=[vmem] * 9,
        out_specs=(vmem, vmem, vmem, vmem),
    )(xs,
      params["w_fwd"], params["b_fwd"],
      params["w_bwd"], params["b_bwd"],
      params["fc_hidden_w_t"], params["fc_hidden_b"],
      params["fc_cell_w_t"], params["fc_cell_b"])

    output = jnp.concatenate([out_fwd, out_bwd], axis=-1)     # [S, B, 2H]
    output = jnp.swapaxes(output, 0, 1)                       # [B, S, 2H] (batch_first)
    hidden_state = hidden[None]                               # [1, B, H]
    cell_state = cell[None]                                   # [1, B, H]
    return output, hidden_state, cell_state


encoder_forward_jit = jax.jit(encoder_forward)


# ------------------------- pure-JAX reference (check) ------------------------

def encoder_reference(params, tokens):
    emb = jnp.take(params["embed"], tokens, axis=0)
    xs = jnp.swapaxes(emb, 0, 1)                              # [S, B, E]
    S, B, E = xs.shape
    H = params["fc_hidden_b"].shape[1]

    def run(xseq, w, b):
        h = jnp.zeros((B, H), jnp.float32)
        c = jnp.zeros((B, H), jnp.float32)
        hs = []
        for t in range(S):
            gates = jnp.concatenate([xseq[t], h], axis=1) @ w + b
            i = jax.nn.sigmoid(gates[:, 0:H])
            f = jax.nn.sigmoid(gates[:, H:2 * H])
            g = jnp.tanh(gates[:, 2 * H:3 * H])
            o = jax.nn.sigmoid(gates[:, 3 * H:4 * H])
            c = f * c + i * g
            h = o * jnp.tanh(c)
            hs.append(h)
        return jnp.stack(hs), h, c

    hs_f, hf, cf = run(xs, params["w_fwd"], params["b_fwd"])
    hs_b, hb, cb = run(xs[::-1], params["w_bwd"], params["b_bwd"])
    out = jnp.concatenate([hs_f, hs_b[::-1]], axis=-1)        # [S, B, 2H]
    out = jnp.swapaxes(out, 0, 1)
    hid = jnp.concatenate([hf, hb], axis=1) @ params["fc_hidden_w_t"] + params["fc_hidden_b"]
    cel = jnp.concatenate([cf, cb], axis=1) @ params["fc_cell_w_t"] + params["fc_cell_b"]
    return out, hid[None], cel[None]


# --------------------------- parameter construction --------------------------

def init_params(key, vocab, E, H):
    ks = jax.random.split(key, 9)

    def u(k, shape, scale=0.1):
        return jax.random.uniform(k, shape, jnp.float32, -scale, scale)

    return dict(
        embed=u(ks[0], (vocab, E)),
        # stacked [W_ih^T ; W_hh^T] -> [(E+H), 4H], gate order (i, f, g, o)
        w_fwd=u(ks[1], (E + H, 4 * H)),
        b_fwd=u(ks[2], (1, 4 * H)),        # b_ih + b_hh folded together
        w_bwd=u(ks[3], (E + H, 4 * H)),
        b_bwd=u(ks[4], (1, 4 * H)),
        fc_hidden_w_t=u(ks[5], (2 * H, H)), fc_hidden_b=u(ks[6], (1, H)),
        fc_cell_w_t=u(ks[7], (2 * H, H)),   fc_cell_b=u(ks[8], (1, H)),
    )


# ----------------------------------- main ------------------------------------

if __name__ == "__main__":
    key = jax.random.PRNGKey(0)
    k_par, k_tok = jax.random.split(key, 2)

    B = 8          # batch (fills vreg sublanes)
    S = 8          # sentence length
    E = 128        # embedding_size (lane-dense small stand-in for 256)
    H = 128        # hidden_size    (lane-dense small stand-in for 256)
    VOCAB = 48     # English vocab size

    params = init_params(k_par, VOCAB, E, H)
    tokens = jax.random.randint(k_tok, (B, S), 0, VOCAB, dtype=jnp.int32)

    out, hidden, cell = encoder_forward_jit(params, tokens)
    out, hidden, cell = jax.block_until_ready((out, hidden, cell))

    assert out.shape == (B, S, 2 * H), out.shape
    assert hidden.shape == (1, B, H), hidden.shape
    assert cell.shape == (1, B, H), cell.shape
    assert out.dtype == hidden.dtype == cell.dtype == jnp.float32
    assert bool(jnp.all(jnp.isfinite(out)))
    assert bool(jnp.all(jnp.isfinite(hidden)))
    assert bool(jnp.all(jnp.isfinite(cell)))

    # numerical check against a pure-JAX reference of the same math
    ref_out, ref_hid, ref_cell = encoder_reference(params, tokens)
    assert bool(jnp.allclose(out, ref_out, atol=2e-3, rtol=2e-3))
    assert bool(jnp.allclose(hidden, ref_hid, atol=2e-3, rtol=2e-3))
    assert bool(jnp.allclose(cell, ref_cell, atol=2e-3, rtol=2e-3))

    print("KERNEL_OK")
</pallas_src>

<mosaic_0001>
module attributes {stable_mosaic.version = 11 : i64} {
  func.func @_bilstm_encoder_kernel(%arg0: memref<8x8x128xf32, #tpu.memory_space<vmem>>, %arg1: memref<256x512xf32, #tpu.memory_space<vmem>>, %arg2: memref<1x512xf32, #tpu.memory_space<vmem>>, %arg3: memref<256x512xf32, #tpu.memory_space<vmem>>, %arg4: memref<1x512xf32, #tpu.memory_space<vmem>>, %arg5: memref<256x128xf32, #tpu.memory_space<vmem>>, %arg6: memref<1x128xf32, #tpu.memory_space<vmem>>, %arg7: memref<256x128xf32, #tpu.memory_space<vmem>>, %arg8: memref<1x128xf32, #tpu.memory_space<vmem>>, %arg9: memref<8x8x128xf32, #tpu.memory_space<vmem>>, %arg10: memref<8x8x128xf32, #tpu.memory_space<vmem>>, %arg11: memref<8x128xf32, #tpu.memory_space<vmem>>, %arg12: memref<8x128xf32, #tpu.memory_space<vmem>>) attributes {dimension_semantics = [], scalar_prefetch = 0 : i64, scratch_operands = 0 : i64, tpu.core_type = #tpu.core_type<tc>} {
    %c0 = arith.constant 0 : index
    %c0_0 = arith.constant 0 : index
    %0 = vector.load %arg1[%c0, %c0_0] : memref<256x512xf32, #tpu.memory_space<vmem>>, vector<256x512xf32>
    %c0_1 = arith.constant 0 : index
    %c0_2 = arith.constant 0 : index
    %1 = vector.load %arg3[%c0_1, %c0_2] : memref<256x512xf32, #tpu.memory_space<vmem>>, vector<256x512xf32>
    %c0_3 = arith.constant 0 : index
    %c0_4 = arith.constant 0 : index
    %2 = vector.load %arg2[%c0_3, %c0_4] : memref<1x512xf32, #tpu.memory_space<vmem>>, vector<1x512xf32>
    %3 = vector.shape_cast %2 : vector<1x512xf32> to vector<1x512xf32>
    %4 = vector.broadcast %3 : vector<1x512xf32> to vector<8x512xf32>
    %c0_5 = arith.constant 0 : index
    %c0_6 = arith.constant 0 : index
    %5 = vector.load %arg4[%c0_5, %c0_6] : memref<1x512xf32, #tpu.memory_space<vmem>>, vector<1x512xf32>
    %6 = vector.shape_cast %5 : vector<1x512xf32> to vector<1x512xf32>
    %7 = vector.broadcast %6 : vector<1x512xf32> to vector<8x512xf32>
    %cst = arith.constant 0.000000e+00 : f32
    %8 = vector.broadcast %cst : f32 to vector<8x128xf32>
    %c0_7 = arith.constant 0 : index
    %c0_8 = arith.constant 0 : index
    %c0_9 = arith.constant 0 : index
    %9 = vector.load %arg0[%c0_7, %c0_8, %c0_9] : memref<8x8x128xf32, #tpu.memory_space<vmem>>, vector<1x8x128xf32>
    %10 = vector.shape_cast %9 : vector<1x8x128xf32> to vector<8x128xf32>
    %11 = tpu.concatenate %10, %8 in 1 : vector<8x128xf32>, vector<8x128xf32> -> vector<8x256xf32>
    %cst_10 = arith.constant dense<0.000000e+00> : vector<8x512xf32>
    %12 = tpu.matmul %11, %0, %cst_10 {dimension_numbers = #tpu.dot_dimension_numbers<[1], [0], [0], [1], [0, 0, 1, 1], [], []>} : vector<8x256xf32>, vector<256x512xf32>, vector<8x512xf32> -> vector<8x512xf32>
    %13 = arith.addf %12, %4 : vector<8x512xf32>
    %14 = vector.extract_strided_slice %13 {offsets = [0, 0], sizes = [8, 128], strides = [1, 1]} : vector<8x512xf32> to vector<8x128xf32>
    %15 = arith.negf %14 : vector<8x128xf32>
    %16 = math.exp %15 : vector<8x128xf32>
    %cst_11 = arith.constant 1.000000e+00 : f32
    %17 = vector.broadcast %cst_11 : f32 to vector<8x128xf32>
    %18 = arith.addf %17, %16 : vector<8x128xf32>
    %19 = arith.divf %17, %18 : vector<8x128xf32>
    %20 = vector.extract_strided_slice %13 {offsets = [0, 128], sizes = [8, 128], strides = [1, 1]} : vector<8x512xf32> to vector<8x128xf32>
    %21 = arith.negf %20 : vector<8x128xf32>
    %22 = math.exp %21 : vector<8x128xf32>
    %cst_12 = arith.constant 1.000000e+00 : f32
    %23 = vector.broadcast %cst_12 : f32 to vector<8x128xf32>
    %24 = arith.addf %23, %22 : vector<8x128xf32>
    %25 = arith.divf %23, %24 : vector<8x128xf32>
    %26 = vector.extract_strided_slice %13 {offsets = [0, 256], sizes = [8, 128], strides = [1, 1]} : vector<8x512xf32> to vector<8x128xf32>
    %27 = math.tanh %26 : vector<8x128xf32>
    %28 = vector.extract_strided_slice %13 {offsets = [0, 384], sizes = [8, 128], strides = [1, 1]} : vector<8x512xf32> to vector<8x128xf32>
    %29 = arith.negf %28 : vector<8x128xf32>
    %30 = math.exp %29 : vector<8x128xf32>
    %cst_13 = arith.constant 1.000000e+00 : f32
    %31 = vector.broadcast %cst_13 : f32 to vector<8x128xf32>
    %32 = arith.addf %31, %30 : vector<8x128xf32>
    %33 = arith.divf %31, %32 : vector<8x128xf32>
    %34 = arith.mulf %25, %8 : vector<8x128xf32>
    %35 = arith.mulf %19, %27 : vector<8x128xf32>
    %36 = arith.addf %34, %35 : vector<8x128xf32>
    %37 = math.tanh %36 : vector<8x128xf32>
    %38 = arith.mulf %33, %37 : vector<8x128xf32>
    %c0_14 = arith.constant 0 : index
    %c0_15 = arith.constant 0 : index
    %c0_16 = arith.constant 0 : index
    %39 = vector.load %arg9[%c0_14, %c0_15, %c0_16] : memref<8x8x128xf32, #tpu.memory_space<vmem>>, vector<1x8x128xf32>
    %40 = vector.shape_cast %39 : vector<1x8x128xf32> to vector<8x128xf32>
    %41 = vector.shape_cast %38 : vector<8x128xf32> to vector<1x8x128xf32>
    tpu.vector_store %arg9[%c0_14, %c0_15, %c0_16], %41 {strides = array<i32>} : memref<8x8x128xf32, #tpu.memory_space<vmem>>, vector<1x8x128xf32>,
    %c7 = arith.constant 7 : index
    %c0_17 = arith.constant 0 : index
    %c0_18 = arith.constant 0 : index
    %42 = vector.load %arg0[%c7, %c0_17, %c0_18] : memref<8x8x128xf32, #tpu.memory_space<vmem>>, vector<1x8x128xf32>
    %43 = vector.shape_cast %42 : vector<1x8x128xf32> to vector<8x128xf32>
    %44 = tpu.concatenate %43, %8 in 1 : vector<8x128xf32>, vector<8x128xf32> -> vector<8x256xf32>
    %cst_19 = arith.constant dense<0.000000e+00> : vector<8x512xf32>
    %45 = tpu.matmul %44, %1, %cst_19 {dimension_numbers = #tpu.dot_dimension_numbers<[1], [0], [0], [1], [0, 0, 1, 1], [], []>} : vector<8x256xf32>, vector<256x512xf32>, vector<8x512xf32> -> vector<8x512xf32>
    %46 = arith.addf %45, %7 : vector<8x512xf32>
    %47 = vector.extract_strided_slice %46 {offsets = [0, 0], sizes = [8, 128], strides = [1, 1]} : vector<8x512xf32> to vector<8x128xf32>
    %48 = arith.negf %47 : vector<8x128xf32>
    %49 = math.exp %48 : vector<8x128xf32>
    %cst_20 = arith.constant 1.000000e+00 : f32
    %50 = vector.broadcast %cst_20 : f32 to vector<8x128xf32>
    %51 = arith.addf %50, %49 : vector<8x128xf32>
    %52 = arith.divf %50, %51 : vector<8x128xf32>
    %53 = vector.extract_strided_slice %46 {offsets = [0, 128], sizes = [8, 128], strides = [1, 1]} : vector<8x512xf32> to vector<8x128xf32>
    %54 = arith.negf %53 : vector<8x128xf32>
    %55 = math.exp %54 : vector<8x128xf32>
    %cst_21 = arith.constant 1.000000e+00 : f32
    %56 = vector.broadcast %cst_21 : f32 to vector<8x128xf32>
    %57 = arith.addf %56, %55 : vector<8x128xf32>
    %58 = arith.divf %56, %57 : vector<8x128xf32>
    %59 = vector.extract_strided_slice %46 {offsets = [0, 256], sizes = [8, 128], strides = [1, 1]} : vector<8x512xf32> to vector<8x128xf32>
    %60 = math.tanh %59 : vector<8x128xf32>
    %61 = vector.extract_strided_slice %46 {offsets = [0, 384], sizes = [8, 128], strides = [1, 1]} : vector<8x512xf32> to vector<8x128xf32>
    %62 = arith.negf %61 : vector<8x128xf32>
    %63 = math.exp %62 : vector<8x128xf32>
    %cst_22 = arith.constant 1.000000e+00 : f32
    %64 = vector.broadcast %cst_22 : f32 to vector<8x128xf32>
    %65 = arith.addf %64, %63 : vector<8x128xf32>
    %66 = arith.divf %64, %65 : vector<8x128xf32>
    %67 = arith.mulf %58, %8 : vector<8x128xf32>
    %68 = arith.mulf %52, %60 : vector<8x128xf32>
    %69 = arith.addf %67, %68 : vector<8x128xf32>
    %70 = math.tanh %69 : vector<8x128xf32>
    %71 = arith.mulf %66, %70 : vector<8x128xf32>
    %c7_23 = arith.constant 7 : index
    %c0_24 = arith.constant 0 : index
    %c0_25 = arith.constant 0 : index
    %72 = vector.load %arg10[%c7_23, %c0_24, %c0_25] : memref<8x8x128xf32, #tpu.memory_space<vmem>>, vector<1x8x128xf32>
    %73 = vector.shape_cast %72 : vector<1x8x128xf32> to vector<8x128xf32>
    %74 = vector.shape_cast %71 : vector<8x128xf32> to vector<1x8x128xf32>
    tpu.vector_store %arg10[%c7_23, %c0_24, %c0_25], %74 {strides = array<i32>} : memref<8x8x128xf32, #tpu.memory_space<vmem>>, vector<1x8x128xf32>,
    %c1 = arith.constant 1 : index
    %c0_26 = arith.constant 0 : index
    %c0_27 = arith.constant 0 : index
    %75 = vector.load %arg0[%c1, %c0_26, %c0_27] : memref<8x8x128xf32, #tpu.memory_space<vmem>>, vector<1x8x128xf32>
    %76 = vector.shape_cast %75 : vector<1x8x128xf32> to vector<8x128xf32>
    %77 = tpu.concatenate %76, %38 in 1 : vector<8x128xf32>, vector<8x128xf32> -> vector<8x256xf32>
    %cst_28 = arith.constant dense<0.000000e+00> : vector<8x512xf32>
    %78 = tpu.matmul %77, %0, %cst_28 {dimension_numbers = #tpu.dot_dimension_numbers<[1], [0], [0], [1], [0, 0, 1, 1], [], []>} : vector<8x256xf32>, vector<256x512xf32>, vector<8x512xf32> -> vector<8x512xf32>
    %79 = arith.addf %78, %4 : vector<8x512xf32>
    %80 = vector.extract_strided_slice %79 {offsets = [0, 0], sizes = [8, 128], strides = [1, 1]} : vector<8x512xf32> to vector<8x128xf32>
    %81 = arith.negf %80 : vector<8x128xf32>
    %82 = math.exp %81 : vector<8x128xf32>
    %cst_29 = arith.constant 1.000000e+00 : f32
    %83 = vector.broadcast %cst_29 : f32 to vector<8x128xf32>
    %84 = arith.addf %83, %82 : vector<8x128xf32>
    %85 = arith.divf %83, %84 : vector<8x128xf32>
    %86 = vector.extract_strided_slice %79 {offsets = [0, 128], sizes = [8, 128], strides = [1, 1]} : vector<8x512xf32> to vector<8x128xf32>
    %87 = arith.negf %86 : vector<8x128xf32>
    %88 = math.exp %87 : vector<8x128xf32>
    %cst_30 = arith.constant 1.000000e+00 : f32
    %89 = vector.broadcast %cst_30 : f32 to vector<8x128xf32>
    %90 = arith.addf %89, %88 : vector<8x128xf32>
    %91 = arith.divf %89, %90 : vector<8x128xf32>
    %92 = vector.extract_strided_slice %79 {offsets = [0, 256], sizes = [8, 128], strides = [1, 1]} : vector<8x512xf32> to vector<8x128xf32>
    %93 = math.tanh %92 : vector<8x128xf32>
    %94 = vector.extract_strided_slice %79 {offsets = [0, 384], sizes = [8, 128], strides = [1, 1]} : vector<8x512xf32> to vector<8x128xf32>
    %95 = arith.negf %94 : vector<8x128xf32>
    %96 = math.exp %95 : vector<8x128xf32>
    %cst_31 = arith.constant 1.000000e+00 : f32
    %97 = vector.broadcast %cst_31 : f32 to vector<8x128xf32>
    %98 = arith.addf %97, %96 : vector<8x128xf32>
    %99 = arith.divf %97, %98 : vector<8x128xf32>
    %100 = arith.mulf %91, %36 : vector<8x128xf32>
    %101 = arith.mulf %85, %93 : vector<8x128xf32>
    %102 = arith.addf %100, %101 : vector<8x128xf32>
    %103 = math.tanh %102 : vector<8x128xf32>
    %104 = arith.mulf %99, %103 : vector<8x128xf32>
    %c1_32 = arith.constant 1 : index
    %c0_33 = arith.constant 0 : index
    %c0_34 = arith.constant 0 : index
    %105 = vector.load %arg9[%c1_32, %c0_33, %c0_34] : memref<8x8x128xf32, #tpu.memory_space<vmem>>, vector<1x8x128xf32>
    %106 = vector.shape_cast %105 : vector<1x8x128xf32> to vector<8x128xf32>
    %107 = vector.shape_cast %104 : vector<8x128xf32> to vector<1x8x128xf32>
    tpu.vector_store %arg9[%c1_32, %c0_33, %c0_34], %107 {strides = array<i32>} : memref<8x8x128xf32, #tpu.memory_space<vmem>>, vector<1x8x128xf32>,
    %c6 = arith.constant 6 : index
    %c0_35 = arith.constant 0 : index
    %c0_36 = arith.constant 0 : index
    %108 = vector.load %arg0[%c6, %c0_35, %c0_36] : memref<8x8x128xf32, #tpu.memory_space<vmem>>, vector<1x8x128xf32>
    %109 = vector.shape_cast %108 : vector<1x8x128xf32> to vector<8x128xf32>
    %110 = tpu.concatenate %109, %71 in 1 : vector<8x128xf32>, vector<8x128xf32> -> vector<8x256xf32>
    %cst_37 = arith.constant dense<0.000000e+00> : vector<8x512xf32>
    %111 = tpu.matmul %110, %1, %cst_37 {dimension_numbers = #tpu.dot_dimension_numbers<[1], [0], [0], [1], [0, 0, 1, 1], [], []>} : vector<8x256xf32>, vector<256x512xf32>, vector<8x512xf32> -> vector<8x512xf32>
    %112 = arith.addf %111, %7 : vector<8x512xf32>
    %113 = vector.extract_strided_slice %112 {offsets = [0, 0], sizes = [8, 128], strides = [1, 1]} : vector<8x512xf32> to vector<8x128xf32>
    %114 = arith.negf %113 : vector<8x128xf32>
    %115 = math.exp %114 : vector<8x128xf32>
    %cst_38 = arith.constant 1.000000e+00 : f32
    %116 = vector.broadcast %cst_38 : f32 to vector<8x128xf32>
    %117 = arith.addf %116, %115 : vector<8x128xf32>
    %118 = arith.divf %116, %117 : vector<8x128xf32>
    %119 = vector.extract_strided_slice %112 {offsets = [0, 128], sizes = [8, 128], strides = [1, 1]} : vector<8x512xf32> to vector<8x128xf32>
    %120 = arith.negf %119 : vector<8x128xf32>
    %121 = math.exp %120 : vector<8x128xf32>
    %cst_39 = arith.constant 1.000000e+00 : f32
    %122 = vector.broadcast %cst_39 : f32 to vector<8x128xf32>
    %123 = arith.addf %122, %121 : vector<8x128xf32>
    %124 = arith.divf %122, %123 : vector<8x128xf32>
    %125 = vector.extract_strided_slice %112 {offsets = [0, 256], sizes = [8, 128], strides = [1, 1]} : vector<8x512xf32> to vector<8x128xf32>
    %126 = math.tanh %125 : vector<8x128xf32>
    %127 = vector.extract_strided_slice %112 {offsets = [0, 384], sizes = [8, 128], strides = [1, 1]} : vector<8x512xf32> to vector<8x128xf32>
    %128 = arith.negf %127 : vector<8x128xf32>
    %129 = math.exp %128 : vector<8x128xf32>
    %cst_40 = arith.constant 1.000000e+00 : f32
    %130 = vector.broadcast %cst_40 : f32 to vector<8x128xf32>
    %131 = arith.addf %130, %129 : vector<8x128xf32>
    %132 = arith.divf %130, %131 : vector<8x128xf32>
    %133 = arith.mulf %124, %69 : vector<8x128xf32>
    %134 = arith.mulf %118, %126 : vector<8x128xf32>
    %135 = arith.addf %133, %134 : vector<8x128xf32>
    %136 = math.tanh %135 : vector<8x128xf32>
    %137 = arith.mulf %132, %136 : vector<8x128xf32>
    %c6_41 = arith.constant 6 : index
    %c0_42 = arith.constant 0 : index
    %c0_43 = arith.constant 0 : index
    %138 = vector.load %arg10[%c6_41, %c0_42, %c0_43] : memref<8x8x128xf32, #tpu.memory_space<vmem>>, vector<1x8x128xf32>
    %139 = vector.shape_cast %138 : vector<1x8x128xf32> to vector<8x128xf32>
    %140 = vector.shape_cast %137 : vector<8x128xf32> to vector<1x8x128xf32>
    tpu.vector_store %arg10[%c6_41, %c0_42, %c0_43], %140 {strides = array<i32>} : memref<8x8x128xf32, #tpu.memory_space<vmem>>, vector<1x8x128xf32>,
    %c2 = arith.constant 2 : index
    %c0_44 = arith.constant 0 : index
    %c0_45 = arith.constant 0 : index
    %141 = vector.load %arg0[%c2, %c0_44, %c0_45] : memref<8x8x128xf32, #tpu.memory_space<vmem>>, vector<1x8x128xf32>
    %142 = vector.shape_cast %141 : vector<1x8x128xf32> to vector<8x128xf32>
    %143 = tpu.concatenate %142, %104 in 1 : vector<8x128xf32>, vector<8x128xf32> -> vector<8x256xf32>
    %cst_46 = arith.constant dense<0.000000e+00> : vector<8x512xf32>
    %144 = tpu.matmul %143, %0, %cst_46 {dimension_numbers = #tpu.dot_dimension_numbers<[1], [0], [0], [1], [0, 0, 1, 1], [], []>} : vector<8x256xf32>, vector<256x512xf32>, vector<8x512xf32> -> vector<8x512xf32>
    %145 = arith.addf %144, %4 : vector<8x512xf32>
    %146 = vector.extract_strided_slice %145 {offsets = [0, 0], sizes = [8, 128], strides = [1, 1]} : vector<8x512xf32> to vector<8x128xf32>
    %147 = arith.negf %146 : vector<8x128xf32>
    %148 = math.exp %147 : vector<8x128xf32>
    %cst_47 = arith.constant 1.000000e+00 : f32
    %149 = vector.broadcast %cst_47 : f32 to vector<8x128xf32>
    %150 = arith.addf %149, %148 : vector<8x128xf32>
    %151 = arith.divf %149, %150 : vector<8x128xf32>
    %152 = vector.extract_strided_slice %145 {offsets = [0, 128], sizes = [8, 128], strides = [1, 1]} : vector<8x512xf32> to vector<8x128xf32>
    %153 = arith.negf %152 : vector<8x128xf32>
    %154 = math.exp %153 : vector<8x128xf32>
    %cst_48 = arith.constant 1.000000e+00 : f32
    %155 = vector.broadcast %cst_48 : f32 to vector<8x128xf32>
    %156 = arith.addf %155, %154 : vector<8x128xf32>
    %157 = arith.divf %155, %156 : vector<8x128xf32>
    %158 = vector.extract_strided_slice %145 {offsets = [0, 256], sizes = [8, 128], strides = [1, 1]} : vector<8x512xf32> to vector<8x128xf32>
    %159 = math.tanh %158 : vector<8x128xf32>
    %160 = vector.extract_strided_slice %145 {offsets = [0, 384], sizes = [8, 128], strides = [1, 1]} : vector<8x512xf32> to vector<8x128xf32>
    %161 = arith.negf %160 : vector<8x128xf32>
    %162 = math.exp %161 : vector<8x128xf32>
    %cst_49 = arith.constant 1.000000e+00 : f32
    %163 = vector.broadcast %cst_49 : f32 to vector<8x128xf32>
    %164 = arith.addf %163, %162 : vector<8x128xf32>
    %165 = arith.divf %163, %164 : vector<8x128xf32>
    %166 = arith.mulf %157, %102 : vector<8x128xf32>
    %167 = arith.mulf %151, %159 : vector<8x128xf32>
    %168 = arith.addf %166, %167 : vector<8x128xf32>
    %169 = math.tanh %168 : vector<8x128xf32>
    %170 = arith.mulf %165, %169 : vector<8x128xf32>
    %c2_50 = arith.constant 2 : index
    %c0_51 = arith.constant 0 : index
    %c0_52 = arith.constant 0 : index
    %171 = vector.load %arg9[%c2_50, %c0_51, %c0_52] : memref<8x8x128xf32, #tpu.memory_space<vmem>>, vector<1x8x128xf32>
    %172 = vector.shape_cast %171 : vector<1x8x128xf32> to vector<8x128xf32>
    %173 = vector.shape_cast %170 : vector<8x128xf32> to vector<1x8x128xf32>
    tpu.vector_store %arg9[%c2_50, %c0_51, %c0_52], %173 {strides = array<i32>} : memref<8x8x128xf32, #tpu.memory_space<vmem>>, vector<1x8x128xf32>,
    %c5 = arith.constant 5 : index
    %c0_53 = arith.constant 0 : index
    %c0_54 = arith.constant 0 : index
    %174 = vector.load %arg0[%c5, %c0_53, %c0_54] : memref<8x8x128xf32, #tpu.memory_space<vmem>>, vector<1x8x128xf32>
    %175 = vector.shape_cast %174 : vector<1x8x128xf32> to vector<8x128xf32>
    %176 = tpu.concatenate %175, %137 in 1 : vector<8x128xf32>, vector<8x128xf32> -> vector<8x256xf32>
    %cst_55 = arith.constant dense<0.000000e+00> : vector<8x512xf32>
    %177 = tpu.matmul %176, %1, %cst_55 {dimension_numbers = #tpu.dot_dimension_numbers<[1], [0], [0], [1], [0, 0, 1, 1], [], []>} : vector<8x256xf32>, vector<256x512xf32>, vector<8x512xf32> -> vector<8x512xf32>
    %178 = arith.addf %177, %7 : vector<8x512xf32>
    %179 = vector.extract_strided_slice %178 {offsets = [0, 0], sizes = [8, 128], strides = [1, 1]} : vector<8x512xf32> to vector<8x128xf32>
    %180 = arith.negf %179 : vector<8x128xf32>
    %181 = math.exp %180 : vector<8x128xf32>
    %cst_56 = arith.constant 1.000000e+00 : f32
    %182 = vector.broadcast %cst_56 : f32 to vector<8x128xf32>
    %183 = arith.addf %182, %181 : vector<8x128xf32>
    %184 = arith.divf %182, %183 : vector<8x128xf32>
    %185 = vector.extract_strided_slice %178 {offsets = [0, 128], sizes = [8, 128], strides = [1, 1]} : vector<8x512xf32> to vector<8x128xf32>
    %186 = arith.negf %185 : vector<8x128xf32>
    %187 = math.exp %186 : vector<8x128xf32>
    %cst_57 = arith.constant 1.000000e+00 : f32
    %188 = vector.broadcast %cst_57 : f32 to vector<8x128xf32>
    %189 = arith.addf %188, %187 : vector<8x128xf32>
    %190 = arith.divf %188, %189 : vector<8x128xf32>
    %191 = vector.extract_strided_slice %178 {offsets = [0, 256], sizes = [8, 128], strides = [1, 1]} : vector<8x512xf32> to vector<8x128xf32>
    %192 = math.tanh %191 : vector<8x128xf32>
    %193 = vector.extract_strided_slice %178 {offsets = [0, 384], sizes = [8, 128], strides = [1, 1]} : vector<8x512xf32> to vector<8x128xf32>
    %194 = arith.negf %193 : vector<8x128xf32>
    %195 = math.exp %194 : vector<8x128xf32>
    %cst_58 = arith.constant 1.000000e+00 : f32
    %196 = vector.broadcast %cst_58 : f32 to vector<8x128xf32>
    %197 = arith.addf %196, %195 : vector<8x128xf32>
    %198 = arith.divf %196, %197 : vector<8x128xf32>
    %199 = arith.mulf %190, %135 : vector<8x128xf32>
    %200 = arith.mulf %184, %192 : vector<8x128xf32>
    %201 = arith.addf %199, %200 : vector<8x128xf32>
    %202 = math.tanh %201 : vector<8x128xf32>
    %203 = arith.mulf %198, %202 : vector<8x128xf32>
    %c5_59 = arith.constant 5 : index
    %c0_60 = arith.constant 0 : index
    %c0_61 = arith.constant 0 : index
    %204 = vector.load %arg10[%c5_59, %c0_60, %c0_61] : memref<8x8x128xf32, #tpu.memory_space<vmem>>, vector<1x8x128xf32>
    %205 = vector.shape_cast %204 : vector<1x8x128xf32> to vector<8x128xf32>
    %206 = vector.shape_cast %203 : vector<8x128xf32> to vector<1x8x128xf32>
    tpu.vector_store %arg10[%c5_59, %c0_60, %c0_61], %206 {strides = array<i32>} : memref<8x8x128xf32, #tpu.memory_space<vmem>>, vector<1x8x128xf32>,
    %c3 = arith.constant 3 : index
    %c0_62 = arith.constant 0 : index
    %c0_63 = arith.constant 0 : index
    %207 = vector.load %arg0[%c3, %c0_62, %c0_63] : memref<8x8x128xf32, #tpu.memory_space<vmem>>, vector<1x8x128xf32>
    %208 = vector.shape_cast %207 : vector<1x8x128xf32> to vector<8x128xf32>
    %209 = tpu.concatenate %208, %170 in 1 : vector<8x128xf32>, vector<8x128xf32> -> vector<8x256xf32>
    %cst_64 = arith.constant dense<0.000000e+00> : vector<8x512xf32>
    %210 = tpu.matmul %209, %0, %cst_64 {dimension_numbers = #tpu.dot_dimension_numbers<[1], [0], [0], [1], [0, 0, 1, 1], [], []>} : vector<8x256xf32>, vector<256x512xf32>, vector<8x512xf32> -> vector<8x512xf32>
    %211 = arith.addf %210, %4 : vector<8x512xf32>
    %212 = vector.extract_strided_slice %211 {offsets = [0, 0], sizes = [8, 128], strides = [1, 1]} : vector<8x512xf32> to vector<8x128xf32>
    %213 = arith.negf %212 : vector<8x128xf32>
    %214 = math.exp %213 : vector<8x128xf32>
    %cst_65 = arith.constant 1.000000e+00 : f32
    %215 = vector.broadcast %cst_65 : f32 to vector<8x128xf32>
    %216 = arith.addf %215, %214 : vector<8x128xf32>
    %217 = arith.divf %215, %216 : vector<8x128xf32>
    %218 = vector.extract_strided_slice %211 {offsets = [0, 128], sizes = [8, 128], strides = [1, 1]} : vector<8x512xf32> to vector<8x128xf32>
    %219 = arith.negf %218 : vector<8x128xf32>
    %220 = math.exp %219 : vector<8x128xf32>
    %cst_66 = arith.constant 1.000000e+00 : f32
    %221 = vector.broadcast %cst_66 : f32 to vector<8x128xf32>
    %222 = arith.addf %221, %220 : vector<8x128xf32>
    %223 = arith.divf %221, %222 : vector<8x128xf32>
    %224 = vector.extract_strided_slice %211 {offsets = [0, 256], sizes = [8, 128], strides = [1, 1]} : vector<8x512xf32> to vector<8x128xf32>
    %225 = math.tanh %224 : vector<8x128xf32>
    %226 = vector.extract_strided_slice %211 {offsets = [0, 384], sizes = [8, 128], strides = [1, 1]} : vector<8x512xf32> to vector<8x128xf32>
    %227 = arith.negf %226 : vector<8x128xf32>
    %228 = math.exp %227 : vector<8x128xf32>
    %cst_67 = arith.constant 1.000000e+00 : f32
    %229 = vector.broadcast %cst_67 : f32 to vector<8x128xf32>
    %230 = arith.addf %229, %228 : vector<8x128xf32>
    %231 = arith.divf %229, %230 : vector<8x128xf32>
    %232 = arith.mulf %223, %168 : vector<8x128xf32>
    %233 = arith.mulf %217, %225 : vector<8x128xf32>
    %234 = arith.addf %232, %233 : vector<8x128xf32>
    %235 = math.tanh %234 : vector<8x128xf32>
    %236 = arith.mulf %231, %235 : vector<8x128xf32>
    %c3_68 = arith.constant 3 : index
    %c0_69 = arith.constant 0 : index
    %c0_70 = arith.constant 0 : index
    %237 = vector.load %arg9[%c3_68, %c0_69, %c0_70] : memref<8x8x128xf32, #tpu.memory_space<vmem>>, vector<1x8x128xf32>
    %238 = vector.shape_cast %237 : vector<1x8x128xf32> to vector<8x128xf32>
    %239 = vector.shape_cast %236 : vector<8x128xf32> to vector<1x8x128xf32>
    tpu.vector_store %arg9[%c3_68, %c0_69, %c0_70], %239 {strides = array<i32>} : memref<8x8x128xf32, #tpu.memory_space<vmem>>, vector<1x8x128xf32>,
    %c4 = arith.constant 4 : index
    %c0_71 = arith.constant 0 : index
    %c0_72 = arith.constant 0 : index
    %240 = vector.load %arg0[%c4, %c0_71, %c0_72] : memref<8x8x128xf32, #tpu.memory_space<vmem>>, vector<1x8x128xf32>
    %241 = vector.shape_cast %240 : vector<1x8x128xf32> to vector<8x128xf32>
    %242 = tpu.concatenate %241, %203 in 1 : vector<8x128xf32>, vector<8x128xf32> -> vector<8x256xf32>
    %cst_73 = arith.constant dense<0.000000e+00> : vector<8x512xf32>
    %243 = tpu.matmul %242, %1, %cst_73 {dimension_numbers = #tpu.dot_dimension_numbers<[1], [0], [0], [1], [0, 0, 1, 1], [], []>} : vector<8x256xf32>, vector<256x512xf32>, vector<8x512xf32> -> vector<8x512xf32>
    %244 = arith.addf %243, %7 : vector<8x512xf32>
    %245 = vector.extract_strided_slice %244 {offsets = [0, 0], sizes = [8, 128], strides = [1, 1]} : vector<8x512xf32> to vector<8x128xf32>
    %246 = arith.negf %245 : vector<8x128xf32>
    %247 = math.exp %246 : vector<8x128xf32>
    %cst_74 = arith.constant 1.000000e+00 : f32
    %248 = vector.broadcast %cst_74 : f32 to vector<8x128xf32>
    %249 = arith.addf %248, %247 : vector<8x128xf32>
    %250 = arith.divf %248, %249 : vector<8x128xf32>
    %251 = vector.extract_strided_slice %244 {offsets = [0, 128], sizes = [8, 128], strides = [1, 1]} : vector<8x512xf32> to vector<8x128xf32>
    %252 = arith.negf %251 : vector<8x128xf32>
    %253 = math.exp %252 : vector<8x128xf32>
    %cst_75 = arith.constant 1.000000e+00 : f32
    %254 = vector.broadcast %cst_75 : f32 to vector<8x128xf32>
    %255 = arith.addf %254, %253 : vector<8x128xf32>
    %256 = arith.divf %254, %255 : vector<8x128xf32>
    %257 = vector.extract_strided_slice %244 {offsets = [0, 256], sizes = [8, 128], strides = [1, 1]} : vector<8x512xf32> to vector<8x128xf32>
    %258 = math.tanh %257 : vector<8x128xf32>
    %259 = vector.extract_strided_slice %244 {offsets = [0, 384], sizes = [8, 128], strides = [1, 1]} : vector<8x512xf32> to vector<8x128xf32>
    %260 = arith.negf %259 : vector<8x128xf32>
    %261 = math.exp %260 : vector<8x128xf32>
    %cst_76 = arith.constant 1.000000e+00 : f32
    %262 = vector.broadcast %cst_76 : f32 to vector<8x128xf32>
    %263 = arith.addf %262, %261 : vector<8x128xf32>
    %264 = arith.divf %262, %263 : vector<8x128xf32>
    %265 = arith.mulf %256, %201 : vector<8x128xf32>
    %266 = arith.mulf %250, %258 : vector<8x128xf32>
    %267 = arith.addf %265, %266 : vector<8x128xf32>
    %268 = math.tanh %267 : vector<8x128xf32>
    %269 = arith.mulf %264, %268 : vector<8x128xf32>
    %c4_77 = arith.constant 4 : index
    %c0_78 = arith.constant 0 : index
    %c0_79 = arith.constant 0 : index
    %270 = vector.load %arg10[%c4_77, %c0_78, %c0_79] : memref<8x8x128xf32, #tpu.memory_space<vmem>>, vector<1x8x128xf32>
    %271 = vector.shape_cast %270 : vector<1x8x128xf32> to vector<8x128xf32>
    %272 = vector.shape_cast %269 : vector<8x128xf32> to vector<1x8x128xf32>
    tpu.vector_store %arg10[%c4_77, %c0_78, %c0_79], %272 {strides = array<i32>} : memref<8x8x128xf32, #tpu.memory_space<vmem>>, vector<1x8x128xf32>,
    %c4_80 = arith.constant 4 : index
    %c0_81 = arith.constant 0 : index
    %c0_82 = arith.constant 0 : index
    %273 = vector.load %arg0[%c4_80, %c0_81, %c0_82] : memref<8x8x128xf32, #tpu.memory_space<vmem>>, vector<1x8x128xf32>
    %274 = vector.shape_cast %273 : vector<1x8x128xf32> to vector<8x128xf32>
    %275 = tpu.concatenate %274, %236 in 1 : vector<8x128xf32>, vector<8x128xf32> -> vector<8x256xf32>
    %cst_83 = arith.constant dense<0.000000e+00> : vector<8x512xf32>
    %276 = tpu.matmul %275, %0, %cst_83 {dimension_numbers = #tpu.dot_dimension_numbers<[1], [0], [0], [1], [0, 0, 1, 1], [], []>} : vector<8x256xf32>, vector<256x512xf32>, vector<8x512xf32> -> vector<8x512xf32>
    %277 = arith.addf %276, %4 : vector<8x512xf32>
    %278 = vector.extract_strided_slice %277 {offsets = [0, 0], sizes = [8, 128], strides = [1, 1]} : vector<8x512xf32> to vector<8x128xf32>
    %279 = arith.negf %278 : vector<8x128xf32>
    %280 = math.exp %279 : vector<8x128xf32>
    %cst_84 = arith.constant 1.000000e+00 : f32
    %281 = vector.broadcast %cst_84 : f32 to vector<8x128xf32>
    %282 = arith.addf %281, %280 : vector<8x128xf32>
    %283 = arith.divf %281, %282 : vector<8x128xf32>
    %284 = vector.extract_strided_slice %277 {offsets = [0, 128], sizes = [8, 128], strides = [1, 1]} : vector<8x512xf32> to vector<8x128xf32>
    %285 = arith.negf %284 : vector<8x128xf32>
    %286 = math.exp %285 : vector<8x128xf32>
    %cst_85 = arith.constant 1.000000e+00 : f32
    %287 = vector.broadcast %cst_85 : f32 to vector<8x128xf32>
    %288 = arith.addf %287, %286 : vector<8x128xf32>
    %289 = arith.divf %287, %288 : vector<8x128xf32>
    %290 = vector.extract_strided_slice %277 {offsets = [0, 256], sizes = [8, 128], strides = [1, 1]} : vector<8x512xf32> to vector<8x128xf32>
    %291 = math.tanh %290 : vector<8x128xf32>
    %292 = vector.extract_strided_slice %277 {offsets = [0, 384], sizes = [8, 128], strides = [1, 1]} : vector<8x512xf32> to vector<8x128xf32>
    %293 = arith.negf %292 : vector<8x128xf32>
    %294 = math.exp %293 : vector<8x128xf32>
    %cst_86 = arith.constant 1.000000e+00 : f32
    %295 = vector.broadcast %cst_86 : f32 to vector<8x128xf32>
    %296 = arith.addf %295, %294 : vector<8x128xf32>
    %297 = arith.divf %295, %296 : vector<8x128xf32>
    %298 = arith.mulf %289, %234 : vector<8x128xf32>
    %299 = arith.mulf %283, %291 : vector<8x128xf32>
    %300 = arith.addf %298, %299 : vector<8x128xf32>
    %301 = math.tanh %300 : vector<8x128xf32>
    %302 = arith.mulf %297, %301 : vector<8x128xf32>
    %c4_87 = arith.constant 4 : index
    %c0_88 = arith.constant 0 : index
    %c0_89 = arith.constant 0 : index
    %303 = vector.load %arg9[%c4_87, %c0_88, %c0_89] : memref<8x8x128xf32, #tpu.memory_space<vmem>>, vector<1x8x128xf32>
    %304 = vector.shape_cast %303 : vector<1x8x128xf32> to vector<8x128xf32>
    %305 = vector.shape_cast %302 : vector<8x128xf32> to vector<1x8x128xf32>
    tpu.vector_store %arg9[%c4_87, %c0_88, %c0_89], %305 {strides = array<i32>} : memref<8x8x128xf32, #tpu.memory_space<vmem>>, vector<1x8x128xf32>,
    %c3_90 = arith.constant 3 : index
    %c0_91 = arith.constant 0 : index
    %c0_92 = arith.constant 0 : index
    %306 = vector.load %arg0[%c3_90, %c0_91, %c0_92] : memref<8x8x128xf32, #tpu.memory_space<vmem>>, vector<1x8x128xf32>
    %307 = vector.shape_cast %306 : vector<1x8x128xf32> to vector<8x128xf32>
    %308 = tpu.concatenate %307, %269 in 1 : vector<8x128xf32>, vector<8x128xf32> -> vector<8x256xf32>
    %cst_93 = arith.constant dense<0.000000e+00> : vector<8x512xf32>
    %309 = tpu.matmul %308, %1, %cst_93 {dimension_numbers = #tpu.dot_dimension_numbers<[1], [0], [0], [1], [0, 0, 1, 1], [], []>} : vector<8x256xf32>, vector<256x512xf32>, vector<8x512xf32> -> vector<8x512xf32>
    %310 = arith.addf %309, %7 : vector<8x512xf32>
    %311 = vector.extract_strided_slice %310 {offsets = [0, 0], sizes = [8, 128], strides = [1, 1]} : vector<8x512xf32> to vector<8x128xf32>
    %312 = arith.negf %311 : vector<8x128xf32>
    %313 = math.exp %312 : vector<8x128xf32>
    %cst_94 = arith.constant 1.000000e+00 : f32
    %314 = vector.broadcast %cst_94 : f32 to vector<8x128xf32>
    %315 = arith.addf %314, %313 : vector<8x128xf32>
    %316 = arith.divf %314, %315 : vector<8x128xf32>
    %317 = vector.extract_strided_slice %310 {offsets = [0, 128], sizes = [8, 128], strides = [1, 1]} : vector<8x512xf32> to vector<8x128xf32>
    %318 = arith.negf %317 : vector<8x128xf32>
    %319 = math.exp %318 : vector<8x128xf32>
    %cst_95 = arith.constant 1.000000e+00 : f32
    %320 = vector.broadcast %cst_95 : f32 to vector<8x128xf32>
    %321 = arith.addf %320, %319 : vector<8x128xf32>
    %322 = arith.divf %320, %321 : vector<8x128xf32>
    %323 = vector.extract_strided_slice %310 {offsets = [0, 256], sizes = [8, 128], strides = [1, 1]} : vector<8x512xf32> to vector<8x128xf32>
    %324 = math.tanh %323 : vector<8x128xf32>
    %325 = vector.extract_strided_slice %310 {offsets = [0, 384], sizes = [8, 128], strides = [1, 1]} : vector<8x512xf32> to vector<8x128xf32>
    %326 = arith.negf %325 : vector<8x128xf32>
    %327 = math.exp %326 : vector<8x128xf32>
    %cst_96 = arith.constant 1.000000e+00 : f32
    %328 = vector.broadcast %cst_96 : f32 to vector<8x128xf32>
    %329 = arith.addf %328, %327 : vector<8x128xf32>
    %330 = arith.divf %328, %329 : vector<8x128xf32>
    %331 = arith.mulf %322, %267 : vector<8x128xf32>
    %332 = arith.mulf %316, %324 : vector<8x128xf32>
    %333 = arith.addf %331, %332 : vector<8x128xf32>
    %334 = math.tanh %333 : vector<8x128xf32>
    %335 = arith.mulf %330, %334 : vector<8x128xf32>
    %c3_97 = arith.constant 3 : index
    %c0_98 = arith.constant 0 : index
    %c0_99 = arith.constant 0 : index
    %336 = vector.load %arg10[%c3_97, %c0_98, %c0_99] : memref<8x8x128xf32, #tpu.memory_space<vmem>>, vector<1x8x128xf32>
    %337 = vector.shape_cast %336 : vector<1x8x128xf32> to vector<8x128xf32>
    %338 = vector.shape_cast %335 : vector<8x128xf32> to vector<1x8x128xf32>
    tpu.vector_store %arg10[%c3_97, %c0_98, %c0_99], %338 {strides = array<i32>} : memref<8x8x128xf32, #tpu.memory_space<vmem>>, vector<1x8x128xf32>,
    %c5_100 = arith.constant 5 : index
    %c0_101 = arith.constant 0 : index
    %c0_102 = arith.constant 0 : index
    %339 = vector.load %arg0[%c5_100, %c0_101, %c0_102] : memref<8x8x128xf32, #tpu.memory_space<vmem>>, vector<1x8x128xf32>
    %340 = vector.shape_cast %339 : vector<1x8x128xf32> to vector<8x128xf32>
    %341 = tpu.concatenate %340, %302 in 1 : vector<8x128xf32>, vector<8x128xf32> -> vector<8x256xf32>
    %cst_103 = arith.constant dense<0.000000e+00> : vector<8x512xf32>
    %342 = tpu.matmul %341, %0, %cst_103 {dimension_numbers = #tpu.dot_dimension_numbers<[1], [0], [0], [1], [0, 0, 1, 1], [], []>} : vector<8x256xf32>, vector<256x512xf32>, vector<8x512xf32> -> vector<8x512xf32>
    %343 = arith.addf %342, %4 : vector<8x512xf32>
    %344 = vector.extract_strided_slice %343 {offsets = [0, 0], sizes = [8, 128], strides = [1, 1]} : vector<8x512xf32> to vector<8x128xf32>
    %345 = arith.negf %344 : vector<8x128xf32>
    %346 = math.exp %345 : vector<8x128xf32>
    %cst_104 = arith.constant 1.000000e+00 : f32
    %347 = vector.broadcast %cst_104 : f32 to vector<8x128xf32>
    %348 = arith.addf %347, %346 : vector<8x128xf32>
    %349 = arith.divf %347, %348 : vector<8x128xf32>
    %350 = vector.extract_strided_slice %343 {offsets = [0, 128], sizes = [8, 128], strides = [1, 1]} : vector<8x512xf32> to vector<8x128xf32>
    %351 = arith.negf %350 : vector<8x128xf32>
    %352 = math.exp %351 : vector<8x128xf32>
    %cst_105 = arith.constant 1.000000e+00 : f32
    %353 = vector.broadcast %cst_105 : f32 to vector<8x128xf32>
    %354 = arith.addf %353, %352 : vector<8x128xf32>
    %355 = arith.divf %353, %354 : vector<8x128xf32>
    %356 = vector.extract_strided_slice %343 {offsets = [0, 256], sizes = [8, 128], strides = [1, 1]} : vector<8x512xf32> to vector<8x128xf32>
    %357 = math.tanh %356 : vector<8x128xf32>
    %358 = vector.extract_strided_slice %343 {offsets = [0, 384], sizes = [8, 128], strides = [1, 1]} : vector<8x512xf32> to vector<8x128xf32>
    %359 = arith.negf %358 : vector<8x128xf32>
    %360 = math.exp %359 : vector<8x128xf32>
    %cst_106 = arith.constant 1.000000e+00 : f32
    %361 = vector.broadcast %cst_106 : f32 to vector<8x128xf32>
    %362 = arith.addf %361, %360 : vector<8x128xf32>
    %363 = arith.divf %361, %362 : vector<8x128xf32>
    %364 = arith.mulf %355, %300 : vector<8x128xf32>
    %365 = arith.mulf %349, %357 : vector<8x128xf32>
    %366 = arith.addf %364, %365 : vector<8x128xf32>
    %367 = math.tanh %366 : vector<8x128xf32>
    %368 = arith.mulf %363, %367 : vector<8x128xf32>
    %c5_107 = arith.constant 5 : index
    %c0_108 = arith.constant 0 : index
    %c0_109 = arith.constant 0 : index
    %369 = vector.load %arg9[%c5_107, %c0_108, %c0_109] : memref<8x8x128xf32, #tpu.memory_space<vmem>>, vector<1x8x128xf32>
    %370 = vector.shape_cast %369 : vector<1x8x128xf32> to vector<8x128xf32>
    %371 = vector.shape_cast %368 : vector<8x128xf32> to vector<1x8x128xf32>
    tpu.vector_store %arg9[%c5_107, %c0_108, %c0_109], %371 {strides = array<i32>} : memref<8x8x128xf32, #tpu.memory_space<vmem>>, vector<1x8x128xf32>,
    %c2_110 = arith.constant 2 : index
    %c0_111 = arith.constant 0 : index
    %c0_112 = arith.constant 0 : index
    %372 = vector.load %arg0[%c2_110, %c0_111, %c0_112] : memref<8x8x128xf32, #tpu.memory_space<vmem>>, vector<1x8x128xf32>
    %373 = vector.shape_cast %372 : vector<1x8x128xf32> to vector<8x128xf32>
    %374 = tpu.concatenate %373, %335 in 1 : vector<8x128xf32>, vector<8x128xf32> -> vector<8x256xf32>
    %cst_113 = arith.constant dense<0.000000e+00> : vector<8x512xf32>
    %375 = tpu.matmul %374, %1, %cst_113 {dimension_numbers = #tpu.dot_dimension_numbers<[1], [0], [0], [1], [0, 0, 1, 1], [], []>} : vector<8x256xf32>, vector<256x512xf32>, vector<8x512xf32> -> vector<8x512xf32>
    %376 = arith.addf %375, %7 : vector<8x512xf32>
    %377 = vector.extract_strided_slice %376 {offsets = [0, 0], sizes = [8, 128], strides = [1, 1]} : vector<8x512xf32> to vector<8x128xf32>
    %378 = arith.negf %377 : vector<8x128xf32>
    %379 = math.exp %378 : vector<8x128xf32>
    %cst_114 = arith.constant 1.000000e+00 : f32
    %380 = vector.broadcast %cst_114 : f32 to vector<8x128xf32>
    %381 = arith.addf %380, %379 : vector<8x128xf32>
    %382 = arith.divf %380, %381 : vector<8x128xf32>
    %383 = vector.extract_strided_slice %376 {offsets = [0, 128], sizes = [8, 128], strides = [1, 1]} : vector<8x512xf32> to vector<8x128xf32>
    %384 = arith.negf %383 : vector<8x128xf32>
    %385 = math.exp %384 : vector<8x128xf32>
    %cst_115 = arith.constant 1.000000e+00 : f32
    %386 = vector.broadcast %cst_115 : f32 to vector<8x128xf32>
    %387 = arith.addf %386, %385 : vector<8x128xf32>
    %388 = arith.divf %386, %387 : vector<8x128xf32>
    %389 = vector.extract_strided_slice %376 {offsets = [0, 256], sizes = [8, 128], strides = [1, 1]} : vector<8x512xf32> to vector<8x128xf32>
    %390 = math.tanh %389 : vector<8x128xf32>
    %391 = vector.extract_strided_slice %376 {offsets = [0, 384], sizes = [8, 128], strides = [1, 1]} : vector<8x512xf32> to vector<8x128xf32>
    %392 = arith.negf %391 : vector<8x128xf32>
    %393 = math.exp %392 : vector<8x128xf32>
    %cst_116 = arith.constant 1.000000e+00 : f32
    %394 = vector.broadcast %cst_116 : f32 to vector<8x128xf32>
    %395 = arith.addf %394, %393 : vector<8x128xf32>
    %396 = arith.divf %394, %395 : vector<8x128xf32>
    %397 = arith.mulf %388, %333 : vector<8x128xf32>
    %398 = arith.mulf %382, %390 : vector<8x128xf32>
    %399 = arith.addf %397, %398 : vector<8x128xf32>
    %400 = math.tanh %399 : vector<8x128xf32>
    %401 = arith.mulf %396, %400 : vector<8x128xf32>
    %c2_117 = arith.constant 2 : index
    %c0_118 = arith.constant 0 : index
    %c0_119 = arith.constant 0 : index
    %402 = vector.load %arg10[%c2_117, %c0_118, %c0_119] : memref<8x8x128xf32, #tpu.memory_space<vmem>>, vector<1x8x128xf32>
    %403 = vector.shape_cast %402 : vector<1x8x128xf32> to vector<8x128xf32>
    %404 = vector.shape_cast %401 : vector<8x128xf32> to vector<1x8x128xf32>
    tpu.vector_store %arg10[%c2_117, %c0_118, %c0_119], %404 {strides = array<i32>} : memref<8x8x128xf32, #tpu.memory_space<vmem>>, vector<1x8x128xf32>,
    %c6_120 = arith.constant 6 : index
    %c0_121 = arith.constant 0 : index
    %c0_122 = arith.constant 0 : index
    %405 = vector.load %arg0[%c6_120, %c0_121, %c0_122] : memref<8x8x128xf32, #tpu.memory_space<vmem>>, vector<1x8x128xf32>
    %406 = vector.shape_cast %405 : vector<1x8x128xf32> to vector<8x128xf32>
    %407 = tpu.concatenate %406, %368 in 1 : vector<8x128xf32>, vector<8x128xf32> -> vector<8x256xf32>
    %cst_123 = arith.constant dense<0.000000e+00> : vector<8x512xf32>
    %408 = tpu.matmul %407, %0, %cst_123 {dimension_numbers = #tpu.dot_dimension_numbers<[1], [0], [0], [1], [0, 0, 1, 1], [], []>} : vector<8x256xf32>, vector<256x512xf32>, vector<8x512xf32> -> vector<8x512xf32>
    %409 = arith.addf %408, %4 : vector<8x512xf32>
    %410 = vector.extract_strided_slice %409 {offsets = [0, 0], sizes = [8, 128], strides = [1, 1]} : vector<8x512xf32> to vector<8x128xf32>
    %411 = arith.negf %410 : vector<8x128xf32>
    %412 = math.exp %411 : vector<8x128xf32>
    %cst_124 = arith.constant 1.000000e+00 : f32
    %413 = vector.broadcast %cst_124 : f32 to vector<8x128xf32>
    %414 = arith.addf %413, %412 : vector<8x128xf32>
    %415 = arith.divf %413, %414 : vector<8x128xf32>
    %416 = vector.extract_strided_slice %409 {offsets = [0, 128], sizes = [8, 128], strides = [1, 1]} : vector<8x512xf32> to vector<8x128xf32>
    %417 = arith.negf %416 : vector<8x128xf32>
    %418 = math.exp %417 : vector<8x128xf32>
    %cst_125 = arith.constant 1.000000e+00 : f32
    %419 = vector.broadcast %cst_125 : f32 to vector<8x128xf32>
    %420 = arith.addf %419, %418 : vector<8x128xf32>
    %421 = arith.divf %419, %420 : vector<8x128xf32>
    %422 = vector.extract_strided_slice %409 {offsets = [0, 256], sizes = [8, 128], strides = [1, 1]} : vector<8x512xf32> to vector<8x128xf32>
    %423 = math.tanh %422 : vector<8x128xf32>
    %424 = vector.extract_strided_slice %409 {offsets = [0, 384], sizes = [8, 128], strides = [1, 1]} : vector<8x512xf32> to vector<8x128xf32>
    %425 = arith.negf %424 : vector<8x128xf32>
    %426 = math.exp %425 : vector<8x128xf32>
    %cst_126 = arith.constant 1.000000e+00 : f32
    %427 = vector.broadcast %cst_126 : f32 to vector<8x128xf32>
    %428 = arith.addf %427, %426 : vector<8x128xf32>
    %429 = arith.divf %427, %428 : vector<8x128xf32>
    %430 = arith.mulf %421, %366 : vector<8x128xf32>
    %431 = arith.mulf %415, %423 : vector<8x128xf32>
    %432 = arith.addf %430, %431 : vector<8x128xf32>
    %433 = math.tanh %432 : vector<8x128xf32>
    %434 = arith.mulf %429, %433 : vector<8x128xf32>
    %c6_127 = arith.constant 6 : index
    %c0_128 = arith.constant 0 : index
    %c0_129 = arith.constant 0 : index
    %435 = vector.load %arg9[%c6_127, %c0_128, %c0_129] : memref<8x8x128xf32, #tpu.memory_space<vmem>>, vector<1x8x128xf32>
    %436 = vector.shape_cast %435 : vector<1x8x128xf32> to vector<8x128xf32>
    %437 = vector.shape_cast %434 : vector<8x128xf32> to vector<1x8x128xf32>
    tpu.vector_store %arg9[%c6_127, %c0_128, %c0_129], %437 {strides = array<i32>} : memref<8x8x128xf32, #tpu.memory_space<vmem>>, vector<1x8x128xf32>,
    %c1_130 = arith.constant 1 : index
    %c0_131 = arith.constant 0 : index
    %c0_132 = arith.constant 0 : index
    %438 = vector.load %arg0[%c1_130, %c0_131, %c0_132] : memref<8x8x128xf32, #tpu.memory_space<vmem>>, vector<1x8x128xf32>
    %439 = vector.shape_cast %438 : vector<1x8x128xf32> to vector<8x128xf32>
    %440 = tpu.concatenate %439, %401 in 1 : vector<8x128xf32>, vector<8x128xf32> -> vector<8x256xf32>
    %cst_133 = arith.constant dense<0.000000e+00> : vector<8x512xf32>
    %441 = tpu.matmul %440, %1, %cst_133 {dimension_numbers = #tpu.dot_dimension_numbers<[1], [0], [0], [1], [0, 0, 1, 1], [], []>} : vector<8x256xf32>, vector<256x512xf32>, vector<8x512xf32> -> vector<8x512xf32>
    %442 = arith.addf %441, %7 : vector<8x512xf32>
    %443 = vector.extract_strided_slice %442 {offsets = [0, 0], sizes = [8, 128], strides = [1, 1]} : vector<8x512xf32> to vector<8x128xf32>
    %444 = arith.negf %443 : vector<8x128xf32>
    %445 = math.exp %444 : vector<8x128xf32>
    %cst_134 = arith.constant 1.000000e+00 : f32
    %446 = vector.broadcast %cst_134 : f32 to vector<8x128xf32>
    %447 = arith.addf %446, %445 : vector<8x128xf32>
    %448 = arith.divf %446, %447 : vector<8x128xf32>
    %449 = vector.extract_strided_slice %442 {offsets = [0, 128], sizes = [8, 128], strides = [1, 1]} : vector<8x512xf32> to vector<8x128xf32>
    %450 = arith.negf %449 : vector<8x128xf32>
    %451 = math.exp %450 : vector<8x128xf32>
    %cst_135 = arith.constant 1.000000e+00 : f32
    %452 = vector.broadcast %cst_135 : f32 to vector<8x128xf32>
    %453 = arith.addf %452, %451 : vector<8x128xf32>
    %454 = arith.divf %452, %453 : vector<8x128xf32>
    %455 = vector.extract_strided_slice %442 {offsets = [0, 256], sizes = [8, 128], strides = [1, 1]} : vector<8x512xf32> to vector<8x128xf32>
    %456 = math.tanh %455 : vector<8x128xf32>
    %457 = vector.extract_strided_slice %442 {offsets = [0, 384], sizes = [8, 128], strides = [1, 1]} : vector<8x512xf32> to vector<8x128xf32>
    %458 = arith.negf %457 : vector<8x128xf32>
    %459 = math.exp %458 : vector<8x128xf32>
    %cst_136 = arith.constant 1.000000e+00 : f32
    %460 = vector.broadcast %cst_136 : f32 to vector<8x128xf32>
    %461 = arith.addf %460, %459 : vector<8x128xf32>
    %462 = arith.divf %460, %461 : vector<8x128xf32>
    %463 = arith.mulf %454, %399 : vector<8x128xf32>
    %464 = arith.mulf %448, %456 : vector<8x128xf32>
    %465 = arith.addf %463, %464 : vector<8x128xf32>
    %466 = math.tanh %465 : vector<8x128xf32>
    %467 = arith.mulf %462, %466 : vector<8x128xf32>
    %c1_137 = arith.constant 1 : index
    %c0_138 = arith.constant 0 : index
    %c0_139 = arith.constant 0 : index
    %468 = vector.load %arg10[%c1_137, %c0_138, %c0_139] : memref<8x8x128xf32, #tpu.memory_space<vmem>>, vector<1x8x128xf32>
    %469 = vector.shape_cast %468 : vector<1x8x128xf32> to vector<8x128xf32>
    %470 = vector.shape_cast %467 : vector<8x128xf32> to vector<1x8x128xf32>
    tpu.vector_store %arg10[%c1_137, %c0_138, %c0_139], %470 {strides = array<i32>} : memref<8x8x128xf32, #tpu.memory_space<vmem>>, vector<1x8x128xf32>,
    %c7_140 = arith.constant 7 : index
    %c0_141 = arith.constant 0 : index
    %c0_142 = arith.constant 0 : index
    %471 = vector.load %arg0[%c7_140, %c0_141, %c0_142] : memref<8x8x128xf32, #tpu.memory_space<vmem>>, vector<1x8x128xf32>
    %472 = vector.shape_cast %471 : vector<1x8x128xf32> to vector<8x128xf32>
    %473 = tpu.concatenate %472, %434 in 1 : vector<8x128xf32>, vector<8x128xf32> -> vector<8x256xf32>
    %cst_143 = arith.constant dense<0.000000e+00> : vector<8x512xf32>
    %474 = tpu.matmul %473, %0, %cst_143 {dimension_numbers = #tpu.dot_dimension_numbers<[1], [0], [0], [1], [0, 0, 1, 1], [], []>} : vector<8x256xf32>, vector<256x512xf32>, vector<8x512xf32> -> vector<8x512xf32>
    %475 = arith.addf %474, %4 : vector<8x512xf32>
    %476 = vector.extract_strided_slice %475 {offsets = [0, 0], sizes = [8, 128], strides = [1, 1]} : vector<8x512xf32> to vector<8x128xf32>
    %477 = arith.negf %476 : vector<8x128xf32>
    %478 = math.exp %477 : vector<8x128xf32>
    %cst_144 = arith.constant 1.000000e+00 : f32
    %479 = vector.broadcast %cst_144 : f32 to vector<8x128xf32>
    %480 = arith.addf %479, %478 : vector<8x128xf32>
    %481 = arith.divf %479, %480 : vector<8x128xf32>
    %482 = vector.extract_strided_slice %475 {offsets = [0, 128], sizes = [8, 128], strides = [1, 1]} : vector<8x512xf32> to vector<8x128xf32>
    %483 = arith.negf %482 : vector<8x128xf32>
    %484 = math.exp %483 : vector<8x128xf32>
    %cst_145 = arith.constant 1.000000e+00 : f32
    %485 = vector.broadcast %cst_145 : f32 to vector<8x128xf32>
    %486 = arith.addf %485, %484 : vector<8x128xf32>
    %487 = arith.divf %485, %486 : vector<8x128xf32>
    %488 = vector.extract_strided_slice %475 {offsets = [0, 256], sizes = [8, 128], strides = [1, 1]} : vector<8x512xf32> to vector<8x128xf32>
    %489 = math.tanh %488 : vector<8x128xf32>
    %490 = vector.extract_strided_slice %475 {offsets = [0, 384], sizes = [8, 128], strides = [1, 1]} : vector<8x512xf32> to vector<8x128xf32>
    %491 = arith.negf %490 : vector<8x128xf32>
    %492 = math.exp %491 : vector<8x128xf32>
    %cst_146 = arith.constant 1.000000e+00 : f32
    %493 = vector.broadcast %cst_146 : f32 to vector<8x128xf32>
    %494 = arith.addf %493, %492 : vector<8x128xf32>
    %495 = arith.divf %493, %494 : vector<8x128xf32>
    %496 = arith.mulf %487, %432 : vector<8x128xf32>
    %497 = arith.mulf %481, %489 : vector<8x128xf32>
    %498 = arith.addf %496, %497 : vector<8x128xf32>
    %499 = math.tanh %498 : vector<8x128xf32>
    %500 = arith.mulf %495, %499 : vector<8x128xf32>
    %c7_147 = arith.constant 7 : index
    %c0_148 = arith.constant 0 : index
    %c0_149 = arith.constant 0 : index
    %501 = vector.load %arg9[%c7_147, %c0_148, %c0_149] : memref<8x8x128xf32, #tpu.memory_space<vmem>>, vector<1x8x128xf32>
    %502 = vector.shape_cast %501 : vector<1x8x128xf32> to vector<8x128xf32>
    %503 = vector.shape_cast %500 : vector<8x128xf32> to vector<1x8x128xf32>
    tpu.vector_store %arg9[%c7_147, %c0_148, %c0_149], %503 {strides = array<i32>} : memref<8x8x128xf32, #tpu.memory_space<vmem>>, vector<1x8x128xf32>,
    %c0_150 = arith.constant 0 : index
    %c0_151 = arith.constant 0 : index
    %c0_152 = arith.constant 0 : index
    %504 = vector.load %arg0[%c0_150, %c0_151, %c0_152] : memref<8x8x128xf32, #tpu.memory_space<vmem>>, vector<1x8x128xf32>
    %505 = vector.shape_cast %504 : vector<1x8x128xf32> to vector<8x128xf32>
    %506 = tpu.concatenate %505, %467 in 1 : vector<8x128xf32>, vector<8x128xf32> -> vector<8x256xf32>
    %cst_153 = arith.constant dense<0.000000e+00> : vector<8x512xf32>
    %507 = tpu.matmul %506, %1, %cst_153 {dimension_numbers = #tpu.dot_dimension_numbers<[1], [0], [0], [1], [0, 0, 1, 1], [], []>} : vector<8x256xf32>, vector<256x512xf32>, vector<8x512xf32> -> vector<8x512xf32>
    %508 = arith.addf %507, %7 : vector<8x512xf32>
    %509 = vector.extract_strided_slice %508 {offsets = [0, 0], sizes = [8, 128], strides = [1, 1]} : vector<8x512xf32> to vector<8x128xf32>
    %510 = arith.negf %509 : vector<8x128xf32>
    %511 = math.exp %510 : vector<8x128xf32>
    %cst_154 = arith.constant 1.000000e+00 : f32
    %512 = vector.broadcast %cst_154 : f32 to vector<8x128xf32>
    %513 = arith.addf %512, %511 : vector<8x128xf32>
    %514 = arith.divf %512, %513 : vector<8x128xf32>
    %515 = vector.extract_strided_slice %508 {offsets = [0, 128], sizes = [8, 128], strides = [1, 1]} : vector<8x512xf32> to vector<8x128xf32>
    %516 = arith.negf %515 : vector<8x128xf32>
    %517 = math.exp %516 : vector<8x128xf32>
    %cst_155 = arith.constant 1.000000e+00 : f32
    %518 = vector.broadcast %cst_155 : f32 to vector<8x128xf32>
    %519 = arith.addf %518, %517 : vector<8x128xf32>
    %520 = arith.divf %518, %519 : vector<8x128xf32>
    %521 = vector.extract_strided_slice %508 {offsets = [0, 256], sizes = [8, 128], strides = [1, 1]} : vector<8x512xf32> to vector<8x128xf32>
    %522 = math.tanh %521 : vector<8x128xf32>
    %523 = vector.extract_strided_slice %508 {offsets = [0, 384], sizes = [8, 128], strides = [1, 1]} : vector<8x512xf32> to vector<8x128xf32>
    %524 = arith.negf %523 : vector<8x128xf32>
    %525 = math.exp %524 : vector<8x128xf32>
    %cst_156 = arith.constant 1.000000e+00 : f32
    %526 = vector.broadcast %cst_156 : f32 to vector<8x128xf32>
    %527 = arith.addf %526, %525 : vector<8x128xf32>
    %528 = arith.divf %526, %527 : vector<8x128xf32>
    %529 = arith.mulf %520, %465 : vector<8x128xf32>
    %530 = arith.mulf %514, %522 : vector<8x128xf32>
    %531 = arith.addf %529, %530 : vector<8x128xf32>
    %532 = math.tanh %531 : vector<8x128xf32>
    %533 = arith.mulf %528, %532 : vector<8x128xf32>
    %c0_157 = arith.constant 0 : index
    %c0_158 = arith.constant 0 : index
    %c0_159 = arith.constant 0 : index
    %534 = vector.load %arg10[%c0_157, %c0_158, %c0_159] : memref<8x8x128xf32, #tpu.memory_space<vmem>>, vector<1x8x128xf32>
    %535 = vector.shape_cast %534 : vector<1x8x128xf32> to vector<8x128xf32>
    %536 = vector.shape_cast %533 : vector<8x128xf32> to vector<1x8x128xf32>
    tpu.vector_store %arg10[%c0_157, %c0_158, %c0_159], %536 {strides = array<i32>} : memref<8x8x128xf32, #tpu.memory_space<vmem>>, vector<1x8x128xf32>,
    %537 = tpu.concatenate %500, %533 in 1 : vector<8x128xf32>, vector<8x128xf32> -> vector<8x256xf32>
    %538 = tpu.concatenate %498, %531 in 1 : vector<8x128xf32>, vector<8x128xf32> -> vector<8x256xf32>
    %c0_160 = arith.constant 0 : index
    %c0_161 = arith.constant 0 : index
    %539 = vector.load %arg5[%c0_160, %c0_161] : memref<256x128xf32, #tpu.memory_space<vmem>>, vector<256x128xf32>
    %cst_162 = arith.constant dense<0.000000e+00> : vector<8x128xf32>
    %540 = tpu.matmul %537, %539, %cst_162 {dimension_numbers = #tpu.dot_dimension_numbers<[1], [0], [0], [1], [0, 0, 1, 1], [], []>} : vector<8x256xf32>, vector<256x128xf32>, vector<8x128xf32> -> vector<8x128xf32>
    %c0_163 = arith.constant 0 : index
    %c0_164 = arith.constant 0 : index
    %541 = vector.load %arg6[%c0_163, %c0_164] : memref<1x128xf32, #tpu.memory_space<vmem>>, vector<1x128xf32>
    %542 = vector.broadcast %541 : vector<1x128xf32> to vector<8x128xf32>
    %543 = arith.addf %540, %542 : vector<8x128xf32>
    %c0_165 = arith.constant 0 : index
    %c0_166 = arith.constant 0 : index
    %544 = vector.load %arg11[%c0_165, %c0_166] : memref<8x128xf32, #tpu.memory_space<vmem>>, vector<8x128xf32>
    tpu.vector_store %arg11[%c0_165, %c0_166], %543 {strides = array<i32>} : memref<8x128xf32, #tpu.memory_space<vmem>>, vector<8x128xf32>,
    %c0_167 = arith.constant 0 : index
    %c0_168 = arith.constant 0 : index
    %545 = vector.load %arg7[%c0_167, %c0_168] : memref<256x128xf32, #tpu.memory_space<vmem>>, vector<256x128xf32>
    %cst_169 = arith.constant dense<0.000000e+00> : vector<8x128xf32>
    %546 = tpu.matmul %538, %545, %cst_169 {dimension_numbers = #tpu.dot_dimension_numbers<[1], [0], [0], [1], [0, 0, 1, 1], [], []>} : vector<8x256xf32>, vector<256x128xf32>, vector<8x128xf32> -> vector<8x128xf32>
    %c0_170 = arith.constant 0 : index
    %c0_171 = arith.constant 0 : index
    %547 = vector.load %arg8[%c0_170, %c0_171] : memref<1x128xf32, #tpu.memory_space<vmem>>, vector<1x128xf32>
    %548 = vector.broadcast %547 : vector<1x128xf32> to vector<8x128xf32>
    %549 = arith.addf %546, %548 : vector<8x128xf32>
    %c0_172 = arith.constant 0 : index
    %c0_173 = arith.constant 0 : index
    %550 = vector.load %arg12[%c0_172, %c0_173] : memref<8x128xf32, #tpu.memory_space<vmem>>, vector<8x128xf32>
    tpu.vector_store %arg12[%c0_172, %c0_173], %549 {strides = array<i32>} : memref<8x128xf32, #tpu.memory_space<vmem>>, vector<8x128xf32>,
    return
  }
}

</mosaic_0001>

<llo_original>
// kernel: encoder_forward.1
$region0: #{encoder_forward.1}
  #allocation0 [shape = 'u32[]', space=smem, size = 0x4, offset = 0x4, fixed_abs, tag = 'smem constant byte address 0x4 - core index']
  #allocation1 [shape = 'u32[144,128]{1,0:T(1,128)}', space=vmem, size = 0x12000, scoped, tag = 'internal scratch']
  %s0 = inlined_call_operand.vmem [shape: f32[8,8,128], index: 0, kind: input, shape index: {}]
  %s1 = inlined_call_operand.hbm [shape: f32[256,512], index: 1, kind: input, shape index: {}]
  %s2 = inlined_call_operand.vmem [shape: f32[1,512], index: 2, kind: input, shape index: {}]
  %s3 = inlined_call_operand.hbm [shape: f32[256,512], index: 3, kind: input, shape index: {}]
  %s4 = inlined_call_operand.vmem [shape: f32[1,512], index: 4, kind: input, shape index: {}]
  %s5 = inlined_call_operand.vmem [shape: f32[256,128], index: 5, kind: input, shape index: {}]
  %s6 = inlined_call_operand.vmem [shape: f32[1,128], index: 6, kind: input, shape index: {}]
  %s7 = inlined_call_operand.vmem [shape: f32[256,128], index: 7, kind: input, shape index: {}]
  %s8 = inlined_call_operand.vmem [shape: f32[1,128], index: 8, kind: input, shape index: {}]
  %s9 = inlined_call_operand.vmem [shape: f32[8,8,128], index: 9, kind: output, shape index: {0}]
  %s10 = inlined_call_operand.vmem [shape: f32[8,8,128], index: 10, kind: output, shape index: {1}]
  %s11 = inlined_call_operand.hbm [shape: f32[8,128], index: 11, kind: output, shape index: {2}]
  %s12 = inlined_call_operand.hbm [shape: f32[8,128], index: 12, kind: output, shape index: {3}]
  %13 = xla_tuple %s9, %s10, %s11, %s12
  %s14 = sld [smem:[#allocation0]]
  $region78: #{encoder_forward.1} parent=0
    _
  %s16 = ssub.s32 1, %s14
  %s17 = scalar_select 0, %s16, %s14
  $region1: #{encoder_forward.1} parent=0
    #allocation2 [shape = 'u8[524288]{0}', space=vmem, size = 0x80000, scoped, tag = 'input window, operand 1, single buffered']
    #allocation3 [shape = 's32[1]{0}', space=sflag, size = 0x4, scoped, tag = 'scoped memory for encoder_forward.1']
    #allocation4 [shape = 's32[1]{0}', space=sflag, size = 0x4, scoped, tag = 'scoped memory for encoder_forward.1']
    #allocation5 [shape = 'u8[524288]{0}', space=vmem, size = 0x80000, scoped, tag = 'input window, operand 3, single buffered']
    #allocation6 [shape = 's32[1]{0}', space=sflag, size = 0x4, scoped, tag = 'scoped memory for encoder_forward.1']
    #allocation7 [shape = 'u8[4096]{0}', space=vmem, size = 0x1000, scoped, tag = 'output window, operand 2, single buffered']
    #allocation8 [shape = 'u8[4096]{0}', space=vmem, size = 0x1000, scoped, tag = 'output window, operand 3, single buffered']
    #allocation9 [shape = 's32[1]{0}', space=sflag, size = 0x4, scoped, tag = 'scoped memory for encoder_forward.1']
    %18 = vsyncpa [#allocation3], 0
    %19 = vsyncpa [#allocation6], 0
    %20 = vsyncpa [#allocation4], 0
    %21 = vsyncpa [#allocation9], 0
    // Predicated region
    $region2: #{encoder_forward.1} parent=1 // pred_check
      _
    $region3: #{encoder_forward.1} parent=1 // pred_check_branch
      %23 = sbr.rel (0) target = $region5
    $region4: #{encoder_forward.1} parent=1 // pred_region
      _
    $region5: #{encoder_forward.1} parent=1 // pred_fallthru
      _
    // Predicated region
    $region6: #{encoder_forward.1} parent=1 // pred_check
      _
    $region7: #{encoder_forward.1} parent=1 // pred_check_branch
      %25 = sbr.rel (0) target = $region9
    $region8: #{encoder_forward.1} parent=1 // pred_region
      %s27 = ssub.s32 16384, 16384
      %28 = vsyncadd [#allocation3], %s27
      %s29 = sshll.u32 [#allocation2], 4
      %s30 = int_to_ptr.vmem [resolvable:$true] %s29
      %35 = dma.hbm_to_vmem [thread:$0]  %s1, 16384, %s30, [#allocation3], 512, 512, 32
    $region9: #{encoder_forward.1} parent=1 // pred_fallthru
      _
    // Predicated region
    $region10: #{encoder_forward.1} parent=1 // pred_check
      _
    $region11: #{encoder_forward.1} parent=1 // pred_check_branch
      %37 = sbr.rel (0) target = $region13
    $region12: #{encoder_forward.1} parent=1 // pred_region
      _
    $region13: #{encoder_forward.1} parent=1 // pred_fallthru
      _
    // Predicated region
    $region14: #{encoder_forward.1} parent=1 // pred_check
      _
    $region15: #{encoder_forward.1} parent=1 // pred_check_branch
      %39 = sbr.rel (0) target = $region17
    $region16: #{encoder_forward.1} parent=1 // pred_region
      %s41 = ssub.s32 16384, 16384
      %42 = vsyncadd [#allocation6], %s41
      %s43 = sshll.u32 [#allocation5], 4
      %s44 = int_to_ptr.vmem [resolvable:$true] %s43
      %49 = dma.hbm_to_vmem [thread:$0]  %s3, 16384, %s44, [#allocation6], 512, 512, 32
    $region17: #{encoder_forward.1} parent=1 // pred_fallthru
      _
    // Predicated region
    $region18: #{encoder_forward.1} parent=1 // pred_check
      _
    $region19: #{encoder_forward.1} parent=1 // pred_check_branch
      %51 = sbr.rel (0) target = $region21
    $region20: #{encoder_forward.1} parent=1 // pred_region
      _
    $region21: #{encoder_forward.1} parent=1 // pred_fallthru
      _
    // Predicated region
    $region22: #{encoder_forward.1} parent=1 // pred_check
      _
    $region23: #{encoder_forward.1} parent=1 // pred_check_branch
      %53 = sbr.rel (0) target = $region25
    $region24: #{encoder_forward.1} parent=1 // pred_region
      _
    $region25: #{encoder_forward.1} parent=1 // pred_fallthru
      _
    // Predicated region
    $region26: #{encoder_forward.1} parent=1 // pred_check
      _
    $region27: #{encoder_forward.1} parent=1 // pred_check_branch
      %55 = sbr.rel (0) target = $region29
    $region28: #{encoder_forward.1} parent=1 // pred_region
      _
    $region29: #{encoder_forward.1} parent=1 // pred_fallthru
      _
    // Predicated region
    $region30: #{encoder_forward.1} parent=1 // pred_check
      _
    $region31: #{encoder_forward.1} parent=1 // pred_check_branch
      %57 = sbr.rel (0) target = $region33
    $region32: #{encoder_forward.1} parent=1 // pred_region
      _
    $region33: #{encoder_forward.1} parent=1 // pred_fallthru
      _
    // Predicated region
    $region34: #{encoder_forward.1} parent=1 // pred_check
      _
    $region35: #{encoder_forward.1} parent=1 // pred_check_branch
      %59 = sbr.rel (0) target = $region37
    $region36: #{encoder_forward.1} parent=1 // pred_region
      _
    $region37: #{encoder_forward.1} parent=1 // pred_fallthru
      _
    // Predicated region
    $region38: #{encoder_forward.1} parent=1 // pred_check
      _
    $region39: #{encoder_forward.1} parent=1 // pred_check_branch
      %61 = sbr.rel (0) target = $region41
    $region40: #{encoder_forward.1} parent=1 // pred_region
      %62 = dma.done [#allocation3], 16384
    $region41: #{encoder_forward.1} parent=1 // pred_fallthru
      _
    // Predicated region
    $region42: #{encoder_forward.1} parent=1 // pred_check
      _
    $region43: #{encoder_forward.1} parent=1 // pred_check_branch
      %64 = sbr.rel (0) target = $region45
    $region44: #{encoder_forward.1} parent=1 // pred_region
      %65 = dma.done [#allocation6], 16384
    $region45: #{encoder_forward.1} parent=1 // pred_fallthru
      _
    %v66 = vld [vmem:[#allocation2] sm:$0xff]
    %v67 = vld [vmem:[#allocation2 + $0x8] sm:$0xff]
    %v68 = vld [vmem:[#allocation2 + $0x10] sm:$0xff]
    %v69 = vld [vmem:[#allocation2 + $0x18] sm:$0xff]
    %v70 = vld [vmem:[#allocation2 + $0x20] sm:$0xff]
    %v71 = vld [vmem:[#allocation2 + $0x28] sm:$0xff]
    %v72 = vld [vmem:[#allocation2 + $0x30] sm:$0xff]
    %v73 = vld [vmem:[#allocation2 + $0x38] sm:$0xff]
    %v74 = vld [vmem:[#allocation2 + $0x40] sm:$0xff]
    %v75 = vld [vmem:[#allocation2 + $0x48] sm:$0xff]
    %v76 = vld [vmem:[#allocation2 + $0x50] sm:$0xff]
    %v77 = vld [vmem:[#allocation2 + $0x58] sm:$0xff]
    %v78 = vld [vmem:[#allocation2 + $0x60] sm:$0xff]
    %v79 = vld [vmem:[#allocation2 + $0x68] sm:$0xff]
    %v80 = vld [vmem:[#allocation2 + $0x70] sm:$0xff]
    %v81 = vld [vmem:[#allocation2 + $0x78] sm:$0xff]
    %v82 = vld [vmem:[#allocation2 + $0x80] sm:$0xff]
    %v83 = vld [vmem:[#allocation2 + $0x88] sm:$0xff]
    %v84 = vld [vmem:[#allocation2 + $0x90] sm:$0xff]
    %v85 = vld [vmem:[#allocation2 + $0x98] sm:$0xff]
    %v86 = vld [vmem:[#allocation2 + $0xa0] sm:$0xff]
    %v87 = vld [vmem:[#allocation2 + $0xa8] sm:$0xff]
    %v88 = vld [vmem:[#allocation2 + $0xb0] sm:$0xff]
    %v89 = vld [vmem:[#allocation2 + $0xb8] sm:$0xff]
    %v90 = vld [vmem:[#allocation2 + $0xc0] sm:$0xff]
    %v91 = vld [vmem:[#allocation2 + $0xc8] sm:$0xff]
    %v92 = vld [vmem:[#allocation2 + $0xd0] sm:$0xff]
    %v93 = vld [vmem:[#allocation2 + $0xd8] sm:$0xff]
    %v94 = vld [vmem:[#allocation2 + $0xe0] sm:$0xff]
    %v95 = vld [vmem:[#allocation2 + $0xe8] sm:$0xff]
    %v96 = vld [vmem:[#allocation2 + $0xf0] sm:$0xff]
    %v97 = vld [vmem:[#allocation2 + $0xf8] sm:$0xff]
    %v98 = vld [vmem:[#allocation2 + $0x100] sm:$0xff]
    %v99 = vld [vmem:[#allocation2 + $0x108] sm:$0xff]
    %v100 = vld [vmem:[#allocation2 + $0x110] sm:$0xff]
    %v101 = vld [vmem:[#allocation2 + $0x118] sm:$0xff]
    %v102 = vld [vmem:[#allocation2 + $0x120] sm:$0xff]
    %v103 = vld [vmem:[#allocation2 + $0x128] sm:$0xff]
    %v104 = vld [vmem:[#allocation2 + $0x130] sm:$0xff]
    %v105 = vld [vmem:[#allocation2 + $0x138] sm:$0xff]
    %v106 = vld [vmem:[#allocation2 + $0x140] sm:$0xff]
    %v107 = vld [vmem:[#allocation2 + $0x148] sm:$0xff]
    %v108 = vld [vmem:[#allocation2 + $0x150] sm:$0xff]
    %v109 = vld [vmem:[#allocation2 + $0x158] sm:$0xff]
    %v110 = vld [vmem:[#allocation2 + $0x160] sm:$0xff]
    %v111 = vld [vmem:[#allocation2 + $0x168] sm:$0xff]
    %v112 = vld [vmem:[#allocation2 + $0x170] sm:$0xff]
    %v113 = vld [vmem:[#allocation2 + $0x178] sm:$0xff]
    %v114 = vld [vmem:[#allocation2 + $0x180] sm:$0xff]
    %v115 = vld [vmem:[#allocation2 + $0x188] sm:$0xff]
    %v116 = vld [vmem:[#allocation2 + $0x190] sm:$0xff]
    %v117 = vld [vmem:[#allocation2 + $0x198] sm:$0xff]
    %v118 = vld [vmem:[#allocation2 + $0x1a0] sm:$0xff]
    %v119 = vld [vmem:[#allocation2 + $0x1a8] sm:$0xff]
    %v120 = vld [vmem:[#allocation2 + $0x1b0] sm:$0xff]
    %v121 = vld [vmem:[#allocation2 + $0x1b8] sm:$0xff]
    %v122 = vld [vmem:[#allocation2 + $0x1c0] sm:$0xff]
    %v123 = vld [vmem:[#allocation2 + $0x1c8] sm:$0xff]
    %v124 = vld [vmem:[#allocation2 + $0x1d0] sm:$0xff]
    %v125 = vld [vmem:[#allocation2 + $0x1d8] sm:$0xff]
    %v126 = vld [vmem:[#allocation2 + $0x1e0] sm:$0xff]
    %v127 = vld [vmem:[#allocation2 + $0x1e8] sm:$0xff]
    %v128 = vld [vmem:[#allocation2 + $0x1f0] sm:$0xff]
    %v129 = vld [vmem:[#allocation2 + $0x1f8] sm:$0xff]
    %v130 = vld [vmem:[#allocation2 + $0x200] sm:$0xff]
    %v131 = vld [vmem:[#allocation2 + $0x208] sm:$0xff]
    %v132 = vld [vmem:[#allocation2 + $0x210] sm:$0xff]
    %v133 = vld [vmem:[#allocation2 + $0x218] sm:$0xff]
    %v134 = vld [vmem:[#allocation2 + $0x220] sm:$0xff]
    %v135 = vld [vmem:[#allocation2 + $0x228] sm:$0xff]
    %v136 = vld [vmem:[#allocation2 + $0x230] sm:$0xff]
    %v137 = vld [vmem:[#allocation2 + $0x238] sm:$0xff]
    %v138 = vld [vmem:[#allocation2 + $0x240] sm:$0xff]
    %v139 = vld [vmem:[#allocation2 + $0x248] sm:$0xff]
    %v140 = vld [vmem:[#allocation2 + $0x250] sm:$0xff]
    %v141 = vld [vmem:[#allocation2 + $0x258] sm:$0xff]
    %v142 = vld [vmem:[#allocation2 + $0x260] sm:$0xff]
    %v143 = vld [vmem:[#allocation2 + $0x268] sm:$0xff]
    %v144 = vld [vmem:[#allocation2 + $0x270] sm:$0xff]
    %v145 = vld [vmem:[#allocation2 + $0x278] sm:$0xff]
    %v146 = vld [vmem:[#allocation2 + $0x280] sm:$0xff]
    %v147 = vld [vmem:[#allocation2 + $0x288] sm:$0xff]
    %v148 = vld [vmem:[#allocation2 + $0x290] sm:$0xff]
    %v149 = vld [vmem:[#allocation2 + $0x298] sm:$0xff]
    %v150 = vld [vmem:[#allocation2 + $0x2a0] sm:$0xff]
    %v151 = vld [vmem:[#allocation2 + $0x2a8] sm:$0xff]
    %v152 = vld [vmem:[#allocation2 + $0x2b0] sm:$0xff]
    %v153 = vld [vmem:[#allocation2 + $0x2b8] sm:$0xff]
    %v154 = vld [vmem:[#allocation2 + $0x2c0] sm:$0xff]
    %v155 = vld [vmem:[#allocation2 + $0x2c8] sm:$0xff]
    %v156 = vld [vmem:[#allocation2 + $0x2d0] sm:$0xff]
    %v157 = vld [vmem:[#allocation2 + $0x2d8] sm:$0xff]
    %v158 = vld [vmem:[#allocation2 + $0x2e0] sm:$0xff]
    %v159 = vld [vmem:[#allocation2 + $0x2e8] sm:$0xff]
    %v160 = vld [vmem:[#allocation2 + $0x2f0] sm:$0xff]
    %v161 = vld [vmem:[#allocation2 + $0x2f8] sm:$0xff]
    %v162 = vld [vmem:[#allocation2 + $0x300] sm:$0xff]
    %v163 = vld [vmem:[#allocation2 + $0x308] sm:$0xff]
    %v164 = vld [vmem:[#allocation2 + $0x310] sm:$0xff]
    %v165 = vld [vmem:[#allocation2 + $0x318] sm:$0xff]
    %v166 = vld [vmem:[#allocation2 + $0x320] sm:$0xff]
    %v167 = vld [vmem:[#allocation2 + $0x328] sm:$0xff]
    %v168 = vld [vmem:[#allocation2 + $0x330] sm:$0xff]
    %v169 = vld [vmem:[#allocation2 + $0x338] sm:$0xff]
    %v170 = vld [vmem:[#allocation2 + $0x340] sm:$0xff]
    %v171 = vld [vmem:[#allocation2 + $0x348] sm:$0xff]
    %v172 = vld [vmem:[#allocation2 + $0x350] sm:$0xff]
    %v173 = vld [vmem:[#allocation2 + $0x358] sm:$0xff]
    %v174 = vld [vmem:[#allocation2 + $0x360] sm:$0xff]
    %v175 = vld [vmem:[#allocation2 + $0x368] sm:$0xff]
    %v176 = vld [vmem:[#allocation2 + $0x370] sm:$0xff]
    %v177 = vld [vmem:[#allocation2 + $0x378] sm:$0xff]
    %v178 = vld [vmem:[#allocation2 + $0x380] sm:$0xff]
    %v179 = vld [vmem:[#allocation2 + $0x388] sm:$0xff]
    %v180 = vld [vmem:[#allocation2 + $0x390] sm:$0xff]
    %v181 = vld [vmem:[#allocation2 + $0x398] sm:$0xff]
    %v182 = vld [vmem:[#allocation2 + $0x3a0] sm:$0xff]
    %v183 = vld [vmem:[#allocation2 + $0x3a8] sm:$0xff]
    %v184 = vld [vmem:[#allocation2 + $0x3b0] sm:$0xff]
    %v185 = vld [vmem:[#allocation2 + $0x3b8] sm:$0xff]
    %v186 = vld [vmem:[#allocation2 + $0x3c0] sm:$0xff]
    %v187 = vld [vmem:[#allocation2 + $0x3c8] sm:$0xff]
    %v188 = vld [vmem:[#allocation2 + $0x3d0] sm:$0xff]
    %v189 = vld [vmem:[#allocation2 + $0x3d8] sm:$0xff]
    %v190 = vld [vmem:[#allocation2 + $0x3e0] sm:$0xff]
    %v191 = vld [vmem:[#allocation2 + $0x3e8] sm:$0xff]
    %v192 = vld [vmem:[#allocation2 + $0x3f0] sm:$0xff]
    %v193 = vld [vmem:[#allocation2 + $0x3f8] sm:$0xff]
    %v194 = vld [vmem:[#allocation5] sm:$0xff]
    %v195 = vld [vmem:[#allocation5 + $0x8] sm:$0xff]
    %v196 = vld [vmem:[#allocation5 + $0x10] sm:$0xff]
    %v197 = vld [vmem:[#allocation5 + $0x18] sm:$0xff]
    %v198 = vld [vmem:[#allocation5 + $0x20] sm:$0xff]
    %v199 = vld [vmem:[#allocation5 + $0x28] sm:$0xff]
    %v200 = vld [vmem:[#allocation5 + $0x30] sm:$0xff]
    %v201 = vld [vmem:[#allocation5 + $0x38] sm:$0xff]
    %v202 = vld [vmem:[#allocation5 + $0x40] sm:$0xff]
    %v203 = vld [vmem:[#allocation5 + $0x48] sm:$0xff]
    %v204 = vld [vmem:[#allocation5 + $0x50] sm:$0xff]
    %v205 = vld [vmem:[#allocation5 + $0x58] sm:$0xff]
    %v206 = vld [vmem:[#allocation5 + $0x60] sm:$0xff]
    %v207 = vld [vmem:[#allocation5 + $0x68] sm:$0xff]
    %v208 = vld [vmem:[#allocation5 + $0x70] sm:$0xff]
    %v209 = vld [vmem:[#allocation5 + $0x78] sm:$0xff]
    %v210 = vld [vmem:[#allocation5 + $0x80] sm:$0xff]
    %v211 = vld [vmem:[#allocation5 + $0x88] sm:$0xff]
    %v212 = vld [vmem:[#allocation5 + $0x90] sm:$0xff]
    %v213 = vld [vmem:[#allocation5 + $0x98] sm:$0xff]
    %v214 = vld [vmem:[#allocation5 + $0xa0] sm:$0xff]
    %v215 = vld [vmem:[#allocation5 + $0xa8] sm:$0xff]
    %v216 = vld [vmem:[#allocation5 + $0xb0] sm:$0xff]
    %v217 = vld [vmem:[#allocation5 + $0xb8] sm:$0xff]
    %v218 = vld [vmem:[#allocation5 + $0xc0] sm:$0xff]
    %v219 = vld [vmem:[#allocation5 + $0xc8] sm:$0xff]
    %v220 = vld [vmem:[#allocation5 + $0xd0] sm:$0xff]
    %v221 = vld [vmem:[#allocation5 + $0xd8] sm:$0xff]
    %v222 = vld [vmem:[#allocation5 + $0xe0] sm:$0xff]
    %v223 = vld [vmem:[#allocation5 + $0xe8] sm:$0xff]
    %v224 = vld [vmem:[#allocation5 + $0xf0] sm:$0xff]
    %v225 = vld [vmem:[#allocation5 + $0xf8] sm:$0xff]
    %v226 = vld [vmem:[#allocation5 + $0x100] sm:$0xff]
    %v227 = vld [vmem:[#allocation5 + $0x108] sm:$0xff]
    %v228 = vld [vmem:[#allocation5 + $0x110] sm:$0xff]
    %v229 = vld [vmem:[#allocation5 + $0x118] sm:$0xff]
    %v230 = vld [vmem:[#allocation5 + $0x120] sm:$0xff]
    %v231 = vld [vmem:[#allocation5 + $0x128] sm:$0xff]
    %v232 = vld [vmem:[#allocation5 + $0x130] sm:$0xff]
    %v233 = vld [vmem:[#allocation5 + $0x138] sm:$0xff]
    %v234 = vld [vmem:[#allocation5 + $0x140] sm:$0xff]
    %v235 = vld [vmem:[#allocation5 + $0x148] sm:$0xff]
    %v236 = vld [vmem:[#allocation5 + $0x150] sm:$0xff]
    %v237 = vld [vmem:[#allocation5 + $0x158] sm:$0xff]
    %v238 = vld [vmem:[#allocation5 + $0x160] sm:$0xff]
    %v239 = vld [vmem:[#allocation5 + $0x168] sm:$0xff]
    %v240 = vld [vmem:[#allocation5 + $0x170] sm:$0xff]
    %v241 = vld [vmem:[#allocation5 + $0x178] sm:$0xff]
    %v242 = vld [vmem:[#allocation5 + $0x180] sm:$0xff]
    %v243 = vld [vmem:[#allocation5 + $0x188] sm:$0xff]
    %v244 = vld [vmem:[#allocation5 + $0x190] sm:$0xff]
    %v245 = vld [vmem:[#allocation5 + $0x198] sm:$0xff]
    %v246 = vld [vmem:[#allocation5 + $0x1a0] sm:$0xff]
    %v247 = vld [vmem:[#allocation5 + $0x1a8] sm:$0xff]
    %v248 = vld [vmem:[#allocation5 + $0x1b0] sm:$0xff]
    %v249 = vld [vmem:[#allocation5 + $0x1b8] sm:$0xff]
    %v250 = vld [vmem:[#allocation5 + $0x1c0] sm:$0xff]
    %v251 = vld [vmem:[#allocation5 + $0x1c8] sm:$0xff]
    %v252 = vld [vmem:[#allocation5 + $0x1d0] sm:$0xff]
    %v253 = vld [vmem:[#allocation5 + $0x1d8] sm:$0xff]
    %v254 = vld [vmem:[#allocation5 + $0x1e0] sm:$0xff]
    %v255 = vld [vmem:[#allocation5 + $0x1e8] sm:$0xff]
    %v256 = vld [vmem:[#allocation5 + $0x1f0] sm:$0xff]
    %v257 = vld [vmem:[#allocation5 + $0x1f8] sm:$0xff]
    %v258 = vld [vmem:[#allocation5 + $0x200] sm:$0xff]
    %v259 = vld [vmem:[#allocation5 + $0x208] sm:$0xff]
    %v260 = vld [vmem:[#allocation5 + $0x210] sm:$0xff]
    %v261 = vld [vmem:[#allocation5 + $0x218] sm:$0xff]
    %v262 = vld [vmem:[#allocation5 + $0x220] sm:$0xff]
    %v263 = vld [vmem:[#allocation5 + $0x228] sm:$0xff]
    %v264 = vld [vmem:[#allocation5 + $0x230] sm:$0xff]
    %v265 = vld [vmem:[#allocation5 + $0x238] sm:$0xff]
    %v266 = vld [vmem:[#allocation5 + $0x240] sm:$0xff]
    %v267 = vld [vmem:[#allocation5 + $0x248] sm:$0xff]
    %v268 = vld [vmem:[#allocation5 + $0x250] sm:$0xff]
    %v269 = vld [vmem:[#allocation5 + $0x258] sm:$0xff]
    %v270 = vld [vmem:[#allocation5 + $0x260] sm:$0xff]
    %v271 = vld [vmem:[#allocation5 + $0x268] sm:$0xff]
    %v272 = vld [vmem:[#allocation5 + $0x270] sm:$0xff]
    %v273 = vld [vmem:[#allocation5 + $0x278] sm:$0xff]
    %v274 = vld [vmem:[#allocation5 + $0x280] sm:$0xff]
    %v275 = vld [vmem:[#allocation5 + $0x288] sm:$0xff]
    %v276 = vld [vmem:[#allocation5 + $0x290] sm:$0xff]
    %v277 = vld [vmem:[#allocation5 + $0x298] sm:$0xff]
    %v278 = vld [vmem:[#allocation5 + $0x2a0] sm:$0xff]
    %v279 = vld [vmem:[#allocation5 + $0x2a8] sm:$0xff]
    %v280 = vld [vmem:[#allocation5 + $0x2b0] sm:$0xff]
    %v281 = vld [vmem:[#allocation5 + $0x2b8] sm:$0xff]
    %v282 = vld [vmem:[#allocation5 + $0x2c0] sm:$0xff]
    %v283 = vld [vmem:[#allocation5 + $0x2c8] sm:$0xff]
    %v284 = vld [vmem:[#allocation5 + $0x2d0] sm:$0xff]
    %v285 = vld [vmem:[#allocation5 + $0x2d8] sm:$0xff]
    %v286 = vld [vmem:[#allocation5 + $0x2e0] sm:$0xff]
    %v287 = vld [vmem:[#allocation5 + $0x2e8] sm:$0xff]
    %v288 = vld [vmem:[#allocation5 + $0x2f0] sm:$0xff]
    %v289 = vld [vmem:[#allocation5 + $0x2f8] sm:$0xff]
    %v290 = vld [vmem:[#allocation5 + $0x300] sm:$0xff]
    %v291 = vld [vmem:[#allocation5 + $0x308] sm:$0xff]
    %v292 = vld [vmem:[#allocation5 + $0x310] sm:$0xff]
    %v293 = vld [vmem:[#allocation5 + $0x318] sm:$0xff]
    %v294 = vld [vmem:[#allocation5 + $0x320] sm:$0xff]
    %v295 = vld [vmem:[#allocation5 + $0x328] sm:$0xff]
    %v296 = vld [vmem:[#allocation5 + $0x330] sm:$0xff]
    %v297 = vld [vmem:[#allocation5 + $0x338] sm:$0xff]
    %v298 = vld [vmem:[#allocation5 + $0x340] sm:$0xff]
    %v299 = vld [vmem:[#allocation5 + $0x348] sm:$0xff]
    %v300 = vld [vmem:[#allocation5 + $0x350] sm:$0xff]
    %v301 = vld [vmem:[#allocation5 + $0x358] sm:$0xff]
    %v302 = vld [vmem:[#allocation5 + $0x360] sm:$0xff]
    %v303 = vld [vmem:[#allocation5 + $0x368] sm:$0xff]
    %v304 = vld [vmem:[#allocation5 + $0x370] sm:$0xff]
    %v305 = vld [vmem:[#allocation5 + $0x378] sm:$0xff]
    %v306 = vld [vmem:[#allocation5 + $0x380] sm:$0xff]
    %v307 = vld [vmem:[#allocation5 + $0x388] sm:$0xff]
    %v308 = vld [vmem:[#allocation5 + $0x390] sm:$0xff]
    %v309 = vld [vmem:[#allocation5 + $0x398] sm:$0xff]
    %v310 = vld [vmem:[#allocation5 + $0x3a0] sm:$0xff]
    %v311 = vld [vmem:[#allocation5 + $0x3a8] sm:$0xff]
    %v312 = vld [vmem:[#allocation5 + $0x3b0] sm:$0xff]
    %v313 = vld [vmem:[#allocation5 + $0x3b8] sm:$0xff]
    %v314 = vld [vmem:[#allocation5 + $0x3c0] sm:$0xff]
    %v315 = vld [vmem:[#allocation5 + $0x3c8] sm:$0xff]
    %v316 = vld [vmem:[#allocation5 + $0x3d0] sm:$0xff]
    %v317 = vld [vmem:[#allocation5 + $0x3d8] sm:$0xff]
    %v318 = vld [vmem:[#allocation5 + $0x3e0] sm:$0xff]
    %v319 = vld [vmem:[#allocation5 + $0x3e8] sm:$0xff]
    %v320 = vld [vmem:[#allocation5 + $0x3f0] sm:$0xff]
    %v321 = vld [vmem:[#allocation5 + $0x3f8] sm:$0xff]
    %v322 = vld [vmem:[%s2] sm:$0xf]
    %v324 = vlaneseq
    %v325 = vshrl.u32 %v324, 7
    %v326 = vsub.s32 0, %v325
    %v327 = vrot.slane %v322, %v326
    %v328 = vlaneseq
    %v329 = vshrl.u32 %v328, 7
    %v330 = vsub.s32 1, %v329
    %v331 = vrot.slane %v322, %v330
    %v332 = vlaneseq
    %v333 = vshrl.u32 %v332, 7
    %v334 = vsub.s32 2, %v333
    %v335 = vrot.slane %v322, %v334
    %v336 = vlaneseq
    %v337 = vshrl.u32 %v336, 7
    %v338 = vsub.s32 3, %v337
    %v339 = vrot.slane %v322, %v338
    %v344 = vld [vmem:[%s4] sm:$0xf]
    %v346 = vlaneseq
    %v347 = vshrl.u32 %v346, 7
    %v348 = vsub.s32 0, %v347
    %v349 = vrot.slane %v344, %v348
    %v350 = vlaneseq
    %v351 = vshrl.u32 %v350, 7
    %v352 = vsub.s32 1, %v351
    %v353 = vrot.slane %v344, %v352
    %v354 = vlaneseq
    %v355 = vshrl.u32 %v354, 7
    %v356 = vsub.s32 2, %v355
    %v357 = vrot.slane %v344, %v356
    %v358 = vlaneseq
    %v359 = vshrl.u32 %v358, 7
    %v360 = vsub.s32 3, %v359
    %v361 = vrot.slane %v344, %v360
    %v366 = vld [vmem:[%s0] sm:$0xff]
    %367 = vmatprep.subr.mxu0 %v127
    %368 = vmatpush1.msra.mxu0 %v126
    %369 = vmatprep.subr.mxu0 %v123
    %370 = vmatpush1.msra.mxu0 %v122
    %371 = vmatprep.subr.mxu0 %v119
    %372 = vmatpush1.msra.mxu0 %v118
    %373 = vmatprep.subr.mxu0 %v115
    %374 = vmatpush1.msra.mxu0 %v114
    %375 = vmatprep.subr.mxu0 %v111
    %376 = vmatpush1.msra.mxu0 %v110
    %377 = vmatprep.subr.mxu0 %v107
    %378 = vmatpush1.msra.mxu0 %v106
    %379 = vmatprep.subr.mxu0 %v103
    %380 = vmatpush1.msra.mxu0 %v102
    %381 = vmatprep.subr.mxu0 %v99
    %382 = vmatpush1.msra.mxu0 %v98
    %383 = vmatprep.subr.mxu0 %v95
    %384 = vmatpush1.msra.mxu0 %v94
    %385 = vmatprep.subr.mxu0 %v91
    %386 = vmatpush1.msra.mxu0 %v90
    %387 = vmatprep.subr.mxu0 %v87
    %388 = vmatpush1.msra.mxu0 %v86
    %389 = vmatprep.subr.mxu0 %v83
    %390 = vmatpush1.msra.mxu0 %v82
    %391 = vmatprep.subr.mxu0 %v79
    %392 = vmatpush1.msra.mxu0 %v78
    %393 = vmatprep.subr.mxu0 %v75
    %394 = vmatpush1.msra.mxu0 %v74
    %395 = vmatprep.subr.mxu0 %v71
    %396 = vmatpush1.msra.mxu0 %v70
    %397 = vmatprep.subr.mxu0 %v67
    %398 = vmatpush1.msra.mxu0 %v66
    %399 = vmatprep.subr.mxu0 %v191
    %400 = vmatpush2.msra.mxu0 %v190
    %401 = vmatprep.subr.mxu0 %v187
    %402 = vmatpush2.msra.mxu0 %v186
    %403 = vmatprep.subr.mxu0 %v183
    %404 = vmatpush2.msra.mxu0 %v182
    %405 = vmatprep.subr.mxu0 %v179
    %406 = vmatpush2.msra.mxu0 %v178
    %407 = vmatprep.subr.mxu0 %v175
    %408 = vmatpush2.msra.mxu0 %v174
    %409 = vmatprep.subr.mxu0 %v171
    %410 = vmatpush2.msra.mxu0 %v170
    %411 = vmatprep.subr.mxu0 %v167
    %412 = vmatpush2.msra.mxu0 %v166
    %413 = vmatprep.subr.mxu0 %v163
    %414 = vmatpush2.msra.mxu0 %v162
    %415 = vmatprep.subr.mxu0 %v159
    %416 = vmatpush2.msra.mxu0 %v158
    %417 = vmatprep.subr.mxu0 %v155
    %418 = vmatpush2.msra.mxu0 %v154
    %419 = vmatprep.subr.mxu0 %v151
    %420 = vmatpush2.msra.mxu0 %v150
    %421 = vmatprep.subr.mxu0 %v147
    %422 = vmatpush2.msra.mxu0 %v146
    %423 = vmatprep.subr.mxu0 %v143
    %424 = vmatpush2.msra.mxu0 %v142
    %425 = vmatprep.subr.mxu0 %v139
    %426 = vmatpush2.msra.mxu0 %v138
    %427 = vmatprep.subr.mxu0 %v135
    %428 = vmatpush2.msra.mxu0 %v134
    %429 = vmatprep.subr.mxu0 %v131
    %430 = vmatpush2.msra.mxu0 %v130
    %431 = vmatprep.mubr.f32.mxu0 0.0
    %432 = vmatmul.mubr.f32.gmra.mxu0 %v366
    %v433 = vpop.f32.mrf.mxu0
    %v434 = vadd.f32 %v327, %v433
    %v435 = vpop.f32.mrf.mxu0
    %v436 = vadd.f32 %v331, %v435
    %437 = vdwg.mxu0
    %438 = vmatprep.subr.mxu0 %v129
    %439 = vmatpush1.msra.mxu0 %v128
    %440 = vmatprep.subr.mxu0 %v125
    %441 = vmatpush1.msra.mxu0 %v124
    %442 = vmatprep.subr.mxu0 %v121
    %443 = vmatpush1.msra.mxu0 %v120
    %444 = vmatprep.subr.mxu0 %v117
    %445 = vmatpush1.msra.mxu0 %v116
    %446 = vmatprep.subr.mxu0 %v113
    %447 = vmatpush1.msra.mxu0 %v112
    %448 = vmatprep.subr.mxu0 %v109
    %449 = vmatpush1.msra.mxu0 %v108
    %450 = vmatprep.subr.mxu0 %v105
    %451 = vmatpush1.msra.mxu0 %v104
    %452 = vmatprep.subr.mxu0 %v101
    %453 = vmatpush1.msra.mxu0 %v100
    %454 = vmatprep.subr.mxu0 %v97
    %455 = vmatpush1.msra.mxu0 %v96
    %456 = vmatprep.subr.mxu0 %v93
    %457 = vmatpush1.msra.mxu0 %v92
    %458 = vmatprep.subr.mxu0 %v89
    %459 = vmatpush1.msra.mxu0 %v88
    %460 = vmatprep.subr.mxu0 %v85
    %461 = vmatpush1.msra.mxu0 %v84
    %462 = vmatprep.subr.mxu0 %v81
    %463 = vmatpush1.msra.mxu0 %v80
    %464 = vmatprep.subr.mxu0 %v77
    %465 = vmatpush1.msra.mxu0 %v76
    %466 = vmatprep.subr.mxu0 %v73
    %467 = vmatpush1.msra.mxu0 %v72
    %468 = vmatprep.subr.mxu0 %v69
    %469 = vmatpush1.msra.mxu0 %v68
    %470 = vmatprep.subr.mxu0 %v193
    %471 = vmatpush2.msra.mxu0 %v192
    %472 = vmatprep.subr.mxu0 %v189
    %473 = vmatpush2.msra.mxu0 %v188
    %474 = vmatprep.subr.mxu0 %v185
    %475 = vmatpush2.msra.mxu0 %v184
    %476 = vmatprep.subr.mxu0 %v181
    %477 = vmatpush2.msra.mxu0 %v180
    %478 = vmatprep.subr.mxu0 %v177
    %479 = vmatpush2.msra.mxu0 %v176
    %480 = vmatprep.subr.mxu0 %v173
    %481 = vmatpush2.msra.mxu0 %v172
    %482 = vmatprep.subr.mxu0 %v169
    %483 = vmatpush2.msra.mxu0 %v168
    %484 = vmatprep.subr.mxu0 %v165
    %485 = vmatpush2.msra.mxu0 %v164
    %486 = vmatprep.subr.mxu0 %v161
    %487 = vmatpush2.msra.mxu0 %v160
    %488 = vmatprep.subr.mxu0 %v157
    %489 = vmatpush2.msra.mxu0 %v156
    %490 = vmatprep.subr.mxu0 %v153
    %491 = vmatpush2.msra.mxu0 %v152
    %492 = vmatprep.subr.mxu0 %v149
    %493 = vmatpush2.msra.mxu0 %v148
    %494 = vmatprep.subr.mxu0 %v145
    %495 = vmatpush2.msra.mxu0 %v144
    %496 = vmatprep.subr.mxu0 %v141
    %497 = vmatpush2.msra.mxu0 %v140
    %498 = vmatprep.subr.mxu0 %v137
    %499 = vmatpush2.msra.mxu0 %v136
    %500 = vmatprep.subr.mxu0 %v133
    %501 = vmatpush2.msra.mxu0 %v132
    %502 = vmatprep.mubr.f32.mxu0 0.0
    %503 = vmatmul.mubr.f32.gmra.mxu0 %v366
    %v504 = vpop.f32.mrf.mxu0
    %v505 = vadd.f32 %v335, %v504
    %v506 = vpop.f32.mrf.mxu0
    %v507 = vadd.f32 %v339, %v506
    %508 = vdwg.mxu0
    %v509 = vxor.u32 %v434, 2147483648
    %v510 = vmul.f32 %v509, 1.442695
    %v511 = vpow.pop %v510
    %v512 = vadd.f32 %v511, 1.0
    %v513 = vrcp.pop %v512
    %v514 = vmul.f32 1.0, %v513
    %v515 = vxor.u32 %v436, 2147483648
    %v516 = vmul.f32 %v515, 1.442695
    %v517 = vpow.pop %v516
    %v518 = vadd.f32 %v517, 1.0
    %v519 = vrcp.pop %v518
    %v520 = vmul.f32 1.0, %v519
    %v521 = vtanh.pop %v505
    %v522 = vxor.u32 %v507, 2147483648
    %v523 = vmul.f32 %v522, 1.442695
    %v524 = vpow.pop %v523
    %v525 = vadd.f32 %v524, 1.0
    %v526 = vrcp.pop %v525
    %v527 = vmul.f32 1.0, %v526
    %v528 = vmul.f32 %v520, 0.0
    %v529 = vmul.f32 %v514, %v521
    %v530 = vadd.f32 %v528, %v529
    %v531 = vtanh.pop %v530
    %v532 = vmul.f32 %v527, %v531
    %533 = vst [vmem:[%s9] sm:$0xff] %v532
    %s534 = scalar_lea.vmem %s0, 56
    %v535 = vld [vmem:[%s534] sm:$0xff]
    %536 = vmatprep.subr.mxu0 %v255
    %537 = vmatpush1.msra.mxu0 %v254
    %538 = vmatprep.subr.mxu0 %v251
    %539 = vmatpush1.msra.mxu0 %v250
    %540 = vmatprep.subr.mxu0 %v247
    %541 = vmatpush1.msra.mxu0 %v246
    %542 = vmatprep.subr.mxu0 %v243
    %543 = vmatpush1.msra.mxu0 %v242
    %544 = vmatprep.subr.mxu0 %v239
    %545 = vmatpush1.msra.mxu0 %v238
    %546 = vmatprep.subr.mxu0 %v235
    %547 = vmatpush1.msra.mxu0 %v234
    %548 = vmatprep.subr.mxu0 %v231
    %549 = vmatpush1.msra.mxu0 %v230
    %550 = vmatprep.subr.mxu0 %v227
    %551 = vmatpush1.msra.mxu0 %v226
    %552 = vmatprep.subr.mxu0 %v223
    %553 = vmatpush1.msra.mxu0 %v222
    %554 = vmatprep.subr.mxu0 %v219
    %555 = vmatpush1.msra.mxu0 %v218
    %556 = vmatprep.subr.mxu0 %v215
    %557 = vmatpush1.msra.mxu0 %v214
    %558 = vmatprep.subr.mxu0 %v211
    %559 = vmatpush1.msra.mxu0 %v210
    %560 = vmatprep.subr.mxu0 %v207
    %561 = vmatpush1.msra.mxu0 %v206
    %562 = vmatprep.subr.mxu0 %v203
    %563 = vmatpush1.msra.mxu0 %v202
    %564 = vmatprep.subr.mxu0 %v199
    %565 = vmatpush1.msra.mxu0 %v198
    %566 = vmatprep.subr.mxu0 %v195
    %567 = vmatpush1.msra.mxu0 %v194
    %568 = vmatprep.subr.mxu0 %v319
    %569 = vmatpush2.msra.mxu0 %v318
    %570 = vmatprep.subr.mxu0 %v315
    %571 = vmatpush2.msra.mxu0 %v314
    %572 = vmatprep.subr.mxu0 %v311
    %573 = vmatpush2.msra.mxu0 %v310
    %574 = vmatprep.subr.mxu0 %v307
    %575 = vmatpush2.msra.mxu0 %v306
    %576 = vmatprep.subr.mxu0 %v303
    %577 = vmatpush2.msra.mxu0 %v302
    %578 = vmatprep.subr.mxu0 %v299
    %579 = vmatpush2.msra.mxu0 %v298
    %580 = vmatprep.subr.mxu0 %v295
    %581 = vmatpush2.msra.mxu0 %v294
    %582 = vmatprep.subr.mxu0 %v291
    %583 = vmatpush2.msra.mxu0 %v290
    %584 = vmatprep.subr.mxu0 %v287
    %585 = vmatpush2.msra.mxu0 %v286
    %586 = vmatprep.subr.mxu0 %v283
    %587 = vmatpush2.msra.mxu0 %v282
    %588 = vmatprep.subr.mxu0 %v279
    %589 = vmatpush2.msra.mxu0 %v278
    %590 = vmatprep.subr.mxu0 %v275
    %591 = vmatpush2.msra.mxu0 %v274
    %592 = vmatprep.subr.mxu0 %v271
    %593 = vmatpush2.msra.mxu0 %v270
    %594 = vmatprep.subr.mxu0 %v267
    %595 = vmatpush2.msra.mxu0 %v266
    %596 = vmatprep.subr.mxu0 %v263
    %597 = vmatpush2.msra.mxu0 %v262
    %598 = vmatprep.subr.mxu0 %v259
    %599 = vmatpush2.msra.mxu0 %v258
    %600 = vmatprep.mubr.f32.mxu0 0.0
    %601 = vmatmul.mubr.f32.gmra.mxu0 %v535
    %v602 = vpop.f32.mrf.mxu0
    %v603 = vadd.f32 %v349, %v602
    %v604 = vpop.f32.mrf.mxu0
    %v605 = vadd.f32 %v353, %v604
    %606 = vdwg.mxu0
    %607 = vmatprep.subr.mxu0 %v257
    %608 = vmatpush1.msra.mxu0 %v256
    %609 = vmatprep.subr.mxu0 %v253
    %610 = vmatpush1.msra.mxu0 %v252
    %611 = vmatprep.subr.mxu0 %v249
    %612 = vmatpush1.msra.mxu0 %v248
    %613 = vmatprep.subr.mxu0 %v245
    %614 = vmatpush1.msra.mxu0 %v244
    %615 = vmatprep.subr.mxu0 %v241
    %616 = vmatpush1.msra.mxu0 %v240
    %617 = vmatprep.subr.mxu0 %v237
    %618 = vmatpush1.msra.mxu0 %v236
    %619 = vmatprep.subr.mxu0 %v233
    %620 = vmatpush1.msra.mxu0 %v232
    %621 = vmatprep.subr.mxu0 %v229
    %622 = vmatpush1.msra.mxu0 %v228
    %623 = vmatprep.subr.mxu0 %v225
    %624 = vmatpush1.msra.mxu0 %v224
    %625 = vmatprep.subr.mxu0 %v221
    %626 = vmatpush1.msra.mxu0 %v220
    %627 = vmatprep.subr.mxu0 %v217
    %628 = vmatpush1.msra.mxu0 %v216
    %629 = vmatprep.subr.mxu0 %v213
    %630 = vmatpush1.msra.mxu0 %v212
    %631 = vmatprep.subr.mxu0 %v209
    %632 = vmatpush1.msra.mxu0 %v208
    %633 = vmatprep.subr.mxu0 %v205
    %634 = vmatpush1.msra.mxu0 %v204
    %635 = vmatprep.subr.mxu0 %v201
    %636 = vmatpush1.msra.mxu0 %v200
    %637 = vmatprep.subr.mxu0 %v197
    %638 = vmatpush1.msra.mxu0 %v196
    %639 = vmatprep.subr.mxu0 %v321
    %640 = vmatpush2.msra.mxu0 %v320
    %641 = vmatprep.subr.mxu0 %v317
    %642 = vmatpush2.msra.mxu0 %v316
    %643 = vmatprep.subr.mxu0 %v313
    %644 = vmatpush2.msra.mxu0 %v312
    %645 = vmatprep.subr.mxu0 %v309
    %646 = vmatpush2.msra.mxu0 %v308
    %647 = vmatprep.subr.mxu0 %v305
    %648 = vmatpush2.msra.mxu0 %v304
    %649 = vmatprep.subr.mxu0 %v301
    %650 = vmatpush2.msra.mxu0 %v300
    %651 = vmatprep.subr.mxu0 %v297
    %652 = vmatpush2.msra.mxu0 %v296
    %653 = vmatprep.subr.mxu0 %v293
    %654 = vmatpush2.msra.mxu0 %v292
    %655 = vmatprep.subr.mxu0 %v289
    %656 = vmatpush2.msra.mxu0 %v288
    %657 = vmatprep.subr.mxu0 %v285
    %658 = vmatpush2.msra.mxu0 %v284
    %659 = vmatprep.subr.mxu0 %v281
    %660 = vmatpush2.msra.mxu0 %v280
    %661 = vmatprep.subr.mxu0 %v277
    %662 = vmatpush2.msra.mxu0 %v276
    %663 = vmatprep.subr.mxu0 %v273
    %664 = vmatpush2.msra.mxu0 %v272
    %665 = vmatprep.subr.mxu0 %v269
    %666 = vmatpush2.msra.mxu0 %v268
    %667 = vmatprep.subr.mxu0 %v265
    %668 = vmatpush2.msra.mxu0 %v264
    %669 = vmatprep.subr.mxu0 %v261
    %670 = vmatpush2.msra.mxu0 %v260
    %671 = vmatprep.mubr.f32.mxu0 0.0
    %672 = vmatmul.mubr.f32.gmra.mxu0 %v535
    %v673 = vpop.f32.mrf.mxu0
    %v674 = vadd.f32 %v357, %v673
    %v675 = vpop.f32.mrf.mxu0
    %v676 = vadd.f32 %v361, %v675
    %677 = vdwg.mxu0
    %v678 = vxor.u32 %v603, 2147483648
    %v679 = vmul.f32 %v678, 1.442695
    %v680 = vpow.pop %v679
    %v681 = vadd.f32 %v680, 1.0
    %v682 = vrcp.pop %v681
    %v683 = vmul.f32 1.0, %v682
    %v684 = vxor.u32 %v605, 2147483648
    %v685 = vmul.f32 %v684, 1.442695
    %v686 = vpow.pop %v685
    %v687 = vadd.f32 %v686, 1.0
    %v688 = vrcp.pop %v687
    %v689 = vmul.f32 1.0, %v688
    %v690 = vtanh.pop %v674
    %v691 = vxor.u32 %v676, 2147483648
    %v692 = vmul.f32 %v691, 1.442695
    %v693 = vpow.pop %v692
    %v694 = vadd.f32 %v693, 1.0
    %v695 = vrcp.pop %v694
    %v696 = vmul.f32 1.0, %v695
    %v697 = vmul.f32 %v689, 0.0
    %v698 = vmul.f32 %v683, %v690
    %v699 = vadd.f32 %v697, %v698
    %v700 = vtanh.pop %v699
    %v701 = vmul.f32 %v696, %v700
    %s702 = scalar_lea.vmem %s10, 56
    %703 = vst [vmem:[%s702] sm:$0xff] %v701
    %s704 = scalar_lea.vmem %s0, 8
    %v705 = vld [vmem:[%s704] sm:$0xff]
    %706 = vmatprep.subr.mxu0 %v127
    %707 = vmatpush1.msra.mxu0 %v126
    %708 = vmatprep.subr.mxu0 %v123
    %709 = vmatpush1.msra.mxu0 %v122
    %710 = vmatprep.subr.mxu0 %v119
    %711 = vmatpush1.msra.mxu0 %v118
    %712 = vmatprep.subr.mxu0 %v115
    %713 = vmatpush1.msra.mxu0 %v114
    %714 = vmatprep.subr.mxu0 %v111
    %715 = vmatpush1.msra.mxu0 %v110
    %716 = vmatprep.subr.mxu0 %v107
    %717 = vmatpush1.msra.mxu0 %v106
    %718 = vmatprep.subr.mxu0 %v103
    %719 = vmatpush1.msra.mxu0 %v102
    %720 = vmatprep.subr.mxu0 %v99
    %721 = vmatpush1.msra.mxu0 %v98
    %722 = vmatprep.subr.mxu0 %v95
    %723 = vmatpush1.msra.mxu0 %v94
    %724 = vmatprep.subr.mxu0 %v91
    %725 = vmatpush1.msra.mxu0 %v90
    %726 = vmatprep.subr.mxu0 %v87
    %727 = vmatpush1.msra.mxu0 %v86
    %728 = vmatprep.subr.mxu0 %v83
    %729 = vmatpush1.msra.mxu0 %v82
    %730 = vmatprep.subr.mxu0 %v79
    %731 = vmatpush1.msra.mxu0 %v78
    %732 = vmatprep.subr.mxu0 %v75
    %733 = vmatpush1.msra.mxu0 %v74
    %734 = vmatprep.subr.mxu0 %v71
    %735 = vmatpush1.msra.mxu0 %v70
    %736 = vmatprep.subr.mxu0 %v67
    %737 = vmatpush1.msra.mxu0 %v66
    %738 = vmatprep.subr.mxu0 %v191
    %739 = vmatpush2.msra.mxu0 %v190
    %740 = vmatprep.subr.mxu0 %v187
    %741 = vmatpush2.msra.mxu0 %v186
    %742 = vmatprep.subr.mxu0 %v183
    %743 = vmatpush2.msra.mxu0 %v182
    %744 = vmatprep.subr.mxu0 %v179
    %745 = vmatpush2.msra.mxu0 %v178
    %746 = vmatprep.subr.mxu0 %v175
    %747 = vmatpush2.msra.mxu0 %v174
    %748 = vmatprep.subr.mxu0 %v171
    %749 = vmatpush2.msra.mxu0 %v170
    %750 = vmatprep.subr.mxu0 %v167
    %751 = vmatpush2.msra.mxu0 %v166
    %752 = vmatprep.subr.mxu0 %v163
    %753 = vmatpush2.msra.mxu0 %v162
    %754 = vmatprep.subr.mxu0 %v159
    %755 = vmatpush2.msra.mxu0 %v158
    %756 = vmatprep.subr.mxu0 %v155
    %757 = vmatpush2.msra.mxu0 %v154
    %758 = vmatprep.subr.mxu0 %v151
    %759 = vmatpush2.msra.mxu0 %v150
    %760 = vmatprep.subr.mxu0 %v147
    %761 = vmatpush2.msra.mxu0 %v146
    %762 = vmatprep.subr.mxu0 %v143
    %763 = vmatpush2.msra.mxu0 %v142
    %764 = vmatprep.subr.mxu0 %v139
    %765 = vmatpush2.msra.mxu0 %v138
    %766 = vmatprep.subr.mxu0 %v135
    %767 = vmatpush2.msra.mxu0 %v134
    %768 = vmatprep.subr.mxu0 %v131
    %769 = vmatpush2.msra.mxu0 %v130
    %770 = vmatprep.mubr.f32.mxu0 %v532
    %771 = vmatmul.mubr.f32.gmra.mxu0 %v705
    %v772 = vpop.f32.mrf.mxu0
    %v773 = vadd.f32 %v327, %v772
    %v774 = vpop.f32.mrf.mxu0
    %v775 = vadd.f32 %v331, %v774
    %776 = vdwg.mxu0
    %777 = vmatprep.subr.mxu0 %v129
    %778 = vmatpush1.msra.mxu0 %v128
    %779 = vmatprep.subr.mxu0 %v125
    %780 = vmatpush1.msra.mxu0 %v124
    %781 = vmatprep.subr.mxu0 %v121
    %782 = vmatpush1.msra.mxu0 %v120
    %783 = vmatprep.subr.mxu0 %v117
    %784 = vmatpush1.msra.mxu0 %v116
    %785 = vmatprep.subr.mxu0 %v113
    %786 = vmatpush1.msra.mxu0 %v112
    %787 = vmatprep.subr.mxu0 %v109
    %788 = vmatpush1.msra.mxu0 %v108
    %789 = vmatprep.subr.mxu0 %v105
    %790 = vmatpush1.msra.mxu0 %v104
    %791 = vmatprep.subr.mxu0 %v101
    %792 = vmatpush1.msra.mxu0 %v100
    %793 = vmatprep.subr.mxu0 %v97
    %794 = vmatpush1.msra.mxu0 %v96
    %795 = vmatprep.subr.mxu0 %v93
    %796 = vmatpush1.msra.mxu0 %v92
    %797 = vmatprep.subr.mxu0 %v89
    %798 = vmatpush1.msra.mxu0 %v88
    %799 = vmatprep.subr.mxu0 %v85
    %800 = vmatpush1.msra.mxu0 %v84
    %801 = vmatprep.subr.mxu0 %v81
    %802 = vmatpush1.msra.mxu0 %v80
    %803 = vmatprep.subr.mxu0 %v77
    %804 = vmatpush1.msra.mxu0 %v76
    %805 = vmatprep.subr.mxu0 %v73
    %806 = vmatpush1.msra.mxu0 %v72
    %807 = vmatprep.subr.mxu0 %v69
    %808 = vmatpush1.msra.mxu0 %v68
    %809 = vmatprep.subr.mxu0 %v193
    %810 = vmatpush2.msra.mxu0 %v192
    %811 = vmatprep.subr.mxu0 %v189
    %812 = vmatpush2.msra.mxu0 %v188
    %813 = vmatprep.subr.mxu0 %v185
    %814 = vmatpush2.msra.mxu0 %v184
    %815 = vmatprep.subr.mxu0 %v181
    %816 = vmatpush2.msra.mxu0 %v180
    %817 = vmatprep.subr.mxu0 %v177
    %818 = vmatpush2.msra.mxu0 %v176
    %819 = vmatprep.subr.mxu0 %v173
    %820 = vmatpush2.msra.mxu0 %v172
    %821 = vmatprep.subr.mxu0 %v169
    %822 = vmatpush2.msra.mxu0 %v168
    %823 = vmatprep.subr.mxu0 %v165
    %824 = vmatpush2.msra.mxu0 %v164
    %825 = vmatprep.subr.mxu0 %v161
    %826 = vmatpush2.msra.mxu0 %v160
    %827 = vmatprep.subr.mxu0 %v157
    %828 = vmatpush2.msra.mxu0 %v156
    %829 = vmatprep.subr.mxu0 %v153
    %830 = vmatpush2.msra.mxu0 %v152
    %831 = vmatprep.subr.mxu0 %v149
    %832 = vmatpush2.msra.mxu0 %v148
    %833 = vmatprep.subr.mxu0 %v145
    %834 = vmatpush2.msra.mxu0 %v144
    %835 = vmatprep.subr.mxu0 %v141
    %836 = vmatpush2.msra.mxu0 %v140
    %837 = vmatprep.subr.mxu0 %v137
    %838 = vmatpush2.msra.mxu0 %v136
    %839 = vmatprep.subr.mxu0 %v133
    %840 = vmatpush2.msra.mxu0 %v132
    %841 = vmatprep.mubr.f32.mxu0 %v532
    %842 = vmatmul.mubr.f32.gmra.mxu0 %v705
    %v843 = vpop.f32.mrf.mxu0
    %v844 = vadd.f32 %v335, %v843
    %v845 = vpop.f32.mrf.mxu0
    %v846 = vadd.f32 %v339, %v845
    %847 = vdwg.mxu0
    %v848 = vxor.u32 %v773, 2147483648
    %v849 = vmul.f32 %v848, 1.442695
    %v850 = vpow.pop %v849
    %v851 = vadd.f32 %v850, 1.0
    %v852 = vrcp.pop %v851
    %v853 = vmul.f32 1.0, %v852
    %v854 = vxor.u32 %v775, 2147483648
    %v855 = vmul.f32 %v854, 1.442695
    %v856 = vpow.pop %v855
    %v857 = vadd.f32 %v856, 1.0
    %v858 = vrcp.pop %v857
    %v859 = vmul.f32 1.0, %v858
    %v860 = vtanh.pop %v844
    %v861 = vxor.u32 %v846, 2147483648
    %v862 = vmul.f32 %v861, 1.442695
    %v863 = vpow.pop %v862
    %v864 = vadd.f32 %v863, 1.0
    %v865 = vrcp.pop %v864
    %v866 = vmul.f32 1.0, %v865
    %v867 = vmul.f32 %v859, %v530
    %v868 = vmul.f32 %v853, %v860
    %v869 = vadd.f32 %v867, %v868
    %v870 = vtanh.pop %v869
    %v871 = vmul.f32 %v866, %v870
    %s872 = scalar_lea.vmem %s9, 8
    %873 = vst [vmem:[%s872] sm:$0xff] %v871
    %s874 = scalar_lea.vmem %s0, 48
    %v875 = vld [vmem:[%s874] sm:$0xff]
    %876 = vmatprep.subr.mxu0 %v255
    %877 = vmatpush1.msra.mxu0 %v254
    %878 = vmatprep.subr.mxu0 %v251
    %879 = vmatpush1.msra.mxu0 %v250
    %880 = vmatprep.subr.mxu0 %v247
    %881 = vmatpush1.msra.mxu0 %v246
    %882 = vmatprep.subr.mxu0 %v243
    %883 = vmatpush1.msra.mxu0 %v242
    %884 = vmatprep.subr.mxu0 %v239
    %885 = vmatpush1.msra.mxu0 %v238
    %886 = vmatprep.subr.mxu0 %v235
    %887 = vmatpush1.msra.mxu0 %v234
    %888 = vmatprep.subr.mxu0 %v231
    %889 = vmatpush1.msra.mxu0 %v230
    %890 = vmatprep.subr.mxu0 %v227
    %891 = vmatpush1.msra.mxu0 %v226
    %892 = vmatprep.subr.mxu0 %v223
    %893 = vmatpush1.msra.mxu0 %v222
    %894 = vmatprep.subr.mxu0 %v219
    %895 = vmatpush1.msra.mxu0 %v218
    %896 = vmatprep.subr.mxu0 %v215
    %897 = vmatpush1.msra.mxu0 %v214
    %898 = vmatprep.subr.mxu0 %v211
    %899 = vmatpush1.msra.mxu0 %v210
    %900 = vmatprep.subr.mxu0 %v207
    %901 = vmatpush1.msra.mxu0 %v206
    %902 = vmatprep.subr.mxu0 %v203
    %903 = vmatpush1.msra.mxu0 %v202
    %904 = vmatprep.subr.mxu0 %v199
    %905 = vmatpush1.msra.mxu0 %v198
    %906 = vmatprep.subr.mxu0 %v195
    %907 = vmatpush1.msra.mxu0 %v194
    %908 = vmatprep.subr.mxu0 %v319
    %909 = vmatpush2.msra.mxu0 %v318
    %910 = vmatprep.subr.mxu0 %v315
    %911 = vmatpush2.msra.mxu0 %v314
    %912 = vmatprep.subr.mxu0 %v311
    %913 = vmatpush2.msra.mxu0 %v310
    %914 = vmatprep.subr.mxu0 %v307
    %915 = vmatpush2.msra.mxu0 %v306
    %916 = vmatprep.subr.mxu0 %v303
    %917 = vmatpush2.msra.mxu0 %v302
    %918 = vmatprep.subr.mxu0 %v299
    %919 = vmatpush2.msra.mxu0 %v298
    %920 = vmatprep.subr.mxu0 %v295
    %921 = vmatpush2.msra.mxu0 %v294
    %922 = vmatprep.subr.mxu0 %v291
    %923 = vmatpush2.msra.mxu0 %v290
    %924 = vmatprep.subr.mxu0 %v287
    %925 = vmatpush2.msra.mxu0 %v286
    %926 = vmatprep.subr.mxu0 %v283
    %927 = vmatpush2.msra.mxu0 %v282
    %928 = vmatprep.subr.mxu0 %v279
    %929 = vmatpush2.msra.mxu0 %v278
    %930 = vmatprep.subr.mxu0 %v275
    %931 = vmatpush2.msra.mxu0 %v274
    %932 = vmatprep.subr.mxu0 %v271
    %933 = vmatpush2.msra.mxu0 %v270
    %934 = vmatprep.subr.mxu0 %v267
    %935 = vmatpush2.msra.mxu0 %v266
    %936 = vmatprep.subr.mxu0 %v263
    %937 = vmatpush2.msra.mxu0 %v262
    %938 = vmatprep.subr.mxu0 %v259
    %939 = vmatpush2.msra.mxu0 %v258
    %940 = vmatprep.mubr.f32.mxu0 %v701
    %941 = vmatmul.mubr.f32.gmra.mxu0 %v875
    %v942 = vpop.f32.mrf.mxu0
    %v943 = vadd.f32 %v349, %v942
    %v944 = vpop.f32.mrf.mxu0
    %v945 = vadd.f32 %v353, %v944
    %946 = vdwg.mxu0
    %947 = vmatprep.subr.mxu0 %v257
    %948 = vmatpush1.msra.mxu0 %v256
    %949 = vmatprep.subr.mxu0 %v253
    %950 = vmatpush1.msra.mxu0 %v252
    %951 = vmatprep.subr.mxu0 %v249
    %952 = vmatpush1.msra.mxu0 %v248
    %953 = vmatprep.subr.mxu0 %v245
    %954 = vmatpush1.msra.mxu0 %v244
    %955 = vmatprep.subr.mxu0 %v241
    %956 = vmatpush1.msra.mxu0 %v240
    %957 = vmatprep.subr.mxu0 %v237
    %958 = vmatpush1.msra.mxu0 %v236
    %959 = vmatprep.subr.mxu0 %v233
    %960 = vmatpush1.msra.mxu0 %v232
    %961 = vmatprep.subr.mxu0 %v229
    %962 = vmatpush1.msra.mxu0 %v228
    %963 = vmatprep.subr.mxu0 %v225
    %964 = vmatpush1.msra.mxu0 %v224
    %965 = vmatprep.subr.mxu0 %v221
    %966 = vmatpush1.msra.mxu0 %v220
    %967 = vmatprep.subr.mxu0 %v217
    %968 = vmatpush1.msra.mxu0 %v216
    %969 = vmatprep.subr.mxu0 %v213
    %970 = vmatpush1.msra.mxu0 %v212
    %971 = vmatprep.subr.mxu0 %v209
    %972 = vmatpush1.msra.mxu0 %v208
    %973 = vmatprep.subr.mxu0 %v205
    %974 = vmatpush1.msra.mxu0 %v204
    %975 = vmatprep.subr.mxu0 %v201
    %976 = vmatpush1.msra.mxu0 %v200
    %977 = vmatprep.subr.mxu0 %v197
    %978 = vmatpush1.msra.mxu0 %v196
    %979 = vmatprep.subr.mxu0 %v321
    %980 = vmatpush2.msra.mxu0 %v320
    %981 = vmatprep.subr.mxu0 %v317
    %982 = vmatpush2.msra.mxu0 %v316
    %983 = vmatprep.subr.mxu0 %v313
    %984 = vmatpush2.msra.mxu0 %v312
    %985 = vmatprep.subr.mxu0 %v309
    %986 = vmatpush2.msra.mxu0 %v308
    %987 = vmatprep.subr.mxu0 %v305
    %988 = vmatpush2.msra.mxu0 %v304
    %989 = vmatprep.subr.mxu0 %v301
    %990 = vmatpush2.msra.mxu0 %v300
    %991 = vmatprep.subr.mxu0 %v297
    %992 = vmatpush2.msra.mxu0 %v296
    %993 = vmatprep.subr.mxu0 %v293
    %994 = vmatpush2.msra.mxu0 %v292
    %995 = vmatprep.subr.mxu0 %v289
    %996 = vmatpush2.msra.mxu0 %v288
    %997 = vmatprep.subr.mxu0 %v285
    %998 = vmatpush2.msra.mxu0 %v284
    %999 = vmatprep.subr.mxu0 %v281
    %1000 = vmatpush2.msra.mxu0 %v280
    %1001 = vmatprep.subr.mxu0 %v277
    %1002 = vmatpush2.msra.mxu0 %v276
    %1003 = vmatprep.subr.mxu0 %v273
    %1004 = vmatpush2.msra.mxu0 %v272
    %1005 = vmatprep.subr.mxu0 %v269
    %1006 = vmatpush2.msra.mxu0 %v268
    %1007 = vmatprep.subr.mxu0 %v265
    %1008 = vmatpush2.msra.mxu0 %v264
    %1009 = vmatprep.subr.mxu0 %v261
    %1010 = vmatpush2.msra.mxu0 %v260
    %1011 = vmatprep.mubr.f32.mxu0 %v701
    %1012 = vmatmul.mubr.f32.gmra.mxu0 %v875
    %v1013 = vpop.f32.mrf.mxu0
    %v1014 = vadd.f32 %v357, %v1013
    %v1015 = vpop.f32.mrf.mxu0
    %v1016 = vadd.f32 %v361, %v1015
    %1017 = vdwg.mxu0
    %v1018 = vxor.u32 %v943, 2147483648
    %v1019 = vmul.f32 %v1018, 1.442695
    %v1020 = vpow.pop %v1019
    %v1021 = vadd.f32 %v1020, 1.0
    %v1022 = vrcp.pop %v1021
    %v1023 = vmul.f32 1.0, %v1022
    %v1024 = vxor.u32 %v945, 2147483648
    %v1025 = vmul.f32 %v1024, 1.442695
    %v1026 = vpow.pop %v1025
    %v1027 = vadd.f32 %v1026, 1.0
    %v1028 = vrcp.pop %v1027
    %v1029 = vmul.f32 1.0, %v1028
    %v1030 = vtanh.pop %v1014
    %v1031 = vxor.u32 %v1016, 2147483648
    %v1032 = vmul.f32 %v1031, 1.442695
    %v1033 = vpow.pop %v1032
    %v1034 = vadd.f32 %v1033, 1.0
    %v1035 = vrcp.pop %v1034
    %v1036 = vmul.f32 1.0, %v1035
    %v1037 = vmul.f32 %v1029, %v699
    %v1038 = vmul.f32 %v1023, %v1030
    %v1039 = vadd.f32 %v1037, %v1038
    %v1040 = vtanh.pop %v1039
    %v1041 = vmul.f32 %v1036, %v1040
    %s1042 = scalar_lea.vmem %s10, 48
    %1043 = vst [vmem:[%s1042] sm:$0xff] %v1041
    %s1044 = scalar_lea.vmem %s0, 16
    %v1045 = vld [vmem:[%s1044] sm:$0xff]
    %1046 = vmatprep.subr.mxu0 %v127
    %1047 = vmatpush1.msra.mxu0 %v126
    %1048 = vmatprep.subr.mxu0 %v123
    %1049 = vmatpush1.msra.mxu0 %v122
    %1050 = vmatprep.subr.mxu0 %v119
    %1051 = vmatpush1.msra.mxu0 %v118
    %1052 = vmatprep.subr.mxu0 %v115
    %1053 = vmatpush1.msra.mxu0 %v114
    %1054 = vmatprep.subr.mxu0 %v111
    %1055 = vmatpush1.msra.mxu0 %v110
    %1056 = vmatprep.subr.mxu0 %v107
    %1057 = vmatpush1.msra.mxu0 %v106
    %1058 = vmatprep.subr.mxu0 %v103
    %1059 = vmatpush1.msra.mxu0 %v102
    %1060 = vmatprep.subr.mxu0 %v99
    %1061 = vmatpush1.msra.mxu0 %v98
    %1062 = vmatprep.subr.mxu0 %v95
    %1063 = vmatpush1.msra.mxu0 %v94
    %1064 = vmatprep.subr.mxu0 %v91
    %1065 = vmatpush1.msra.mxu0 %v90
    %1066 = vmatprep.subr.mxu0 %v87
    %1067 = vmatpush1.msra.mxu0 %v86
    %1068 = vmatprep.subr.mxu0 %v83
    %1069 = vmatpush1.msra.mxu0 %v82
    %1070 = vmatprep.subr.mxu0 %v79
    %1071 = vmatpush1.msra.mxu0 %v78
    %1072 = vmatprep.subr.mxu0 %v75
    %1073 = vmatpush1.msra.mxu0 %v74
    %1074 = vmatprep.subr.mxu0 %v71
    %1075 = vmatpush1.msra.mxu0 %v70
    %1076 = vmatprep.subr.mxu0 %v67
    %1077 = vmatpush1.msra.mxu0 %v66
    %1078 = vmatprep.subr.mxu0 %v191
    %1079 = vmatpush2.msra.mxu0 %v190
    %1080 = vmatprep.subr.mxu0 %v187
    %1081 = vmatpush2.msra.mxu0 %v186
    %1082 = vmatprep.subr.mxu0 %v183
    %1083 = vmatpush2.msra.mxu0 %v182
    %1084 = vmatprep.subr.mxu0 %v179
    %1085 = vmatpush2.msra.mxu0 %v178
    %1086 = vmatprep.subr.mxu0 %v175
    %1087 = vmatpush2.msra.mxu0 %v174
    %1088 = vmatprep.subr.mxu0 %v171
    %1089 = vmatpush2.msra.mxu0 %v170
    %1090 = vmatprep.subr.mxu0 %v167
    %1091 = vmatpush2.msra.mxu0 %v166
    %1092 = vmatprep.subr.mxu0 %v163
    %1093 = vmatpush2.msra.mxu0 %v162
    %1094 = vmatprep.subr.mxu0 %v159
    %1095 = vmatpush2.msra.mxu0 %v158
    %1096 = vmatprep.subr.mxu0 %v155
    %1097 = vmatpush2.msra.mxu0 %v154
    %1098 = vmatprep.subr.mxu0 %v151
    %1099 = vmatpush2.msra.mxu0 %v150
    %1100 = vmatprep.subr.mxu0 %v147
    %1101 = vmatpush2.msra.mxu0 %v146
    %1102 = vmatprep.subr.mxu0 %v143
    %1103 = vmatpush2.msra.mxu0 %v142
    %1104 = vmatprep.subr.mxu0 %v139
    %1105 = vmatpush2.msra.mxu0 %v138
    %1106 = vmatprep.subr.mxu0 %v135
    %1107 = vmatpush2.msra.mxu0 %v134
    %1108 = vmatprep.subr.mxu0 %v131
    %1109 = vmatpush2.msra.mxu0 %v130
    %1110 = vmatprep.mubr.f32.mxu0 %v871
    %1111 = vmatmul.mubr.f32.gmra.mxu0 %v1045
    %v1112 = vpop.f32.mrf.mxu0
    %v1113 = vadd.f32 %v327, %v1112
    %v1114 = vpop.f32.mrf.mxu0
    %v1115 = vadd.f32 %v331, %v1114
    %1116 = vdwg.mxu0
    %1117 = vmatprep.subr.mxu0 %v129
    %1118 = vmatpush1.msra.mxu0 %v128
    %1119 = vmatprep.subr.mxu0 %v125
    %1120 = vmatpush1.msra.mxu0 %v124
    %1121 = vmatprep.subr.mxu0 %v121
    %1122 = vmatpush1.msra.mxu0 %v120
    %1123 = vmatprep.subr.mxu0 %v117
    %1124 = vmatpush1.msra.mxu0 %v116
    %1125 = vmatprep.subr.mxu0 %v113
    %1126 = vmatpush1.msra.mxu0 %v112
    %1127 = vmatprep.subr.mxu0 %v109
    %1128 = vmatpush1.msra.mxu0 %v108
    %1129 = vmatprep.subr.mxu0 %v105
    %1130 = vmatpush1.msra.mxu0 %v104
    %1131 = vmatprep.subr.mxu0 %v101
    %1132 = vmatpush1.msra.mxu0 %v100
    %1133 = vmatprep.subr.mxu0 %v97
    %1134 = vmatpush1.msra.mxu0 %v96
    %1135 = vmatprep.subr.mxu0 %v93
    %1136 = vmatpush1.msra.mxu0 %v92
    %1137 = vmatprep.subr.mxu0 %v89
    %1138 = vmatpush1.msra.mxu0 %v88
    %1139 = vmatprep.subr.mxu0 %v85
    %1140 = vmatpush1.msra.mxu0 %v84
    %1141 = vmatprep.subr.mxu0 %v81
    %1142 = vmatpush1.msra.mxu0 %v80
    %1143 = vmatprep.subr.mxu0 %v77
    %1144 = vmatpush1.msra.mxu0 %v76
    %1145 = vmatprep.subr.mxu0 %v73
    %1146 = vmatpush1.msra.mxu0 %v72
    %1147 = vmatprep.subr.mxu0 %v69
    %1148 = vmatpush1.msra.mxu0 %v68
    %1149 = vmatprep.subr.mxu0 %v193
    %1150 = vmatpush2.msra.mxu0 %v192
    %1151 = vmatprep.subr.mxu0 %v189
    %1152 = vmatpush2.msra.mxu0 %v188
    %1153 = vmatprep.subr.mxu0 %v185
    %1154 = vmatpush2.msra.mxu0 %v184
    %1155 = vmatprep.subr.mxu0 %v181
    %1156 = vmatpush2.msra.mxu0 %v180
    %1157 = vmatprep.subr.mxu0 %v177
    %1158 = vmatpush2.msra.mxu0 %v176
    %1159 = vmatprep.subr.mxu0 %v173
    %1160 = vmatpush2.msra.mxu0 %v172
    %1161 = vmatprep.subr.mxu0 %v169
    %1162 = vmatpush2.msra.mxu0 %v168
    %1163 = vmatprep.subr.mxu0 %v165
    %1164 = vmatpush2.msra.mxu0 %v164
    %1165 = vmatprep.subr.mxu0 %v161
    %1166 = vmatpush2.msra.mxu0 %v160
    %1167 = vmatprep.subr.mxu0 %v157
    %1168 = vmatpush2.msra.mxu0 %v156
    %1169 = vmatprep.subr.mxu0 %v153
    %1170 = vmatpush2.msra.mxu0 %v152
    %1171 = vmatprep.subr.mxu0 %v149
    %1172 = vmatpush2.msra.mxu0 %v148
    %1173 = vmatprep.subr.mxu0 %v145
    %1174 = vmatpush2.msra.mxu0 %v144
    %1175 = vmatprep.subr.mxu0 %v141
    %1176 = vmatpush2.msra.mxu0 %v140
    %1177 = vmatprep.subr.mxu0 %v137
    %1178 = vmatpush2.msra.mxu0 %v136
    %1179 = vmatprep.subr.mxu0 %v133
    %1180 = vmatpush2.msra.mxu0 %v132
    %1181 = vmatprep.mubr.f32.mxu0 %v871
    %1182 = vmatmul.mubr.f32.gmra.mxu0 %v1045
    %v1183 = vpop.f32.mrf.mxu0
    %v1184 = vadd.f32 %v335, %v1183
    %v1185 = vpop.f32.mrf.mxu0
    %v1186 = vadd.f32 %v339, %v1185
    %1187 = vdwg.mxu0
    %v1188 = vxor.u32 %v1113, 2147483648
    %v1189 = vmul.f32 %v1188, 1.442695
    %v1190 = vpow.pop %v1189
    %v1191 = vadd.f32 %v1190, 1.0
    %v1192 = vrcp.pop %v1191
    %v1193 = vmul.f32 1.0, %v1192
    %v1194 = vxor.u32 %v1115, 2147483648
    %v1195 = vmul.f32 %v1194, 1.442695
    %v1196 = vpow.pop %v1195
    %v1197 = vadd.f32 %v1196, 1.0
    %v1198 = vrcp.pop %v1197
    %v1199 = vmul.f32 1.0, %v1198
    %v1200 = vtanh.pop %v1184
    %v1201 = vxor.u32 %v1186, 2147483648
    %v1202 = vmul.f32 %v1201, 1.442695
    %v1203 = vpow.pop %v1202
    %v1204 = vadd.f32 %v1203, 1.0
    %v1205 = vrcp.pop %v1204
    %v1206 = vmul.f32 1.0, %v1205
    %v1207 = vmul.f32 %v1199, %v869
    %v1208 = vmul.f32 %v1193, %v1200
    %v1209 = vadd.f32 %v1207, %v1208
    %v1210 = vtanh.pop %v1209
    %v1211 = vmul.f32 %v1206, %v1210
    %s1212 = scalar_lea.vmem %s9, 16
    %1213 = vst [vmem:[%s1212] sm:$0xff] %v1211
    %s1214 = scalar_lea.vmem %s0, 40
    %v1215 = vld [vmem:[%s1214] sm:$0xff]
    %1216 = vmatprep.subr.mxu0 %v255
    %1217 = vmatpush1.msra.mxu0 %v254
    %1218 = vmatprep.subr.mxu0 %v251
    %1219 = vmatpush1.msra.mxu0 %v250
    %1220 = vmatprep.subr.mxu0 %v247
    %1221 = vmatpush1.msra.mxu0 %v246
    %1222 = vmatprep.subr.mxu0 %v243
    %1223 = vmatpush1.msra.mxu0 %v242
    %1224 = vmatprep.subr.mxu0 %v239
    %1225 = vmatpush1.msra.mxu0 %v238
    %1226 = vmatprep.subr.mxu0 %v235
    %1227 = vmatpush1.msra.mxu0 %v234
    %1228 = vmatprep.subr.mxu0 %v231
    %1229 = vmatpush1.msra.mxu0 %v230
    %1230 = vmatprep.subr.mxu0 %v227
    %1231 = vmatpush1.msra.mxu0 %v226
    %1232 = vmatprep.subr.mxu0 %v223
    %1233 = vmatpush1.msra.mxu0 %v222
    %1234 = vmatprep.subr.mxu0 %v219
    %1235 = vmatpush1.msra.mxu0 %v218
    %1236 = vmatprep.subr.mxu0 %v215
    %1237 = vmatpush1.msra.mxu0 %v214
    %1238 = vmatprep.subr.mxu0 %v211
    %1239 = vmatpush1.msra.mxu0 %v210
    %1240 = vmatprep.subr.mxu0 %v207
    %1241 = vmatpush1.msra.mxu0 %v206
    %1242 = vmatprep.subr.mxu0 %v203
    %1243 = vmatpush1.msra.mxu0 %v202
    %1244 = vmatprep.subr.mxu0 %v199
    %1245 = vmatpush1.msra.mxu0 %v198
    %1246 = vmatprep.subr.mxu0 %v195
    %1247 = vmatpush1.msra.mxu0 %v194
    %1248 = vmatprep.subr.mxu0 %v319
    %1249 = vmatpush2.msra.mxu0 %v318
    %1250 = vmatprep.subr.mxu0 %v315
    %1251 = vmatpush2.msra.mxu0 %v314
    %1252 = vmatprep.subr.mxu0 %v311
    %1253 = vmatpush2.msra.mxu0 %v310
    %1254 = vmatprep.subr.mxu0 %v307
    %1255 = vmatpush2.msra.mxu0 %v306
    %1256 = vmatprep.subr.mxu0 %v303
    %1257 = vmatpush2.msra.mxu0 %v302
    %1258 = vmatprep.subr.mxu0 %v299
    %1259 = vmatpush2.msra.mxu0 %v298
    %1260 = vmatprep.subr.mxu0 %v295
    %1261 = vmatpush2.msra.mxu0 %v294
    %1262 = vmatprep.subr.mxu0 %v291
    %1263 = vmatpush2.msra.mxu0 %v290
    %1264 = vmatprep.subr.mxu0 %v287
    %1265 = vmatpush2.msra.mxu0 %v286
    %1266 = vmatprep.subr.mxu0 %v283
    %1267 = vmatpush2.msra.mxu0 %v282
    %1268 = vmatprep.subr.mxu0 %v279
    %1269 = vmatpush2.msra.mxu0 %v278
    %1270 = vmatprep.subr.mxu0 %v275
    %1271 = vmatpush2.msra.mxu0 %v274
    %1272 = vmatprep.subr.mxu0 %v271
    %1273 = vmatpush2.msra.mxu0 %v270
    %1274 = vmatprep.subr.mxu0 %v267
    %1275 = vmatpush2.msra.mxu0 %v266
    %1276 = vmatprep.subr.mxu0 %v263
    %1277 = vmatpush2.msra.mxu0 %v262
    %1278 = vmatprep.subr.mxu0 %v259
    %1279 = vmatpush2.msra.mxu0 %v258
    %1280 = vmatprep.mubr.f32.mxu0 %v1041
    %1281 = vmatmul.mubr.f32.gmra.mxu0 %v1215
    %v1282 = vpop.f32.mrf.mxu0
    %v1283 = vadd.f32 %v349, %v1282
    %v1284 = vpop.f32.mrf.mxu0
    %v1285 = vadd.f32 %v353, %v1284
    %1286 = vdwg.mxu0
    %1287 = vmatprep.subr.mxu0 %v257
    %1288 = vmatpush1.msra.mxu0 %v256
    %1289 = vmatprep.subr.mxu0 %v253
    %1290 = vmatpush1.msra.mxu0 %v252
    %1291 = vmatprep.subr.mxu0 %v249
    %1292 = vmatpush1.msra.mxu0 %v248
    %1293 = vmatprep.subr.mxu0 %v245
    %1294 = vmatpush1.msra.mxu0 %v244
    %1295 = vmatprep.subr.mxu0 %v241
    %1296 = vmatpush1.msra.mxu0 %v240
    %1297 = vmatprep.subr.mxu0 %v237
    %1298 = vmatpush1.msra.mxu0 %v236
    %1299 = vmatprep.subr.mxu0 %v233
    %1300 = vmatpush1.msra.mxu0 %v232
    %1301 = vmatprep.subr.mxu0 %v229
    %1302 = vmatpush1.msra.mxu0 %v228
    %1303 = vmatprep.subr.mxu0 %v225
    %1304 = vmatpush1.msra.mxu0 %v224
    %1305 = vmatprep.subr.mxu0 %v221
    %1306 = vmatpush1.msra.mxu0 %v220
    %1307 = vmatprep.subr.mxu0 %v217
    %1308 = vmatpush1.msra.mxu0 %v216
    %1309 = vmatprep.subr.mxu0 %v213
    %1310 = vmatpush1.msra.mxu0 %v212
    %1311 = vmatprep.subr.mxu0 %v209
    %1312 = vmatpush1.msra.mxu0 %v208
    %1313 = vmatprep.subr.mxu0 %v205
    %1314 = vmatpush1.msra.mxu0 %v204
    %1315 = vmatprep.subr.mxu0 %v201
    %1316 = vmatpush1.msra.mxu0 %v200
    %1317 = vmatprep.subr.mxu0 %v197
    %1318 = vmatpush1.msra.mxu0 %v196
    %1319 = vmatprep.subr.mxu0 %v321
    %1320 = vmatpush2.msra.mxu0 %v320
    %1321 = vmatprep.subr.mxu0 %v317
    %1322 = vmatpush2.msra.mxu0 %v316
    %1323 = vmatprep.subr.mxu0 %v313
    %1324 = vmatpush2.msra.mxu0 %v312
    %1325 = vmatprep.subr.mxu0 %v309
    %1326 = vmatpush2.msra.mxu0 %v308
    %1327 = vmatprep.subr.mxu0 %v305
    %1328 = vmatpush2.msra.mxu0 %v304
    %1329 = vmatprep.subr.mxu0 %v301
    %1330 = vmatpush2.msra.mxu0 %v300
    %1331 = vmatprep.subr.mxu0 %v297
    %1332 = vmatpush2.msra.mxu0 %v296
    %1333 = vmatprep.subr.mxu0 %v293
    %1334 = vmatpush2.msra.mxu0 %v292
    %1335 = vmatprep.subr.mxu0 %v289
    %1336 = vmatpush2.msra.mxu0 %v288
    %1337 = vmatprep.subr.mxu0 %v285
    %1338 = vmatpush2.msra.mxu0 %v284
    %1339 = vmatprep.subr.mxu0 %v281
    %1340 = vmatpush2.msra.mxu0 %v280
    %1341 = vmatprep.subr.mxu0 %v277
    %1342 = vmatpush2.msra.mxu0 %v276
    %1343 = vmatprep.subr.mxu0 %v273
    %1344 = vmatpush2.msra.mxu0 %v272
    %1345 = vmatprep.subr.mxu0 %v269
    %1346 = vmatpush2.msra.mxu0 %v268
    %1347 = vmatprep.subr.mxu0 %v265
    %1348 = vmatpush2.msra.mxu0 %v264
    %1349 = vmatprep.subr.mxu0 %v261
    %1350 = vmatpush2.msra.mxu0 %v260
    %1351 = vmatprep.mubr.f32.mxu0 %v1041
    %1352 = vmatmul.mubr.f32.gmra.mxu0 %v1215
    %v1353 = vpop.f32.mrf.mxu0
    %v1354 = vadd.f32 %v357, %v1353
    %v1355 = vpop.f32.mrf.mxu0
    %v1356 = vadd.f32 %v361, %v1355
    %1357 = vdwg.mxu0
    %v1358 = vxor.u32 %v1283, 2147483648
    %v1359 = vmul.f32 %v1358, 1.442695
    %v1360 = vpow.pop %v1359
    %v1361 = vadd.f32 %v1360, 1.0
    %v1362 = vrcp.pop %v1361
    %v1363 = vmul.f32 1.0, %v1362
    %v1364 = vxor.u32 %v1285, 2147483648
    %v1365 = vmul.f32 %v1364, 1.442695
    %v1366 = vpow.pop %v1365
    %v1367 = vadd.f32 %v1366, 1.0
    %v1368 = vrcp.pop %v1367
    %v1369 = vmul.f32 1.0, %v1368
    %v1370 = vtanh.pop %v1354
    %v1371 = vxor.u32 %v1356, 2147483648
    %v1372 = vmul.f32 %v1371, 1.442695
    %v1373 = vpow.pop %v1372
    %v1374 = vadd.f32 %v1373, 1.0
    %v1375 = vrcp.pop %v1374
    %v1376 = vmul.f32 1.0, %v1375
    %v1377 = vmul.f32 %v1369, %v1039
    %v1378 = vmul.f32 %v1363, %v1370
    %v1379 = vadd.f32 %v1377, %v1378
    %v1380 = vtanh.pop %v1379
    %v1381 = vmul.f32 %v1376, %v1380
    %s1382 = scalar_lea.vmem %s10, 40
    %1383 = vst [vmem:[%s1382] sm:$0xff] %v1381
    %s1384 = scalar_lea.vmem %s0, 24
    %v1385 = vld [vmem:[%s1384] sm:$0xff]
    %1386 = vmatprep.subr.mxu0 %v127
    %1387 = vmatpush1.msra.mxu0 %v126
    %1388 = vmatprep.subr.mxu0 %v123
    %1389 = vmatpush1.msra.mxu0 %v122
    %1390 = vmatprep.subr.mxu0 %v119
    %1391 = vmatpush1.msra.mxu0 %v118
    %1392 = vmatprep.subr.mxu0 %v115
    %1393 = vmatpush1.msra.mxu0 %v114
    %1394 = vmatprep.subr.mxu0 %v111
    %1395 = vmatpush1.msra.mxu0 %v110
    %1396 = vmatprep.subr.mxu0 %v107
    %1397 = vmatpush1.msra.mxu0 %v106
    %1398 = vmatprep.subr.mxu0 %v103
    %1399 = vmatpush1.msra.mxu0 %v102
    %1400 = vmatprep.subr.mxu0 %v99
    %1401 = vmatpush1.msra.mxu0 %v98
    %1402 = vmatprep.subr.mxu0 %v95
    %1403 = vmatpush1.msra.mxu0 %v94
    %1404 = vmatprep.subr.mxu0 %v91
    %1405 = vmatpush1.msra.mxu0 %v90
    %1406 = vmatprep.subr.mxu0 %v87
    %1407 = vmatpush1.msra.mxu0 %v86
    %1408 = vmatprep.subr.mxu0 %v83
    %1409 = vmatpush1.msra.mxu0 %v82
    %1410 = vmatprep.subr.mxu0 %v79
    %1411 = vmatpush1.msra.mxu0 %v78
    %1412 = vmatprep.subr.mxu0 %v75
    %1413 = vmatpush1.msra.mxu0 %v74
    %1414 = vmatprep.subr.mxu0 %v71
    %1415 = vmatpush1.msra.mxu0 %v70
    %1416 = vmatprep.subr.mxu0 %v67
    %1417 = vmatpush1.msra.mxu0 %v66
    %1418 = vmatprep.subr.mxu0 %v191
    %1419 = vmatpush2.msra.mxu0 %v190
    %1420 = vmatprep.subr.mxu0 %v187
    %1421 = vmatpush2.msra.mxu0 %v186
    %1422 = vmatprep.subr.mxu0 %v183
    %1423 = vmatpush2.msra.mxu0 %v182
    %1424 = vmatprep.subr.mxu0 %v179
    %1425 = vmatpush2.msra.mxu0 %v178
    %1426 = vmatprep.subr.mxu0 %v175
    %1427 = vmatpush2.msra.mxu0 %v174
    %1428 = vmatprep.subr.mxu0 %v171
    %1429 = vmatpush2.msra.mxu0 %v170
    %1430 = vmatprep.subr.mxu0 %v167
    %1431 = vmatpush2.msra.mxu0 %v166
    %1432 = vmatprep.subr.mxu0 %v163
    %1433 = vmatpush2.msra.mxu0 %v162
    %1434 = vmatprep.subr.mxu0 %v159
    %1435 = vmatpush2.msra.mxu0 %v158
    %1436 = vmatprep.subr.mxu0 %v155
    %1437 = vmatpush2.msra.mxu0 %v154
    %1438 = vmatprep.subr.mxu0 %v151
    %1439 = vmatpush2.msra.mxu0 %v150
    %1440 = vmatprep.subr.mxu0 %v147
    %1441 = vmatpush2.msra.mxu0 %v146
    %1442 = vmatprep.subr.mxu0 %v143
    %1443 = vmatpush2.msra.mxu0 %v142
    %1444 = vmatprep.subr.mxu0 %v139
    %1445 = vmatpush2.msra.mxu0 %v138
    %1446 = vmatprep.subr.mxu0 %v135
    %1447 = vmatpush2.msra.mxu0 %v134
    %1448 = vmatprep.subr.mxu0 %v131
    %1449 = vmatpush2.msra.mxu0 %v130
    %1450 = vmatprep.mubr.f32.mxu0 %v1211
    %1451 = vmatmul.mubr.f32.gmra.mxu0 %v1385
    %v1452 = vpop.f32.mrf.mxu0
    %v1453 = vadd.f32 %v327, %v1452
    %v1454 = vpop.f32.mrf.mxu0
    %v1455 = vadd.f32 %v331, %v1454
    %1456 = vdwg.mxu0
    %1457 = vmatprep.subr.mxu0 %v129
    %1458 = vmatpush1.msra.mxu0 %v128
    %1459 = vmatprep.subr.mxu0 %v125
    %1460 = vmatpush1.msra.mxu0 %v124
    %1461 = vmatprep.subr.mxu0 %v121
    %1462 = vmatpush1.msra.mxu0 %v120
    %1463 = vmatprep.subr.mxu0 %v117
    %1464 = vmatpush1.msra.mxu0 %v116
    %1465 = vmatprep.subr.mxu0 %v113
    %1466 = vmatpush1.msra.mxu0 %v112
    %1467 = vmatprep.subr.mxu0 %v109
    %1468 = vmatpush1.msra.mxu0 %v108
    %1469 = vmatprep.subr.mxu0 %v105
    %1470 = vmatpush1.msra.mxu0 %v104
    %1471 = vmatprep.subr.mxu0 %v101
    %1472 = vmatpush1.msra.mxu0 %v100
    %1473 = vmatprep.subr.mxu0 %v97
    %1474 = vmatpush1.msra.mxu0 %v96
    %1475 = vmatprep.subr.mxu0 %v93
    %1476 = vmatpush1.msra.mxu0 %v92
    %1477 = vmatprep.subr.mxu0 %v89
    %1478 = vmatpush1.msra.mxu0 %v88
    %1479 = vmatprep.subr.mxu0 %v85
    %1480 = vmatpush1.msra.mxu0 %v84
    %1481 = vmatprep.subr.mxu0 %v81
    %1482 = vmatpush1.msra.mxu0 %v80
    %1483 = vmatprep.subr.mxu0 %v77
    %1484 = vmatpush1.msra.mxu0 %v76
    %1485 = vmatprep.subr.mxu0 %v73
    %1486 = vmatpush1.msra.mxu0 %v72
    %1487 = vmatprep.subr.mxu0 %v69
    %1488 = vmatpush1.msra.mxu0 %v68
    %1489 = vmatprep.subr.mxu0 %v193
    %1490 = vmatpush2.msra.mxu0 %v192
    %1491 = vmatprep.subr.mxu0 %v189
    %1492 = vmatpush2.msra.mxu0 %v188
    %1493 = vmatprep.subr.mxu0 %v185
    %1494 = vmatpush2.msra.mxu0 %v184
    %1495 = vmatprep.subr.mxu0 %v181
    %1496 = vmatpush2.msra.mxu0 %v180
    %1497 = vmatprep.subr.mxu0 %v177
    %1498 = vmatpush2.msra.mxu0 %v176
    %1499 = vmatprep.subr.mxu0 %v173
    %1500 = vmatpush2.msra.mxu0 %v172
    %1501 = vmatprep.subr.mxu0 %v169
    %1502 = vmatpush2.msra.mxu0 %v168
    %1503 = vmatprep.subr.mxu0 %v165
    %1504 = vmatpush2.msra.mxu0 %v164
    %1505 = vmatprep.subr.mxu0 %v161
    %1506 = vmatpush2.msra.mxu0 %v160
    %1507 = vmatprep.subr.mxu0 %v157
    %1508 = vmatpush2.msra.mxu0 %v156
    %1509 = vmatprep.subr.mxu0 %v153
    %1510 = vmatpush2.msra.mxu0 %v152
    %1511 = vmatprep.subr.mxu0 %v149
    %1512 = vmatpush2.msra.mxu0 %v148
    %1513 = vmatprep.subr.mxu0 %v145
    %1514 = vmatpush2.msra.mxu0 %v144
    %1515 = vmatprep.subr.mxu0 %v141
    %1516 = vmatpush2.msra.mxu0 %v140
    %1517 = vmatprep.subr.mxu0 %v137
    %1518 = vmatpush2.msra.mxu0 %v136
    %1519 = vmatprep.subr.mxu0 %v133
    %1520 = vmatpush2.msra.mxu0 %v132
    %1521 = vmatprep.mubr.f32.mxu0 %v1211
    %1522 = vmatmul.mubr.f32.gmra.mxu0 %v1385
    %v1523 = vpop.f32.mrf.mxu0
    %v1524 = vadd.f32 %v335, %v1523
    %v1525 = vpop.f32.mrf.mxu0
    %v1526 = vadd.f32 %v339, %v1525
    %1527 = vdwg.mxu0
    %v1528 = vxor.u32 %v1453, 2147483648
    %v1529 = vmul.f32 %v1528, 1.442695
    %v1530 = vpow.pop %v1529
    %v1531 = vadd.f32 %v1530, 1.0
    %v1532 = vrcp.pop %v1531
    %v1533 = vmul.f32 1.0, %v1532
    %v1534 = vxor.u32 %v1455, 2147483648
    %v1535 = vmul.f32 %v1534, 1.442695
    %v1536 = vpow.pop %v1535
    %v1537 = vadd.f32 %v1536, 1.0
    %v1538 = vrcp.pop %v1537
    %v1539 = vmul.f32 1.0, %v1538
    %v1540 = vtanh.pop %v1524
    %v1541 = vxor.u32 %v1526, 2147483648
    %v1542 = vmul.f32 %v1541, 1.442695
    %v1543 = vpow.pop %v1542
    %v1544 = vadd.f32 %v1543, 1.0
    %v1545 = vrcp.pop %v1544
    %v1546 = vmul.f32 1.0, %v1545
    %v1547 = vmul.f32 %v1539, %v1209
    %v1548 = vmul.f32 %v1533, %v1540
    %v1549 = vadd.f32 %v1547, %v1548
    %v1550 = vtanh.pop %v1549
    %v1551 = vmul.f32 %v1546, %v1550
    %s1552 = scalar_lea.vmem %s9, 24
    %1553 = vst [vmem:[%s1552] sm:$0xff] %v1551
    %s1554 = scalar_lea.vmem %s0, 32
    %v1555 = vld [vmem:[%s1554] sm:$0xff]
    %1556 = vmatprep.subr.mxu0 %v255
    %1557 = vmatpush1.msra.mxu0 %v254
    %1558 = vmatprep.subr.mxu0 %v251
    %1559 = vmatpush1.msra.mxu0 %v250
    %1560 = vmatprep.subr.mxu0 %v247
    %1561 = vmatpush1.msra.mxu0 %v246
    %1562 = vmatprep.subr.mxu0 %v243
    %1563 = vmatpush1.msra.mxu0 %v242
    %1564 = vmatprep.subr.mxu0 %v239
    %1565 = vmatpush1.msra.mxu0 %v238
    %1566 = vmatprep.subr.mxu0 %v235
    %1567 = vmatpush1.msra.mxu0 %v234
    %1568 = vmatprep.subr.mxu0 %v231
    %1569 = vmatpush1.msra.mxu0 %v230
    %1570 = vmatprep.subr.mxu0 %v227
    %1571 = vmatpush1.msra.mxu0 %v226
    %1572 = vmatprep.subr.mxu0 %v223
    %1573 = vmatpush1.msra.mxu0 %v222
    %1574 = vmatprep.subr.mxu0 %v219
    %1575 = vmatpush1.msra.mxu0 %v218
    %1576 = vmatprep.subr.mxu0 %v215
    %1577 = vmatpush1.msra.mxu0 %v214
    %1578 = vmatprep.subr.mxu0 %v211
    %1579 = vmatpush1.msra.mxu0 %v210
    %1580 = vmatprep.subr.mxu0 %v207
    %1581 = vmatpush1.msra.mxu0 %v206
    %1582 = vmatprep.subr.mxu0 %v203
    %1583 = vmatpush1.msra.mxu0 %v202
    %1584 = vmatprep.subr.mxu0 %v199
    %1585 = vmatpush1.msra.mxu0 %v198
    %1586 = vmatprep.subr.mxu0 %v195
    %1587 = vmatpush1.msra.mxu0 %v194
    %1588 = vmatprep.subr.mxu0 %v319
    %1589 = vmatpush2.msra.mxu0 %v318
    %1590 = vmatprep.subr.mxu0 %v315
    %1591 = vmatpush2.msra.mxu0 %v314
    %1592 = vmatprep.subr.mxu0 %v311
    %1593 = vmatpush2.msra.mxu0 %v310
    %1594 = vmatprep.subr.mxu0 %v307
    %1595 = vmatpush2.msra.mxu0 %v306
    %1596 = vmatprep.subr.mxu0 %v303
    %1597 = vmatpush2.msra.mxu0 %v302
    %1598 = vmatprep.subr.mxu0 %v299
    %1599 = vmatpush2.msra.mxu0 %v298
    %1600 = vmatprep.subr.mxu0 %v295
    %1601 = vmatpush2.msra.mxu0 %v294
    %1602 = vmatprep.subr.mxu0 %v291
    %1603 = vmatpush2.msra.mxu0 %v290
    %1604 = vmatprep.subr.mxu0 %v287
    %1605 = vmatpush2.msra.mxu0 %v286
    %1606 = vmatprep.subr.mxu0 %v283
    %1607 = vmatpush2.msra.mxu0 %v282
    %1608 = vmatprep.subr.mxu0 %v279
    %1609 = vmatpush2.msra.mxu0 %v278
    %1610 = vmatprep.subr.mxu0 %v275
    %1611 = vmatpush2.msra.mxu0 %v274
    %1612 = vmatprep.subr.mxu0 %v271
    %1613 = vmatpush2.msra.mxu0 %v270
    %1614 = vmatprep.subr.mxu0 %v267
    %1615 = vmatpush2.msra.mxu0 %v266
    %1616 = vmatprep.subr.mxu0 %v263
    %1617 = vmatpush2.msra.mxu0 %v262
    %1618 = vmatprep.subr.mxu0 %v259
    %1619 = vmatpush2.msra.mxu0 %v258
    %1620 = vmatprep.mubr.f32.mxu0 %v1381
    %1621 = vmatmul.mubr.f32.gmra.mxu0 %v1555
    %v1622 = vpop.f32.mrf.mxu0
    %v1623 = vadd.f32 %v349, %v1622
    %v1624 = vpop.f32.mrf.mxu0
    %v1625 = vadd.f32 %v353, %v1624
    %1626 = vdwg.mxu0
    %1627 = vmatprep.subr.mxu0 %v257
    %1628 = vmatpush1.msra.mxu0 %v256
    %1629 = vmatprep.subr.mxu0 %v253
    %1630 = vmatpush1.msra.mxu0 %v252
    %1631 = vmatprep.subr.mxu0 %v249
    %1632 = vmatpush1.msra.mxu0 %v248
    %1633 = vmatprep.subr.mxu0 %v245
    %1634 = vmatpush1.msra.mxu0 %v244
    %1635 = vmatprep.subr.mxu0 %v241
    %1636 = vmatpush1.msra.mxu0 %v240
    %1637 = vmatprep.subr.mxu0 %v237
    %1638 = vmatpush1.msra.mxu0 %v236
    %1639 = vmatprep.subr.mxu0 %v233
    %1640 = vmatpush1.msra.mxu0 %v232
    %1641 = vmatprep.subr.mxu0 %v229
    %1642 = vmatpush1.msra.mxu0 %v228
    %1643 = vmatprep.subr.mxu0 %v225
    %1644 = vmatpush1.msra.mxu0 %v224
    %1645 = vmatprep.subr.mxu0 %v221
    %1646 = vmatpush1.msra.mxu0 %v220
    %1647 = vmatprep.subr.mxu0 %v217
    %1648 = vmatpush1.msra.mxu0 %v216
    %1649 = vmatprep.subr.mxu0 %v213
    %1650 = vmatpush1.msra.mxu0 %v212
    %1651 = vmatprep.subr.mxu0 %v209
    %1652 = vmatpush1.msra.mxu0 %v208
    %1653 = vmatprep.subr.mxu0 %v205
    %1654 = vmatpush1.msra.mxu0 %v204
    %1655 = vmatprep.subr.mxu0 %v201
    %1656 = vmatpush1.msra.mxu0 %v200
    %1657 = vmatprep.subr.mxu0 %v197
    %1658 = vmatpush1.msra.mxu0 %v196
    %1659 = vmatprep.subr.mxu0 %v321
    %1660 = vmatpush2.msra.mxu0 %v320
    %1661 = vmatprep.subr.mxu0 %v317
    %1662 = vmatpush2.msra.mxu0 %v316
    %1663 = vmatprep.subr.mxu0 %v313
    %1664 = vmatpush2.msra.mxu0 %v312
    %1665 = vmatprep.subr.mxu0 %v309
    %1666 = vmatpush2.msra.mxu0 %v308
    %1667 = vmatprep.subr.mxu0 %v305
    %1668 = vmatpush2.msra.mxu0 %v304
    %1669 = vmatprep.subr.mxu0 %v301
    %1670 = vmatpush2.msra.mxu0 %v300
    %1671 = vmatprep.subr.mxu0 %v297
    %1672 = vmatpush2.msra.mxu0 %v296
    %1673 = vmatprep.subr.mxu0 %v293
    %1674 = vmatpush2.msra.mxu0 %v292
    %1675 = vmatprep.subr.mxu0 %v289
    %1676 = vmatpush2.msra.mxu0 %v288
    %1677 = vmatprep.subr.mxu0 %v285
    %1678 = vmatpush2.msra.mxu0 %v284
    %1679 = vmatprep.subr.mxu0 %v281
    %1680 = vmatpush2.msra.mxu0 %v280
    %1681 = vmatprep.subr.mxu0 %v277
    %1682 = vmatpush2.msra.mxu0 %v276
    %1683 = vmatprep.subr.mxu0 %v273
    %1684 = vmatpush2.msra.mxu0 %v272
    %1685 = vmatprep.subr.mxu0 %v269
    %1686 = vmatpush2.msra.mxu0 %v268
    %1687 = vmatprep.subr.mxu0 %v265
    %1688 = vmatpush2.msra.mxu0 %v264
    %1689 = vmatprep.subr.mxu0 %v261
    %1690 = vmatpush2.msra.mxu0 %v260
    %1691 = vmatprep.mubr.f32.mxu0 %v1381
    %1692 = vmatmul.mubr.f32.gmra.mxu0 %v1555
    %v1693 = vpop.f32.mrf.mxu0
    %v1694 = vadd.f32 %v357, %v1693
    %v1695 = vpop.f32.mrf.mxu0
    %v1696 = vadd.f32 %v361, %v1695
    %1697 = vdwg.mxu0
    %v1698 = vxor.u32 %v1623, 2147483648
    %v1699 = vmul.f32 %v1698, 1.442695
    %v1700 = vpow.pop %v1699
    %v1701 = vadd.f32 %v1700, 1.0
    %v1702 = vrcp.pop %v1701
    %v1703 = vmul.f32 1.0, %v1702
    %v1704 = vxor.u32 %v1625, 2147483648
    %v1705 = vmul.f32 %v1704, 1.442695
    %v1706 = vpow.pop %v1705
    %v1707 = vadd.f32 %v1706, 1.0
    %v1708 = vrcp.pop %v1707
    %v1709 = vmul.f32 1.0, %v1708
    %v1710 = vtanh.pop %v1694
    %v1711 = vxor.u32 %v1696, 2147483648
    %v1712 = vmul.f32 %v1711, 1.442695
    %v1713 = vpow.pop %v1712
    %v1714 = vadd.f32 %v1713, 1.0
    %v1715 = vrcp.pop %v1714
    %v1716 = vmul.f32 1.0, %v1715
    %v1717 = vmul.f32 %v1709, %v1379
    %v1718 = vmul.f32 %v1703, %v1710
    %v1719 = vadd.f32 %v1717, %v1718
    %v1720 = vtanh.pop %v1719
    %v1721 = vmul.f32 %v1716, %v1720
    %s1722 = scalar_lea.vmem %s10, 32
    %1723 = vst [vmem:[%s1722] sm:$0xff] %v1721
    %v1724 = vld [vmem:[%s1554] sm:$0xff]
    %1725 = vmatprep.subr.mxu0 %v127
    %1726 = vmatpush1.msra.mxu0 %v126
    %1727 = vmatprep.subr.mxu0 %v123
    %1728 = vmatpush1.msra.mxu0 %v122
    %1729 = vmatprep.subr.mxu0 %v119
    %1730 = vmatpush1.msra.mxu0 %v118
    %1731 = vmatprep.subr.mxu0 %v115
    %1732 = vmatpush1.msra.mxu0 %v114
    %1733 = vmatprep.subr.mxu0 %v111
    %1734 = vmatpush1.msra.mxu0 %v110
    %1735 = vmatprep.subr.mxu0 %v107
    %1736 = vmatpush1.msra.mxu0 %v106
    %1737 = vmatprep.subr.mxu0 %v103
    %1738 = vmatpush1.msra.mxu0 %v102
    %1739 = vmatprep.subr.mxu0 %v99
    %1740 = vmatpush1.msra.mxu0 %v98
    %1741 = vmatprep.subr.mxu0 %v95
    %1742 = vmatpush1.msra.mxu0 %v94
    %1743 = vmatprep.subr.mxu0 %v91
    %1744 = vmatpush1.msra.mxu0 %v90
    %1745 = vmatprep.subr.mxu0 %v87
    %1746 = vmatpush1.msra.mxu0 %v86
    %1747 = vmatprep.subr.mxu0 %v83
    %1748 = vmatpush1.msra.mxu0 %v82
    %1749 = vmatprep.subr.mxu0 %v79
    %1750 = vmatpush1.msra.mxu0 %v78
    %1751 = vmatprep.subr.mxu0 %v75
    %1752 = vmatpush1.msra.mxu0 %v74
    %1753 = vmatprep.subr.mxu0 %v71
    %1754 = vmatpush1.msra.mxu0 %v70
    %1755 = vmatprep.subr.mxu0 %v67
    %1756 = vmatpush1.msra.mxu0 %v66
    %1757 = vmatprep.subr.mxu0 %v191
    %1758 = vmatpush2.msra.mxu0 %v190
    %1759 = vmatprep.subr.mxu0 %v187
    %1760 = vmatpush2.msra.mxu0 %v186
    %1761 = vmatprep.subr.mxu0 %v183
    %1762 = vmatpush2.msra.mxu0 %v182
    %1763 = vmatprep.subr.mxu0 %v179
    %1764 = vmatpush2.msra.mxu0 %v178
    %1765 = vmatprep.subr.mxu0 %v175
    %1766 = vmatpush2.msra.mxu0 %v174
    %1767 = vmatprep.subr.mxu0 %v171
    %1768 = vmatpush2.msra.mxu0 %v170
    %1769 = vmatprep.subr.mxu0 %v167
    %1770 = vmatpush2.msra.mxu0 %v166
    %1771 = vmatprep.subr.mxu0 %v163
    %1772 = vmatpush2.msra.mxu0 %v162
    %1773 = vmatprep.subr.mxu0 %v159
    %1774 = vmatpush2.msra.mxu0 %v158
    %1775 = vmatprep.subr.mxu0 %v155
    %1776 = vmatpush2.msra.mxu0 %v154
    %1777 = vmatprep.subr.mxu0 %v151
    %1778 = vmatpush2.msra.mxu0 %v150
    %1779 = vmatprep.subr.mxu0 %v147
    %1780 = vmatpush2.msra.mxu0 %v146
    %1781 = vmatprep.subr.mxu0 %v143
    %1782 = vmatpush2.msra.mxu0 %v142
    %1783 = vmatprep.subr.mxu0 %v139
    %1784 = vmatpush2.msra.mxu0 %v138
    %1785 = vmatprep.subr.mxu0 %v135
    %1786 = vmatpush2.msra.mxu0 %v134
    %1787 = vmatprep.subr.mxu0 %v131
    %1788 = vmatpush2.msra.mxu0 %v130
    %1789 = vmatprep.mubr.f32.mxu0 %v1551
    %1790 = vmatmul.mubr.f32.gmra.mxu0 %v1724
    %v1791 = vpop.f32.mrf.mxu0
    %v1792 = vadd.f32 %v327, %v1791
    %v1793 = vpop.f32.mrf.mxu0
    %v1794 = vadd.f32 %v331, %v1793
    %1795 = vdwg.mxu0
    %1796 = vmatprep.subr.mxu0 %v129
    %1797 = vmatpush1.msra.mxu0 %v128
    %1798 = vmatprep.subr.mxu0 %v125
    %1799 = vmatpush1.msra.mxu0 %v124
    %1800 = vmatprep.subr.mxu0 %v121
    %1801 = vmatpush1.msra.mxu0 %v120
    %1802 = vmatprep.subr.mxu0 %v117
    %1803 = vmatpush1.msra.mxu0 %v116
    %1804 = vmatprep.subr.mxu0 %v113
    %1805 = vmatpush1.msra.mxu0 %v112
    %1806 = vmatprep.subr.mxu0 %v109
    %1807 = vmatpush1.msra.mxu0 %v108
    %1808 = vmatprep.subr.mxu0 %v105
    %1809 = vmatpush1.msra.mxu0 %v104
    %1810 = vmatprep.subr.mxu0 %v101
    %1811 = vmatpush1.msra.mxu0 %v100
    %1812 = vmatprep.subr.mxu0 %v97
    %1813 = vmatpush1.msra.mxu0 %v96
    %1814 = vmatprep.subr.mxu0 %v93
    %1815 = vmatpush1.msra.mxu0 %v92
    %1816 = vmatprep.subr.mxu0 %v89
    %1817 = vmatpush1.msra.mxu0 %v88
    %1818 = vmatprep.subr.mxu0 %v85
    %1819 = vmatpush1.msra.mxu0 %v84
    %1820 = vmatprep.subr.mxu0 %v81
    %1821 = vmatpush1.msra.mxu0 %v80
    %1822 = vmatprep.subr.mxu0 %v77
    %1823 = vmatpush1.msra.mxu0 %v76
    %1824 = vmatprep.subr.mxu0 %v73
    %1825 = vmatpush1.msra.mxu0 %v72
    %1826 = vmatprep.subr.mxu0 %v69
    %1827 = vmatpush1.msra.mxu0 %v68
    %1828 = vmatprep.subr.mxu0 %v193
    %1829 = vmatpush2.msra.mxu0 %v192
    %1830 = vmatprep.subr.mxu0 %v189
    %1831 = vmatpush2.msra.mxu0 %v188
    %1832 = vmatprep.subr.mxu0 %v185
    %1833 = vmatpush2.msra.mxu0 %v184
    %1834 = vmatprep.subr.mxu0 %v181
    %1835 = vmatpush2.msra.mxu0 %v180
    %1836 = vmatprep.subr.mxu0 %v177
    %1837 = vmatpush2.msra.mxu0 %v176
    %1838 = vmatprep.subr.mxu0 %v173
    %1839 = vmatpush2.msra.mxu0 %v172
    %1840 = vmatprep.subr.mxu0 %v169
    %1841 = vmatpush2.msra.mxu0 %v168
    %1842 = vmatprep.subr.mxu0 %v165
    %1843 = vmatpush2.msra.mxu0 %v164
    %1844 = vmatprep.subr.mxu0 %v161
    %1845 = vmatpush2.msra.mxu0 %v160
    %1846 = vmatprep.subr.mxu0 %v157
    %1847 = vmatpush2.msra.mxu0 %v156
    %1848 = vmatprep.subr.mxu0 %v153
    %1849 = vmatpush2.msra.mxu0 %v152
    %1850 = vmatprep.subr.mxu0 %v149
    %1851 = vmatpush2.msra.mxu0 %v148
    %1852 = vmatprep.subr.mxu0 %v145
    %1853 = vmatpush2.msra.mxu0 %v144
    %1854 = vmatprep.subr.mxu0 %v141
    %1855 = vmatpush2.msra.mxu0 %v140
    %1856 = vmatprep.subr.mxu0 %v137
    %1857 = vmatpush2.msra.mxu0 %v136
    %1858 = vmatprep.subr.mxu0 %v133
    %1859 = vmatpush2.msra.mxu0 %v132
    %1860 = vmatprep.mubr.f32.mxu0 %v1551
    %1861 = vmatmul.mubr.f32.gmra.mxu0 %v1724
    %v1862 = vpop.f32.mrf.mxu0
    %v1863 = vadd.f32 %v335, %v1862
    %v1864 = vpop.f32.mrf.mxu0
    %v1865 = vadd.f32 %v339, %v1864
    %1866 = vdwg.mxu0
    %v1867 = vxor.u32 %v1792, 2147483648
    %v1868 = vmul.f32 %v1867, 1.442695
    %v1869 = vpow.pop %v1868
    %v1870 = vadd.f32 %v1869, 1.0
    %v1871 = vrcp.pop %v1870
    %v1872 = vmul.f32 1.0, %v1871
    %v1873 = vxor.u32 %v1794, 2147483648
    %v1874 = vmul.f32 %v1873, 1.442695
    %v1875 = vpow.pop %v1874
    %v1876 = vadd.f32 %v1875, 1.0
    %v1877 = vrcp.pop %v1876
    %v1878 = vmul.f32 1.0, %v1877
    %v1879 = vtanh.pop %v1863
    %v1880 = vxor.u32 %v1865, 2147483648
    %v1881 = vmul.f32 %v1880, 1.442695
    %v1882 = vpow.pop %v1881
    %v1883 = vadd.f32 %v1882, 1.0
    %v1884 = vrcp.pop %v1883
    %v1885 = vmul.f32 1.0, %v1884
    %v1886 = vmul.f32 %v1878, %v1549
    %v1887 = vmul.f32 %v1872, %v1879
    %v1888 = vadd.f32 %v1886, %v1887
    %v1889 = vtanh.pop %v1888
    %v1890 = vmul.f32 %v1885, %v1889
    %s1891 = scalar_lea.vmem %s9, 32
    %1892 = vst [vmem:[%s1891] sm:$0xff] %v1890
    %v1893 = vld [vmem:[%s1384] sm:$0xff]
    %1894 = vmatprep.subr.mxu0 %v255
    %1895 = vmatpush1.msra.mxu0 %v254
    %1896 = vmatprep.subr.mxu0 %v251
    %1897 = vmatpush1.msra.mxu0 %v250
    %1898 = vmatprep.subr.mxu0 %v247
    %1899 = vmatpush1.msra.mxu0 %v246
    %1900 = vmatprep.subr.mxu0 %v243
    %1901 = vmatpush1.msra.mxu0 %v242
    %1902 = vmatprep.subr.mxu0 %v239
    %1903 = vmatpush1.msra.mxu0 %v238
    %1904 = vmatprep.subr.mxu0 %v235
    %1905 = vmatpush1.msra.mxu0 %v234
    %1906 = vmatprep.subr.mxu0 %v231
    %1907 = vmatpush1.msra.mxu0 %v230
    %1908 = vmatprep.subr.mxu0 %v227
    %1909 = vmatpush1.msra.mxu0 %v226
    %1910 = vmatprep.subr.mxu0 %v223
    %1911 = vmatpush1.msra.mxu0 %v222
    %1912 = vmatprep.subr.mxu0 %v219
    %1913 = vmatpush1.msra.mxu0 %v218
    %1914 = vmatprep.subr.mxu0 %v215
    %1915 = vmatpush1.msra.mxu0 %v214
    %1916 = vmatprep.subr.mxu0 %v211
    %1917 = vmatpush1.msra.mxu0 %v210
    %1918 = vmatprep.subr.mxu0 %v207
    %1919 = vmatpush1.msra.mxu0 %v206
    %1920 = vmatprep.subr.mxu0 %v203
    %1921 = vmatpush1.msra.mxu0 %v202
    %1922 = vmatprep.subr.mxu0 %v199
    %1923 = vmatpush1.msra.mxu0 %v198
    %1924 = vmatprep.subr.mxu0 %v195
    %1925 = vmatpush1.msra.mxu0 %v194
    %1926 = vmatprep.subr.mxu0 %v319
    %1927 = vmatpush2.msra.mxu0 %v318
    %1928 = vmatprep.subr.mxu0 %v315
    %1929 = vmatpush2.msra.mxu0 %v314
    %1930 = vmatprep.subr.mxu0 %v311
    %1931 = vmatpush2.msra.mxu0 %v310
    %1932 = vmatprep.subr.mxu0 %v307
    %1933 = vmatpush2.msra.mxu0 %v306
    %1934 = vmatprep.subr.mxu0 %v303
    %1935 = vmatpush2.msra.mxu0 %v302
    %1936 = vmatprep.subr.mxu0 %v299
    %1937 = vmatpush2.msra.mxu0 %v298
    %1938 = vmatprep.subr.mxu0 %v295
    %1939 = vmatpush2.msra.mxu0 %v294
    %1940 = vmatprep.subr.mxu0 %v291
    %1941 = vmatpush2.msra.mxu0 %v290
    %1942 = vmatprep.subr.mxu0 %v287
    %1943 = vmatpush2.msra.mxu0 %v286
    %1944 = vmatprep.subr.mxu0 %v283
    %1945 = vmatpush2.msra.mxu0 %v282
    %1946 = vmatprep.subr.mxu0 %v279
    %1947 = vmatpush2.msra.mxu0 %v278
    %1948 = vmatprep.subr.mxu0 %v275
    %1949 = vmatpush2.msra.mxu0 %v274
    %1950 = vmatprep.subr.mxu0 %v271
    %1951 = vmatpush2.msra.mxu0 %v270
    %1952 = vmatprep.subr.mxu0 %v267
    %1953 = vmatpush2.msra.mxu0 %v266
    %1954 = vmatprep.subr.mxu0 %v263
    %1955 = vmatpush2.msra.mxu0 %v262
    %1956 = vmatprep.subr.mxu0 %v259
    %1957 = vmatpush2.msra.mxu0 %v258
    %1958 = vmatprep.mubr.f32.mxu0 %v1721
    %1959 = vmatmul.mubr.f32.gmra.mxu0 %v1893
    %v1960 = vpop.f32.mrf.mxu0
    %v1961 = vadd.f32 %v349, %v1960
    %v1962 = vpop.f32.mrf.mxu0
    %v1963 = vadd.f32 %v353, %v1962
    %1964 = vdwg.mxu0
    %1965 = vmatprep.subr.mxu0 %v257
    %1966 = vmatpush1.msra.mxu0 %v256
    %1967 = vmatprep.subr.mxu0 %v253
    %1968 = vmatpush1.msra.mxu0 %v252
    %1969 = vmatprep.subr.mxu0 %v249
    %1970 = vmatpush1.msra.mxu0 %v248
    %1971 = vmatprep.subr.mxu0 %v245
    %1972 = vmatpush1.msra.mxu0 %v244
    %1973 = vmatprep.subr.mxu0 %v241
    %1974 = vmatpush1.msra.mxu0 %v240
    %1975 = vmatprep.subr.mxu0 %v237
    %1976 = vmatpush1.msra.mxu0 %v236
    %1977 = vmatprep.subr.mxu0 %v233
    %1978 = vmatpush1.msra.mxu0 %v232
    %1979 = vmatprep.subr.mxu0 %v229
    %1980 = vmatpush1.msra.mxu0 %v228
    %1981 = vmatprep.subr.mxu0 %v225
    %1982 = vmatpush1.msra.mxu0 %v224
    %1983 = vmatprep.subr.mxu0 %v221
    %1984 = vmatpush1.msra.mxu0 %v220
    %1985 = vmatprep.subr.mxu0 %v217
    %1986 = vmatpush1.msra.mxu0 %v216
    %1987 = vmatprep.subr.mxu0 %v213
    %1988 = vmatpush1.msra.mxu0 %v212
    %1989 = vmatprep.subr.mxu0 %v209
    %1990 = vmatpush1.msra.mxu0 %v208
    %1991 = vmatprep.subr.mxu0 %v205
    %1992 = vmatpush1.msra.mxu0 %v204
    %1993 = vmatprep.subr.mxu0 %v201
    %1994 = vmatpush1.msra.mxu0 %v200
    %1995 = vmatprep.subr.mxu0 %v197
    %1996 = vmatpush1.msra.mxu0 %v196
    %1997 = vmatprep.subr.mxu0 %v321
    %1998 = vmatpush2.msra.mxu0 %v320
    %1999 = vmatprep.subr.mxu0 %v317
    %2000 = vmatpush2.msra.mxu0 %v316
    %2001 = vmatprep.subr.mxu0 %v313
    %2002 = vmatpush2.msra.mxu0 %v312
    %2003 = vmatprep.subr.mxu0 %v309
    %2004 = vmatpush2.msra.mxu0 %v308
    %2005 = vmatprep.subr.mxu0 %v305
    %2006 = vmatpush2.msra.mxu0 %v304
    %2007 = vmatprep.subr.mxu0 %v301
    %2008 = vmatpush2.msra.mxu0 %v300
    %2009 = vmatprep.subr.mxu0 %v297
    %2010 = vmatpush2.msra.mxu0 %v296
    %2011 = vmatprep.subr.mxu0 %v293
    %2012 = vmatpush2.msra.mxu0 %v292
    %2013 = vmatprep.subr.mxu0 %v289
    %2014 = vmatpush2.msra.mxu0 %v288
    %2015 = vmatprep.subr.mxu0 %v285
    %2016 = vmatpush2.msra.mxu0 %v284
    %2017 = vmatprep.subr.mxu0 %v281
    %2018 = vmatpush2.msra.mxu0 %v280
    %2019 = vmatprep.subr.mxu0 %v277
    %2020 = vmatpush2.msra.mxu0 %v276
    %2021 = vmatprep.subr.mxu0 %v273
    %2022 = vmatpush2.msra.mxu0 %v272
    %2023 = vmatprep.subr.mxu0 %v269
    %2024 = vmatpush2.msra.mxu0 %v268
    %2025 = vmatprep.subr.mxu0 %v265
    %2026 = vmatpush2.msra.mxu0 %v264
    %2027 = vmatprep.subr.mxu0 %v261
    %2028 = vmatpush2.msra.mxu0 %v260
    %2029 = vmatprep.mubr.f32.mxu0 %v1721
    %2030 = vmatmul.mubr.f32.gmra.mxu0 %v1893
    %v2031 = vpop.f32.mrf.mxu0
    %v2032 = vadd.f32 %v357, %v2031
    %v2033 = vpop.f32.mrf.mxu0
    %v2034 = vadd.f32 %v361, %v2033
    %2035 = vdwg.mxu0
    %v2036 = vxor.u32 %v1961, 2147483648
    %v2037 = vmul.f32 %v2036, 1.442695
    %v2038 = vpow.pop %v2037
    %v2039 = vadd.f32 %v2038, 1.0
    %v2040 = vrcp.pop %v2039
    %v2041 = vmul.f32 1.0, %v2040
    %v2042 = vxor.u32 %v1963, 2147483648
    %v2043 = vmul.f32 %v2042, 1.442695
    %v2044 = vpow.pop %v2043
    %v2045 = vadd.f32 %v2044, 1.0
    %v2046 = vrcp.pop %v2045
    %v2047 = vmul.f32 1.0, %v2046
    %v2048 = vtanh.pop %v2032
    %v2049 = vxor.u32 %v2034, 2147483648
    %v2050 = vmul.f32 %v2049, 1.442695
    %v2051 = vpow.pop %v2050
    %v2052 = vadd.f32 %v2051, 1.0
    %v2053 = vrcp.pop %v2052
    %v2054 = vmul.f32 1.0, %v2053
    %v2055 = vmul.f32 %v2047, %v1719
    %v2056 = vmul.f32 %v2041, %v2048
    %v2057 = vadd.f32 %v2055, %v2056
    %v2058 = vtanh.pop %v2057
    %v2059 = vmul.f32 %v2054, %v2058
    %s2060 = scalar_lea.vmem %s10, 24
    %2061 = vst [vmem:[%s2060] sm:$0xff] %v2059
    %v2062 = vld [vmem:[%s1214] sm:$0xff]
    %2063 = vmatprep.subr.mxu0 %v127
    %2064 = vmatpush1.msra.mxu0 %v126
    %2065 = vmatprep.subr.mxu0 %v123
    %2066 = vmatpush1.msra.mxu0 %v122
    %2067 = vmatprep.subr.mxu0 %v119
    %2068 = vmatpush1.msra.mxu0 %v118
    %2069 = vmatprep.subr.mxu0 %v115
    %2070 = vmatpush1.msra.mxu0 %v114
    %2071 = vmatprep.subr.mxu0 %v111
    %2072 = vmatpush1.msra.mxu0 %v110
    %2073 = vmatprep.subr.mxu0 %v107
    %2074 = vmatpush1.msra.mxu0 %v106
    %2075 = vmatprep.subr.mxu0 %v103
    %2076 = vmatpush1.msra.mxu0 %v102
    %2077 = vmatprep.subr.mxu0 %v99
    %2078 = vmatpush1.msra.mxu0 %v98
    %2079 = vmatprep.subr.mxu0 %v95
    %2080 = vmatpush1.msra.mxu0 %v94
    %2081 = vmatprep.subr.mxu0 %v91
    %2082 = vmatpush1.msra.mxu0 %v90
    %2083 = vmatprep.subr.mxu0 %v87
    %2084 = vmatpush1.msra.mxu0 %v86
    %2085 = vmatprep.subr.mxu0 %v83
    %2086 = vmatpush1.msra.mxu0 %v82
    %2087 = vmatprep.subr.mxu0 %v79
    %2088 = vmatpush1.msra.mxu0 %v78
    %2089 = vmatprep.subr.mxu0 %v75
    %2090 = vmatpush1.msra.mxu0 %v74
    %2091 = vmatprep.subr.mxu0 %v71
    %2092 = vmatpush1.msra.mxu0 %v70
    %2093 = vmatprep.subr.mxu0 %v67
    %2094 = vmatpush1.msra.mxu0 %v66
    %2095 = vmatprep.subr.mxu0 %v191
    %2096 = vmatpush2.msra.mxu0 %v190
    %2097 = vmatprep.subr.mxu0 %v187
    %2098 = vmatpush2.msra.mxu0 %v186
    %2099 = vmatprep.subr.mxu0 %v183
    %2100 = vmatpush2.msra.mxu0 %v182
    %2101 = vmatprep.subr.mxu0 %v179
    %2102 = vmatpush2.msra.mxu0 %v178
    %2103 = vmatprep.subr.mxu0 %v175
    %2104 = vmatpush2.msra.mxu0 %v174
    %2105 = vmatprep.subr.mxu0 %v171
    %2106 = vmatpush2.msra.mxu0 %v170
    %2107 = vmatprep.subr.mxu0 %v167
    %2108 = vmatpush2.msra.mxu0 %v166
    %2109 = vmatprep.subr.mxu0 %v163
    %2110 = vmatpush2.msra.mxu0 %v162
    %2111 = vmatprep.subr.mxu0 %v159
    %2112 = vmatpush2.msra.mxu0 %v158
    %2113 = vmatprep.subr.mxu0 %v155
    %2114 = vmatpush2.msra.mxu0 %v154
    %2115 = vmatprep.subr.mxu0 %v151
    %2116 = vmatpush2.msra.mxu0 %v150
    %2117 = vmatprep.subr.mxu0 %v147
    %2118 = vmatpush2.msra.mxu0 %v146
    %2119 = vmatprep.subr.mxu0 %v143
    %2120 = vmatpush2.msra.mxu0 %v142
    %2121 = vmatprep.subr.mxu0 %v139
    %2122 = vmatpush2.msra.mxu0 %v138
    %2123 = vmatprep.subr.mxu0 %v135
    %2124 = vmatpush2.msra.mxu0 %v134
    %2125 = vmatprep.subr.mxu0 %v131
    %2126 = vmatpush2.msra.mxu0 %v130
    %2127 = vmatprep.mubr.f32.mxu0 %v1890
    %2128 = vmatmul.mubr.f32.gmra.mxu0 %v2062
    %v2129 = vpop.f32.mrf.mxu0
    %v2130 = vadd.f32 %v327, %v2129
    %v2131 = vpop.f32.mrf.mxu0
    %v2132 = vadd.f32 %v331, %v2131
    %2133 = vdwg.mxu0
    %2134 = vmatprep.subr.mxu0 %v129
    %2135 = vmatpush1.msra.mxu0 %v128
    %2136 = vmatprep.subr.mxu0 %v125
    %2137 = vmatpush1.msra.mxu0 %v124
    %2138 = vmatprep.subr.mxu0 %v121
    %2139 = vmatpush1.msra.mxu0 %v120
    %2140 = vmatprep.subr.mxu0 %v117
    %2141 = vmatpush1.msra.mxu0 %v116
    %2142 = vmatprep.subr.mxu0 %v113
    %2143 = vmatpush1.msra.mxu0 %v112
    %2144 = vmatprep.subr.mxu0 %v109
    %2145 = vmatpush1.msra.mxu0 %v108
    %2146 = vmatprep.subr.mxu0 %v105
    %2147 = vmatpush1.msra.mxu0 %v104
    %2148 = vmatprep.subr.mxu0 %v101
    %2149 = vmatpush1.msra.mxu0 %v100
    %2150 = vmatprep.subr.mxu0 %v97
    %2151 = vmatpush1.msra.mxu0 %v96
    %2152 = vmatprep.subr.mxu0 %v93
    %2153 = vmatpush1.msra.mxu0 %v92
    %2154 = vmatprep.subr.mxu0 %v89
    %2155 = vmatpush1.msra.mxu0 %v88
    %2156 = vmatprep.subr.mxu0 %v85
    %2157 = vmatpush1.msra.mxu0 %v84
    %2158 = vmatprep.subr.mxu0 %v81
    %2159 = vmatpush1.msra.mxu0 %v80
    %2160 = vmatprep.subr.mxu0 %v77
    %2161 = vmatpush1.msra.mxu0 %v76
    %2162 = vmatprep.subr.mxu0 %v73
    %2163 = vmatpush1.msra.mxu0 %v72
    %2164 = vmatprep.subr.mxu0 %v69
    %2165 = vmatpush1.msra.mxu0 %v68
    %2166 = vmatprep.subr.mxu0 %v193
    %2167 = vmatpush2.msra.mxu0 %v192
    %2168 = vmatprep.subr.mxu0 %v189
    %2169 = vmatpush2.msra.mxu0 %v188
    %2170 = vmatprep.subr.mxu0 %v185
    %2171 = vmatpush2.msra.mxu0 %v184
    %2172 = vmatprep.subr.mxu0 %v181
    %2173 = vmatpush2.msra.mxu0 %v180
    %2174 = vmatprep.subr.mxu0 %v177
    %2175 = vmatpush2.msra.mxu0 %v176
    %2176 = vmatprep.subr.mxu0 %v173
    %2177 = vmatpush2.msra.mxu0 %v172
    %2178 = vmatprep.subr.mxu0 %v169
    %2179 = vmatpush2.msra.mxu0 %v168
    %2180 = vmatprep.subr.mxu0 %v165
    %2181 = vmatpush2.msra.mxu0 %v164
    %2182 = vmatprep.subr.mxu0 %v161
    %2183 = vmatpush2.msra.mxu0 %v160
    %2184 = vmatprep.subr.mxu0 %v157
    %2185 = vmatpush2.msra.mxu0 %v156
    %2186 = vmatprep.subr.mxu0 %v153
    %2187 = vmatpush2.msra.mxu0 %v152
    %2188 = vmatprep.subr.mxu0 %v149
    %2189 = vmatpush2.msra.mxu0 %v148
    %2190 = vmatprep.subr.mxu0 %v145
    %2191 = vmatpush2.msra.mxu0 %v144
    %2192 = vmatprep.subr.mxu0 %v141
    %2193 = vmatpush2.msra.mxu0 %v140
    %2194 = vmatprep.subr.mxu0 %v137
    %2195 = vmatpush2.msra.mxu0 %v136
    %2196 = vmatprep.subr.mxu0 %v133
    %2197 = vmatpush2.msra.mxu0 %v132
    %2198 = vmatprep.mubr.f32.mxu0 %v1890
    %2199 = vmatmul.mubr.f32.gmra.mxu0 %v2062
    %v2200 = vpop.f32.mrf.mxu0
    %v2201 = vadd.f32 %v335, %v2200
    %v2202 = vpop.f32.mrf.mxu0
    %v2203 = vadd.f32 %v339, %v2202
    %2204 = vdwg.mxu0
    %v2205 = vxor.u32 %v2130, 2147483648
    %v2206 = vmul.f32 %v2205, 1.442695
    %v2207 = vpow.pop %v2206
    %v2208 = vadd.f32 %v2207, 1.0
    %v2209 = vrcp.pop %v2208
    %v2210 = vmul.f32 1.0, %v2209
    %v2211 = vxor.u32 %v2132, 2147483648
    %v2212 = vmul.f32 %v2211, 1.442695
    %v2213 = vpow.pop %v2212
    %v2214 = vadd.f32 %v2213, 1.0
    %v2215 = vrcp.pop %v2214
    %v2216 = vmul.f32 1.0, %v2215
    %v2217 = vtanh.pop %v2201
    %v2218 = vxor.u32 %v2203, 2147483648
    %v2219 = vmul.f32 %v2218, 1.442695
    %v2220 = vpow.pop %v2219
    %v2221 = vadd.f32 %v2220, 1.0
    %v2222 = vrcp.pop %v2221
    %v2223 = vmul.f32 1.0, %v2222
    %v2224 = vmul.f32 %v2216, %v1888
    %v2225 = vmul.f32 %v2210, %v2217
    %v2226 = vadd.f32 %v2224, %v2225
    %v2227 = vtanh.pop %v2226
    %v2228 = vmul.f32 %v2223, %v2227
    %s2229 = scalar_lea.vmem %s9, 40
    %2230 = vst [vmem:[%s2229] sm:$0xff] %v2228
    %v2231 = vld [vmem:[%s1044] sm:$0xff]
    %2232 = vmatprep.subr.mxu0 %v255
    %2233 = vmatpush1.msra.mxu0 %v254
    %2234 = vmatprep.subr.mxu0 %v251
    %2235 = vmatpush1.msra.mxu0 %v250
    %2236 = vmatprep.subr.mxu0 %v247
    %2237 = vmatpush1.msra.mxu0 %v246
    %2238 = vmatprep.subr.mxu0 %v243
    %2239 = vmatpush1.msra.mxu0 %v242
    %2240 = vmatprep.subr.mxu0 %v239
    %2241 = vmatpush1.msra.mxu0 %v238
    %2242 = vmatprep.subr.mxu0 %v235
    %2243 = vmatpush1.msra.mxu0 %v234
    %2244 = vmatprep.subr.mxu0 %v231
    %2245 = vmatpush1.msra.mxu0 %v230
    %2246 = vmatprep.subr.mxu0 %v227
    %2247 = vmatpush1.msra.mxu0 %v226
    %2248 = vmatprep.subr.mxu0 %v223
    %2249 = vmatpush1.msra.mxu0 %v222
    %2250 = vmatprep.subr.mxu0 %v219
    %2251 = vmatpush1.msra.mxu0 %v218
    %2252 = vmatprep.subr.mxu0 %v215
    %2253 = vmatpush1.msra.mxu0 %v214
    %2254 = vmatprep.subr.mxu0 %v211
    %2255 = vmatpush1.msra.mxu0 %v210
    %2256 = vmatprep.subr.mxu0 %v207
    %2257 = vmatpush1.msra.mxu0 %v206
    %2258 = vmatprep.subr.mxu0 %v203
    %2259 = vmatpush1.msra.mxu0 %v202
    %2260 = vmatprep.subr.mxu0 %v199
    %2261 = vmatpush1.msra.mxu0 %v198
    %2262 = vmatprep.subr.mxu0 %v195
    %2263 = vmatpush1.msra.mxu0 %v194
    %2264 = vmatprep.subr.mxu0 %v319
    %2265 = vmatpush2.msra.mxu0 %v318
    %2266 = vmatprep.subr.mxu0 %v315
    %2267 = vmatpush2.msra.mxu0 %v314
    %2268 = vmatprep.subr.mxu0 %v311
    %2269 = vmatpush2.msra.mxu0 %v310
    %2270 = vmatprep.subr.mxu0 %v307
    %2271 = vmatpush2.msra.mxu0 %v306
    %2272 = vmatprep.subr.mxu0 %v303
    %2273 = vmatpush2.msra.mxu0 %v302
    %2274 = vmatprep.subr.mxu0 %v299
    %2275 = vmatpush2.msra.mxu0 %v298
    %2276 = vmatprep.subr.mxu0 %v295
    %2277 = vmatpush2.msra.mxu0 %v294
    %2278 = vmatprep.subr.mxu0 %v291
    %2279 = vmatpush2.msra.mxu0 %v290
    %2280 = vmatprep.subr.mxu0 %v287
    %2281 = vmatpush2.msra.mxu0 %v286
    %2282 = vmatprep.subr.mxu0 %v283
    %2283 = vmatpush2.msra.mxu0 %v282
    %2284 = vmatprep.subr.mxu0 %v279
    %2285 = vmatpush2.msra.mxu0 %v278
    %2286 = vmatprep.subr.mxu0 %v275
    %2287 = vmatpush2.msra.mxu0 %v274
    %2288 = vmatprep.subr.mxu0 %v271
    %2289 = vmatpush2.msra.mxu0 %v270
    %2290 = vmatprep.subr.mxu0 %v267
    %2291 = vmatpush2.msra.mxu0 %v266
    %2292 = vmatprep.subr.mxu0 %v263
    %2293 = vmatpush2.msra.mxu0 %v262
    %2294 = vmatprep.subr.mxu0 %v259
    %2295 = vmatpush2.msra.mxu0 %v258
    %2296 = vmatprep.mubr.f32.mxu0 %v2059
    %2297 = vmatmul.mubr.f32.gmra.mxu0 %v2231
    %v2298 = vpop.f32.mrf.mxu0
    %v2299 = vadd.f32 %v349, %v2298
    %v2300 = vpop.f32.mrf.mxu0
    %v2301 = vadd.f32 %v353, %v2300
    %2302 = vdwg.mxu0
    %2303 = vmatprep.subr.mxu0 %v257
    %2304 = vmatpush1.msra.mxu0 %v256
    %2305 = vmatprep.subr.mxu0 %v253
    %2306 = vmatpush1.msra.mxu0 %v252
    %2307 = vmatprep.subr.mxu0 %v249
    %2308 = vmatpush1.msra.mxu0 %v248
    %2309 = vmatprep.subr.mxu0 %v245
    %2310 = vmatpush1.msra.mxu0 %v244
    %2311 = vmatprep.subr.mxu0 %v241
    %2312 = vmatpush1.msra.mxu0 %v240
    %2313 = vmatprep.subr.mxu0 %v237
    %2314 = vmatpush1.msra.mxu0 %v236
    %2315 = vmatprep.subr.mxu0 %v233
    %2316 = vmatpush1.msra.mxu0 %v232
    %2317 = vmatprep.subr.mxu0 %v229
    %2318 = vmatpush1.msra.mxu0 %v228
    %2319 = vmatprep.subr.mxu0 %v225
    %2320 = vmatpush1.msra.mxu0 %v224
    %2321 = vmatprep.subr.mxu0 %v221
    %2322 = vmatpush1.msra.mxu0 %v220
    %2323 = vmatprep.subr.mxu0 %v217
    %2324 = vmatpush1.msra.mxu0 %v216
    %2325 = vmatprep.subr.mxu0 %v213
    %2326 = vmatpush1.msra.mxu0 %v212
    %2327 = vmatprep.subr.mxu0 %v209
    %2328 = vmatpush1.msra.mxu0 %v208
    %2329 = vmatprep.subr.mxu0 %v205
    %2330 = vmatpush1.msra.mxu0 %v204
    %2331 = vmatprep.subr.mxu0 %v201
    %2332 = vmatpush1.msra.mxu0 %v200
    %2333 = vmatprep.subr.mxu0 %v197
    %2334 = vmatpush1.msra.mxu0 %v196
    %2335 = vmatprep.subr.mxu0 %v321
    %2336 = vmatpush2.msra.mxu0 %v320
    %2337 = vmatprep.subr.mxu0 %v317
    %2338 = vmatpush2.msra.mxu0 %v316
    %2339 = vmatprep.subr.mxu0 %v313
    %2340 = vmatpush2.msra.mxu0 %v312
    %2341 = vmatprep.subr.mxu0 %v309
    %2342 = vmatpush2.msra.mxu0 %v308
    %2343 = vmatprep.subr.mxu0 %v305
    %2344 = vmatpush2.msra.mxu0 %v304
    %2345 = vmatprep.subr.mxu0 %v301
    %2346 = vmatpush2.msra.mxu0 %v300
    %2347 = vmatprep.subr.mxu0 %v297
    %2348 = vmatpush2.msra.mxu0 %v296
    %2349 = vmatprep.subr.mxu0 %v293
    %2350 = vmatpush2.msra.mxu0 %v292
    %2351 = vmatprep.subr.mxu0 %v289
    %2352 = vmatpush2.msra.mxu0 %v288
    %2353 = vmatprep.subr.mxu0 %v285
    %2354 = vmatpush2.msra.mxu0 %v284
    %2355 = vmatprep.subr.mxu0 %v281
    %2356 = vmatpush2.msra.mxu0 %v280
    %2357 = vmatprep.subr.mxu0 %v277
    %2358 = vmatpush2.msra.mxu0 %v276
    %2359 = vmatprep.subr.mxu0 %v273
    %2360 = vmatpush2.msra.mxu0 %v272
    %2361 = vmatprep.subr.mxu0 %v269
    %2362 = vmatpush2.msra.mxu0 %v268
    %2363 = vmatprep.subr.mxu0 %v265
    %2364 = vmatpush2.msra.mxu0 %v264
    %2365 = vmatprep.subr.mxu0 %v261
    %2366 = vmatpush2.msra.mxu0 %v260
    %2367 = vmatprep.mubr.f32.mxu0 %v2059
    %2368 = vmatmul.mubr.f32.gmra.mxu0 %v2231
    %v2369 = vpop.f32.mrf.mxu0
    %v2370 = vadd.f32 %v357, %v2369
    %v2371 = vpop.f32.mrf.mxu0
    %v2372 = vadd.f32 %v361, %v2371
    %2373 = vdwg.mxu0
    %v2374 = vxor.u32 %v2299, 2147483648
    %v2375 = vmul.f32 %v2374, 1.442695
    %v2376 = vpow.pop %v2375
    %v2377 = vadd.f32 %v2376, 1.0
    %v2378 = vrcp.pop %v2377
    %v2379 = vmul.f32 1.0, %v2378
    %v2380 = vxor.u32 %v2301, 2147483648
    %v2381 = vmul.f32 %v2380, 1.442695
    %v2382 = vpow.pop %v2381
    %v2383 = vadd.f32 %v2382, 1.0
    %v2384 = vrcp.pop %v2383
    %v2385 = vmul.f32 1.0, %v2384
    %v2386 = vtanh.pop %v2370
    %v2387 = vxor.u32 %v2372, 2147483648
    %v2388 = vmul.f32 %v2387, 1.442695
    %v2389 = vpow.pop %v2388
    %v2390 = vadd.f32 %v2389, 1.0
    %v2391 = vrcp.pop %v2390
    %v2392 = vmul.f32 1.0, %v2391
    %v2393 = vmul.f32 %v2385, %v2057
    %v2394 = vmul.f32 %v2379, %v2386
    %v2395 = vadd.f32 %v2393, %v2394
    %v2396 = vtanh.pop %v2395
    %v2397 = vmul.f32 %v2392, %v2396
    %s2398 = scalar_lea.vmem %s10, 16
    %2399 = vst [vmem:[%s2398] sm:$0xff] %v2397
    %v2400 = vld [vmem:[%s874] sm:$0xff]
    %2401 = vmatprep.subr.mxu0 %v127
    %2402 = vmatpush1.msra.mxu0 %v126
    %2403 = vmatprep.subr.mxu0 %v123
    %2404 = vmatpush1.msra.mxu0 %v122
    %2405 = vmatprep.subr.mxu0 %v119
    %2406 = vmatpush1.msra.mxu0 %v118
    %2407 = vmatprep.subr.mxu0 %v115
    %2408 = vmatpush1.msra.mxu0 %v114
    %2409 = vmatprep.subr.mxu0 %v111
    %2410 = vmatpush1.msra.mxu0 %v110
    %2411 = vmatprep.subr.mxu0 %v107
    %2412 = vmatpush1.msra.mxu0 %v106
    %2413 = vmatprep.subr.mxu0 %v103
    %2414 = vmatpush1.msra.mxu0 %v102
    %2415 = vmatprep.subr.mxu0 %v99
    %2416 = vmatpush1.msra.mxu0 %v98
    %2417 = vmatprep.subr.mxu0 %v95
    %2418 = vmatpush1.msra.mxu0 %v94
    %2419 = vmatprep.subr.mxu0 %v91
    %2420 = vmatpush1.msra.mxu0 %v90
    %2421 = vmatprep.subr.mxu0 %v87
    %2422 = vmatpush1.msra.mxu0 %v86
    %2423 = vmatprep.subr.mxu0 %v83
    %2424 = vmatpush1.msra.mxu0 %v82
    %2425 = vmatprep.subr.mxu0 %v79
    %2426 = vmatpush1.msra.mxu0 %v78
    %2427 = vmatprep.subr.mxu0 %v75
    %2428 = vmatpush1.msra.mxu0 %v74
    %2429 = vmatprep.subr.mxu0 %v71
    %2430 = vmatpush1.msra.mxu0 %v70
    %2431 = vmatprep.subr.mxu0 %v67
    %2432 = vmatpush1.msra.mxu0 %v66
    %2433 = vmatprep.subr.mxu0 %v191
    %2434 = vmatpush2.msra.mxu0 %v190
    %2435 = vmatprep.subr.mxu0 %v187
    %2436 = vmatpush2.msra.mxu0 %v186
    %2437 = vmatprep.subr.mxu0 %v183
    %2438 = vmatpush2.msra.mxu0 %v182
    %2439 = vmatprep.subr.mxu0 %v179
    %2440 = vmatpush2.msra.mxu0 %v178
    %2441 = vmatprep.subr.mxu0 %v175
    %2442 = vmatpush2.msra.mxu0 %v174
    %2443 = vmatprep.subr.mxu0 %v171
    %2444 = vmatpush2.msra.mxu0 %v170
    %2445 = vmatprep.subr.mxu0 %v167
    %2446 = vmatpush2.msra.mxu0 %v166
    %2447 = vmatprep.subr.mxu0 %v163
    %2448 = vmatpush2.msra.mxu0 %v162
    %2449 = vmatprep.subr.mxu0 %v159
    %2450 = vmatpush2.msra.mxu0 %v158
    %2451 = vmatprep.subr.mxu0 %v155
    %2452 = vmatpush2.msra.mxu0 %v154
    %2453 = vmatprep.subr.mxu0 %v151
    %2454 = vmatpush2.msra.mxu0 %v150
    %2455 = vmatprep.subr.mxu0 %v147
    %2456 = vmatpush2.msra.mxu0 %v146
    %2457 = vmatprep.subr.mxu0 %v143
    %2458 = vmatpush2.msra.mxu0 %v142
    %2459 = vmatprep.subr.mxu0 %v139
    %2460 = vmatpush2.msra.mxu0 %v138
    %2461 = vmatprep.subr.mxu0 %v135
    %2462 = vmatpush2.msra.mxu0 %v134
    %2463 = vmatprep.subr.mxu0 %v131
    %2464 = vmatpush2.msra.mxu0 %v130
    %2465 = vmatprep.mubr.f32.mxu0 %v2228
    %2466 = vmatmul.mubr.f32.gmra.mxu0 %v2400
    %v2467 = vpop.f32.mrf.mxu0
    %v2468 = vadd.f32 %v327, %v2467
    %v2469 = vpop.f32.mrf.mxu0
    %v2470 = vadd.f32 %v331, %v2469
    %2471 = vdwg.mxu0
    %2472 = vmatprep.subr.mxu0 %v129
    %2473 = vmatpush1.msra.mxu0 %v128
    %2474 = vmatprep.subr.mxu0 %v125
    %2475 = vmatpush1.msra.mxu0 %v124
    %2476 = vmatprep.subr.mxu0 %v121
    %2477 = vmatpush1.msra.mxu0 %v120
    %2478 = vmatprep.subr.mxu0 %v117
    %2479 = vmatpush1.msra.mxu0 %v116
    %2480 = vmatprep.subr.mxu0 %v113
    %2481 = vmatpush1.msra.mxu0 %v112
    %2482 = vmatprep.subr.mxu0 %v109
    %2483 = vmatpush1.msra.mxu0 %v108
    %2484 = vmatprep.subr.mxu0 %v105
    %2485 = vmatpush1.msra.mxu0 %v104
    %2486 = vmatprep.subr.mxu0 %v101
    %2487 = vmatpush1.msra.mxu0 %v100
    %2488 = vmatprep.subr.mxu0 %v97
    %2489 = vmatpush1.msra.mxu0 %v96
    %2490 = vmatprep.subr.mxu0 %v93
    %2491 = vmatpush1.msra.mxu0 %v92
    %2492 = vmatprep.subr.mxu0 %v89
    %2493 = vmatpush1.msra.mxu0 %v88
    %2494 = vmatprep.subr.mxu0 %v85
    %2495 = vmatpush1.msra.mxu0 %v84
    %2496 = vmatprep.subr.mxu0 %v81
    %2497 = vmatpush1.msra.mxu0 %v80
    %2498 = vmatprep.subr.mxu0 %v77
    %2499 = vmatpush1.msra.mxu0 %v76
    %2500 = vmatprep.subr.mxu0 %v73
    %2501 = vmatpush1.msra.mxu0 %v72
    %2502 = vmatprep.subr.mxu0 %v69
    %2503 = vmatpush1.msra.mxu0 %v68
    %2504 = vmatprep.subr.mxu0 %v193
    %2505 = vmatpush2.msra.mxu0 %v192
    %2506 = vmatprep.subr.mxu0 %v189
    %2507 = vmatpush2.msra.mxu0 %v188
    %2508 = vmatprep.subr.mxu0 %v185
    %2509 = vmatpush2.msra.mxu0 %v184
    %2510 = vmatprep.subr.mxu0 %v181
    %2511 = vmatpush2.msra.mxu0 %v180
    %2512 = vmatprep.subr.mxu0 %v177
    %2513 = vmatpush2.msra.mxu0 %v176
    %2514 = vmatprep.subr.mxu0 %v173
    %2515 = vmatpush2.msra.mxu0 %v172
    %2516 = vmatprep.subr.mxu0 %v169
    %2517 = vmatpush2.msra.mxu0 %v168
    %2518 = vmatprep.subr.mxu0 %v165
    %2519 = vmatpush2.msra.mxu0 %v164
    %2520 = vmatprep.subr.mxu0 %v161
    %2521 = vmatpush2.msra.mxu0 %v160
    %2522 = vmatprep.subr.mxu0 %v157
    %2523 = vmatpush2.msra.mxu0 %v156
    %2524 = vmatprep.subr.mxu0 %v153
    %2525 = vmatpush2.msra.mxu0 %v152
    %2526 = vmatprep.subr.mxu0 %v149
    %2527 = vmatpush2.msra.mxu0 %v148
    %2528 = vmatprep.subr.mxu0 %v145
    %2529 = vmatpush2.msra.mxu0 %v144
    %2530 = vmatprep.subr.mxu0 %v141
    %2531 = vmatpush2.msra.mxu0 %v140
    %2532 = vmatprep.subr.mxu0 %v137
    %2533 = vmatpush2.msra.mxu0 %v136
    %2534 = vmatprep.subr.mxu0 %v133
    %2535 = vmatpush2.msra.mxu0 %v132
    %2536 = vmatprep.mubr.f32.mxu0 %v2228
    %2537 = vmatmul.mubr.f32.gmra.mxu0 %v2400
    %v2538 = vpop.f32.mrf.mxu0
    %v2539 = vadd.f32 %v335, %v2538
    %v2540 = vpop.f32.mrf.mxu0
    %v2541 = vadd.f32 %v339, %v2540
    %2542 = vdwg.mxu0
    %v2543 = vxor.u32 %v2468, 2147483648
    %v2544 = vmul.f32 %v2543, 1.442695
    %v2545 = vpow.pop %v2544
    %v2546 = vadd.f32 %v2545, 1.0
    %v2547 = vrcp.pop %v2546
    %v2548 = vmul.f32 1.0, %v2547
    %v2549 = vxor.u32 %v2470, 2147483648
    %v2550 = vmul.f32 %v2549, 1.442695
    %v2551 = vpow.pop %v2550
    %v2552 = vadd.f32 %v2551, 1.0
    %v2553 = vrcp.pop %v2552
    %v2554 = vmul.f32 1.0, %v2553
    %v2555 = vtanh.pop %v2539
    %v2556 = vxor.u32 %v2541, 2147483648
    %v2557 = vmul.f32 %v2556, 1.442695
    %v2558 = vpow.pop %v2557
    %v2559 = vadd.f32 %v2558, 1.0
    %v2560 = vrcp.pop %v2559
    %v2561 = vmul.f32 1.0, %v2560
    %v2562 = vmul.f32 %v2554, %v2226
    %v2563 = vmul.f32 %v2548, %v2555
    %v2564 = vadd.f32 %v2562, %v2563
    %v2565 = vtanh.pop %v2564
    %v2566 = vmul.f32 %v2561, %v2565
    %s2567 = scalar_lea.vmem %s9, 48
    %2568 = vst [vmem:[%s2567] sm:$0xff] %v2566
    %v2569 = vld [vmem:[%s704] sm:$0xff]
    %2570 = vmatprep.subr.mxu0 %v255
    %2571 = vmatpush1.msra.mxu0 %v254
    %2572 = vmatprep.subr.mxu0 %v251
    %2573 = vmatpush1.msra.mxu0 %v250
    %2574 = vmatprep.subr.mxu0 %v247
    %2575 = vmatpush1.msra.mxu0 %v246
    %2576 = vmatprep.subr.mxu0 %v243
    %2577 = vmatpush1.msra.mxu0 %v242
    %2578 = vmatprep.subr.mxu0 %v239
    %2579 = vmatpush1.msra.mxu0 %v238
    %2580 = vmatprep.subr.mxu0 %v235
    %2581 = vmatpush1.msra.mxu0 %v234
    %2582 = vmatprep.subr.mxu0 %v231
    %2583 = vmatpush1.msra.mxu0 %v230
    %2584 = vmatprep.subr.mxu0 %v227
    %2585 = vmatpush1.msra.mxu0 %v226
    %2586 = vmatprep.subr.mxu0 %v223
    %2587 = vmatpush1.msra.mxu0 %v222
    %2588 = vmatprep.subr.mxu0 %v219
    %2589 = vmatpush1.msra.mxu0 %v218
    %2590 = vmatprep.subr.mxu0 %v215
    %2591 = vmatpush1.msra.mxu0 %v214
    %2592 = vmatprep.subr.mxu0 %v211
    %2593 = vmatpush1.msra.mxu0 %v210
    %2594 = vmatprep.subr.mxu0 %v207
    %2595 = vmatpush1.msra.mxu0 %v206
    %2596 = vmatprep.subr.mxu0 %v203
    %2597 = vmatpush1.msra.mxu0 %v202
    %2598 = vmatprep.subr.mxu0 %v199
    %2599 = vmatpush1.msra.mxu0 %v198
    %2600 = vmatprep.subr.mxu0 %v195
    %2601 = vmatpush1.msra.mxu0 %v194
    %2602 = vmatprep.subr.mxu0 %v319
    %2603 = vmatpush2.msra.mxu0 %v318
    %2604 = vmatprep.subr.mxu0 %v315
    %2605 = vmatpush2.msra.mxu0 %v314
    %2606 = vmatprep.subr.mxu0 %v311
    %2607 = vmatpush2.msra.mxu0 %v310
    %2608 = vmatprep.subr.mxu0 %v307
    %2609 = vmatpush2.msra.mxu0 %v306
    %2610 = vmatprep.subr.mxu0 %v303
    %2611 = vmatpush2.msra.mxu0 %v302
    %2612 = vmatprep.subr.mxu0 %v299
    %2613 = vmatpush2.msra.mxu0 %v298
    %2614 = vmatprep.subr.mxu0 %v295
    %2615 = vmatpush2.msra.mxu0 %v294
    %2616 = vmatprep.subr.mxu0 %v291
    %2617 = vmatpush2.msra.mxu0 %v290
    %2618 = vmatprep.subr.mxu0 %v287
    %2619 = vmatpush2.msra.mxu0 %v286
    %2620 = vmatprep.subr.mxu0 %v283
    %2621 = vmatpush2.msra.mxu0 %v282
    %2622 = vmatprep.subr.mxu0 %v279
    %2623 = vmatpush2.msra.mxu0 %v278
    %2624 = vmatprep.subr.mxu0 %v275
    %2625 = vmatpush2.msra.mxu0 %v274
    %2626 = vmatprep.subr.mxu0 %v271
    %2627 = vmatpush2.msra.mxu0 %v270
    %2628 = vmatprep.subr.mxu0 %v267
    %2629 = vmatpush2.msra.mxu0 %v266
    %2630 = vmatprep.subr.mxu0 %v263
    %2631 = vmatpush2.msra.mxu0 %v262
    %2632 = vmatprep.subr.mxu0 %v259
    %2633 = vmatpush2.msra.mxu0 %v258
    %2634 = vmatprep.mubr.f32.mxu0 %v2397
    %2635 = vmatmul.mubr.f32.gmra.mxu0 %v2569
    %v2636 = vpop.f32.mrf.mxu0
    %v2637 = vadd.f32 %v349, %v2636
    %v2638 = vpop.f32.mrf.mxu0
    %v2639 = vadd.f32 %v353, %v2638
    %2640 = vdwg.mxu0
    %2641 = vmatprep.subr.mxu0 %v257
    %2642 = vmatpush1.msra.mxu0 %v256
    %2643 = vmatprep.subr.mxu0 %v253
    %2644 = vmatpush1.msra.mxu0 %v252
    %2645 = vmatprep.subr.mxu0 %v249
    %2646 = vmatpush1.msra.mxu0 %v248
    %2647 = vmatprep.subr.mxu0 %v245
    %2648 = vmatpush1.msra.mxu0 %v244
    %2649 = vmatprep.subr.mxu0 %v241
    %2650 = vmatpush1.msra.mxu0 %v240
    %2651 = vmatprep.subr.mxu0 %v237
    %2652 = vmatpush1.msra.mxu0 %v236
    %2653 = vmatprep.subr.mxu0 %v233
    %2654 = vmatpush1.msra.mxu0 %v232
    %2655 = vmatprep.subr.mxu0 %v229
    %2656 = vmatpush1.msra.mxu0 %v228
    %2657 = vmatprep.subr.mxu0 %v225
    %2658 = vmatpush1.msra.mxu0 %v224
    %2659 = vmatprep.subr.mxu0 %v221
    %2660 = vmatpush1.msra.mxu0 %v220
    %2661 = vmatprep.subr.mxu0 %v217
    %2662 = vmatpush1.msra.mxu0 %v216
    %2663 = vmatprep.subr.mxu0 %v213
    %2664 = vmatpush1.msra.mxu0 %v212
    %2665 = vmatprep.subr.mxu0 %v209
    %2666 = vmatpush1.msra.mxu0 %v208
    %2667 = vmatprep.subr.mxu0 %v205
    %2668 = vmatpush1.msra.mxu0 %v204
    %2669 = vmatprep.subr.mxu0 %v201
    %2670 = vmatpush1.msra.mxu0 %v200
    %2671 = vmatprep.subr.mxu0 %v197
    %2672 = vmatpush1.msra.mxu0 %v196
    %2673 = vmatprep.subr.mxu0 %v321
    %2674 = vmatpush2.msra.mxu0 %v320
    %2675 = vmatprep.subr.mxu0 %v317
    %2676 = vmatpush2.msra.mxu0 %v316
    %2677 = vmatprep.subr.mxu0 %v313
    %2678 = vmatpush2.msra.mxu0 %v312
    %2679 = vmatprep.subr.mxu0 %v309
    %2680 = vmatpush2.msra.mxu0 %v308
    %2681 = vmatprep.subr.mxu0 %v305
    %2682 = vmatpush2.msra.mxu0 %v304
    %2683 = vmatprep.subr.mxu0 %v301
    %2684 = vmatpush2.msra.mxu0 %v300
    %2685 = vmatprep.subr.mxu0 %v297
    %2686 = vmatpush2.msra.mxu0 %v296
    %2687 = vmatprep.subr.mxu0 %v293
    %2688 = vmatpush2.msra.mxu0 %v292
    %2689 = vmatprep.subr.mxu0 %v289
    %2690 = vmatpush2.msra.mxu0 %v288
    %2691 = vmatprep.subr.mxu0 %v285
    %2692 = vmatpush2.msra.mxu0 %v284
    %2693 = vmatprep.subr.mxu0 %v281
    %2694 = vmatpush2.msra.mxu0 %v280
    %2695 = vmatprep.subr.mxu0 %v277
    %2696 = vmatpush2.msra.mxu0 %v276
    %2697 = vmatprep.subr.mxu0 %v273
    %2698 = vmatpush2.msra.mxu0 %v272
    %2699 = vmatprep.subr.mxu0 %v269
    %2700 = vmatpush2.msra.mxu0 %v268
    %2701 = vmatprep.subr.mxu0 %v265
    %2702 = vmatpush2.msra.mxu0 %v264
    %2703 = vmatprep.subr.mxu0 %v261
    %2704 = vmatpush2.msra.mxu0 %v260
    %2705 = vmatprep.mubr.f32.mxu0 %v2397
    %2706 = vmatmul.mubr.f32.gmra.mxu0 %v2569
    %v2707 = vpop.f32.mrf.mxu0
    %v2708 = vadd.f32 %v357, %v2707
    %v2709 = vpop.f32.mrf.mxu0
    %v2710 = vadd.f32 %v361, %v2709
    %2711 = vdwg.mxu0
    %v2712 = vxor.u32 %v2637, 2147483648
    %v2713 = vmul.f32 %v2712, 1.442695
    %v2714 = vpow.pop %v2713
    %v2715 = vadd.f32 %v2714, 1.0
    %v2716 = vrcp.pop %v2715
    %v2717 = vmul.f32 1.0, %v2716
    %v2718 = vxor.u32 %v2639, 2147483648
    %v2719 = vmul.f32 %v2718, 1.442695
    %v2720 = vpow.pop %v2719
    %v2721 = vadd.f32 %v2720, 1.0
    %v2722 = vrcp.pop %v2721
    %v2723 = vmul.f32 1.0, %v2722
    %v2724 = vtanh.pop %v2708
    %v2725 = vxor.u32 %v2710, 2147483648
    %v2726 = vmul.f32 %v2725, 1.442695
    %v2727 = vpow.pop %v2726
    %v2728 = vadd.f32 %v2727, 1.0
    %v2729 = vrcp.pop %v2728
    %v2730 = vmul.f32 1.0, %v2729
    %v2731 = vmul.f32 %v2723, %v2395
    %v2732 = vmul.f32 %v2717, %v2724
    %v2733 = vadd.f32 %v2731, %v2732
    %v2734 = vtanh.pop %v2733
    %v2735 = vmul.f32 %v2730, %v2734
    %s2736 = scalar_lea.vmem %s10, 8
    %2737 = vst [vmem:[%s2736] sm:$0xff] %v2735
    %v2738 = vld [vmem:[%s534] sm:$0xff]
    %2739 = vmatprep.subr.mxu0 %v127
    %2740 = vmatpush1.msra.mxu0 %v126
    %2741 = vmatprep.subr.mxu0 %v123
    %2742 = vmatpush1.msra.mxu0 %v122
    %2743 = vmatprep.subr.mxu0 %v119
    %2744 = vmatpush1.msra.mxu0 %v118
    %2745 = vmatprep.subr.mxu0 %v115
    %2746 = vmatpush1.msra.mxu0 %v114
    %2747 = vmatprep.subr.mxu0 %v111
    %2748 = vmatpush1.msra.mxu0 %v110
    %2749 = vmatprep.subr.mxu0 %v107
    %2750 = vmatpush1.msra.mxu0 %v106
    %2751 = vmatprep.subr.mxu0 %v103
    %2752 = vmatpush1.msra.mxu0 %v102
    %2753 = vmatprep.subr.mxu0 %v99
    %2754 = vmatpush1.msra.mxu0 %v98
    %2755 = vmatprep.subr.mxu0 %v95
    %2756 = vmatpush1.msra.mxu0 %v94
    %2757 = vmatprep.subr.mxu0 %v91
    %2758 = vmatpush1.msra.mxu0 %v90
    %2759 = vmatprep.subr.mxu0 %v87
    %2760 = vmatpush1.msra.mxu0 %v86
    %2761 = vmatprep.subr.mxu0 %v83
    %2762 = vmatpush1.msra.mxu0 %v82
    %2763 = vmatprep.subr.mxu0 %v79
    %2764 = vmatpush1.msra.mxu0 %v78
    %2765 = vmatprep.subr.mxu0 %v75
    %2766 = vmatpush1.msra.mxu0 %v74
    %2767 = vmatprep.subr.mxu0 %v71
    %2768 = vmatpush1.msra.mxu0 %v70
    %2769 = vmatprep.subr.mxu0 %v67
    %2770 = vmatpush1.msra.mxu0 %v66
    %2771 = vmatprep.subr.mxu0 %v191
    %2772 = vmatpush2.msra.mxu0 %v190
    %2773 = vmatprep.subr.mxu0 %v187
    %2774 = vmatpush2.msra.mxu0 %v186
    %2775 = vmatprep.subr.mxu0 %v183
    %2776 = vmatpush2.msra.mxu0 %v182
    %2777 = vmatprep.subr.mxu0 %v179
    %2778 = vmatpush2.msra.mxu0 %v178
    %2779 = vmatprep.subr.mxu0 %v175
    %2780 = vmatpush2.msra.mxu0 %v174
    %2781 = vmatprep.subr.mxu0 %v171
    %2782 = vmatpush2.msra.mxu0 %v170
    %2783 = vmatprep.subr.mxu0 %v167
    %2784 = vmatpush2.msra.mxu0 %v166
    %2785 = vmatprep.subr.mxu0 %v163
    %2786 = vmatpush2.msra.mxu0 %v162
    %2787 = vmatprep.subr.mxu0 %v159
    %2788 = vmatpush2.msra.mxu0 %v158
    %2789 = vmatprep.subr.mxu0 %v155
    %2790 = vmatpush2.msra.mxu0 %v154
    %2791 = vmatprep.subr.mxu0 %v151
    %2792 = vmatpush2.msra.mxu0 %v150
    %2793 = vmatprep.subr.mxu0 %v147
    %2794 = vmatpush2.msra.mxu0 %v146
    %2795 = vmatprep.subr.mxu0 %v143
    %2796 = vmatpush2.msra.mxu0 %v142
    %2797 = vmatprep.subr.mxu0 %v139
    %2798 = vmatpush2.msra.mxu0 %v138
    %2799 = vmatprep.subr.mxu0 %v135
    %2800 = vmatpush2.msra.mxu0 %v134
    %2801 = vmatprep.subr.mxu0 %v131
    %2802 = vmatpush2.msra.mxu0 %v130
    %2803 = vmatprep.mubr.f32.mxu0 %v2566
    %2804 = vmatmul.mubr.f32.gmra.mxu0 %v2738
    %v2805 = vpop.f32.mrf.mxu0
    %v2806 = vadd.f32 %v327, %v2805
    %v2807 = vpop.f32.mrf.mxu0
    %v2808 = vadd.f32 %v331, %v2807
    %2809 = vdwg.mxu0
    %2810 = vmatprep.subr.mxu0 %v129
    %2811 = vmatpush1.msra.mxu0 %v128
    %2812 = vmatprep.subr.mxu0 %v125
    %2813 = vmatpush1.msra.mxu0 %v124
    %2814 = vmatprep.subr.mxu0 %v121
    %2815 = vmatpush1.msra.mxu0 %v120
    %2816 = vmatprep.subr.mxu0 %v117
    %2817 = vmatpush1.msra.mxu0 %v116
    %2818 = vmatprep.subr.mxu0 %v113
    %2819 = vmatpush1.msra.mxu0 %v112
    %2820 = vmatprep.subr.mxu0 %v109
    %2821 = vmatpush1.msra.mxu0 %v108
    %2822 = vmatprep.subr.mxu0 %v105
    %2823 = vmatpush1.msra.mxu0 %v104
    %2824 = vmatprep.subr.mxu0 %v101
    %2825 = vmatpush1.msra.mxu0 %v100
    %2826 = vmatprep.subr.mxu0 %v97
    %2827 = vmatpush1.msra.mxu0 %v96
    %2828 = vmatprep.subr.mxu0 %v93
    %2829 = vmatpush1.msra.mxu0 %v92
    %2830 = vmatprep.subr.mxu0 %v89
    %2831 = vmatpush1.msra.mxu0 %v88
    %2832 = vmatprep.subr.mxu0 %v85
    %2833 = vmatpush1.msra.mxu0 %v84
    %2834 = vmatprep.subr.mxu0 %v81
    %2835 = vmatpush1.msra.mxu0 %v80
    %2836 = vmatprep.subr.mxu0 %v77
    %2837 = vmatpush1.msra.mxu0 %v76
    %2838 = vmatprep.subr.mxu0 %v73
    %2839 = vmatpush1.msra.mxu0 %v72
    %2840 = vmatprep.subr.mxu0 %v69
    %2841 = vmatpush1.msra.mxu0 %v68
    %2842 = vmatprep.subr.mxu0 %v193
    %2843 = vmatpush2.msra.mxu0 %v192
    %2844 = vmatprep.subr.mxu0 %v189
    %2845 = vmatpush2.msra.mxu0 %v188
    %2846 = vmatprep.subr.mxu0 %v185
    %2847 = vmatpush2.msra.mxu0 %v184
    %2848 = vmatprep.subr.mxu0 %v181
    %2849 = vmatpush2.msra.mxu0 %v180
    %2850 = vmatprep.subr.mxu0 %v177
    %2851 = vmatpush2.msra.mxu0 %v176
    %2852 = vmatprep.subr.mxu0 %v173
    %2853 = vmatpush2.msra.mxu0 %v172
    %2854 = vmatprep.subr.mxu0 %v169
    %2855 = vmatpush2.msra.mxu0 %v168
    %2856 = vmatprep.subr.mxu0 %v165
    %2857 = vmatpush2.msra.mxu0 %v164
    %2858 = vmatprep.subr.mxu0 %v161
    %2859 = vmatpush2.msra.mxu0 %v160
    %2860 = vmatprep.subr.mxu0 %v157
    %2861 = vmatpush2.msra.mxu0 %v156
    %2862 = vmatprep.subr.mxu0 %v153
    %2863 = vmatpush2.msra.mxu0 %v152
    %2864 = vmatprep.subr.mxu0 %v149
    %2865 = vmatpush2.msra.mxu0 %v148
    %2866 = vmatprep.subr.mxu0 %v145
    %2867 = vmatpush2.msra.mxu0 %v144
    %2868 = vmatprep.subr.mxu0 %v141
    %2869 = vmatpush2.msra.mxu0 %v140
    %2870 = vmatprep.subr.mxu0 %v137
    %2871 = vmatpush2.msra.mxu0 %v136
    %2872 = vmatprep.subr.mxu0 %v133
    %2873 = vmatpush2.msra.mxu0 %v132
    %2874 = vmatprep.mubr.f32.mxu0 %v2566
    %2875 = vmatmul.mubr.f32.gmra.mxu0 %v2738
    %v2876 = vpop.f32.mrf.mxu0
    %v2877 = vadd.f32 %v335, %v2876
    %v2878 = vpop.f32.mrf.mxu0
    %v2879 = vadd.f32 %v339, %v2878
    %2880 = vdwg.mxu0
    %v2881 = vxor.u32 %v2806, 2147483648
    %v2882 = vmul.f32 %v2881, 1.442695
    %v2883 = vpow.pop %v2882
    %v2884 = vadd.f32 %v2883, 1.0
    %v2885 = vrcp.pop %v2884
    %v2886 = vmul.f32 1.0, %v2885
    %v2887 = vxor.u32 %v2808, 2147483648
    %v2888 = vmul.f32 %v2887, 1.442695
    %v2889 = vpow.pop %v2888
    %v2890 = vadd.f32 %v2889, 1.0
    %v2891 = vrcp.pop %v2890
    %v2892 = vmul.f32 1.0, %v2891
    %v2893 = vtanh.pop %v2877
    %v2894 = vxor.u32 %v2879, 2147483648
    %v2895 = vmul.f32 %v2894, 1.442695
    %v2896 = vpow.pop %v2895
    %v2897 = vadd.f32 %v2896, 1.0
    %v2898 = vrcp.pop %v2897
    %v2899 = vmul.f32 1.0, %v2898
    %v2900 = vmul.f32 %v2892, %v2564
    %v2901 = vmul.f32 %v2886, %v2893
    %v2902 = vadd.f32 %v2900, %v2901
    %v2903 = vtanh.pop %v2902
    %v2904 = vmul.f32 %v2899, %v2903
    %s2905 = scalar_lea.vmem %s9, 56
    %2906 = vst [vmem:[%s2905] sm:$0xff] %v2904
    %v2907 = vld [vmem:[%s0] sm:$0xff]
    %2908 = vmatprep.subr.mxu0 %v255
    %2909 = vmatpush1.msra.mxu0 %v254
    %2910 = vmatprep.subr.mxu0 %v251
    %2911 = vmatpush1.msra.mxu0 %v250
    %2912 = vmatprep.subr.mxu0 %v247
    %2913 = vmatpush1.msra.mxu0 %v246
    %2914 = vmatprep.subr.mxu0 %v243
    %2915 = vmatpush1.msra.mxu0 %v242
    %2916 = vmatprep.subr.mxu0 %v239
    %2917 = vmatpush1.msra.mxu0 %v238
    %2918 = vmatprep.subr.mxu0 %v235
    %2919 = vmatpush1.msra.mxu0 %v234
    %2920 = vmatprep.subr.mxu0 %v231
    %2921 = vmatpush1.msra.mxu0 %v230
    %2922 = vmatprep.subr.mxu0 %v227
    %2923 = vmatpush1.msra.mxu0 %v226
    %2924 = vmatprep.subr.mxu0 %v223
    %2925 = vmatpush1.msra.mxu0 %v222
    %2926 = vmatprep.subr.mxu0 %v219
    %2927 = vmatpush1.msra.mxu0 %v218
    %2928 = vmatprep.subr.mxu0 %v215
    %2929 = vmatpush1.msra.mxu0 %v214
    %2930 = vmatprep.subr.mxu0 %v211
    %2931 = vmatpush1.msra.mxu0 %v210
    %2932 = vmatprep.subr.mxu0 %v207
    %2933 = vmatpush1.msra.mxu0 %v206
    %2934 = vmatprep.subr.mxu0 %v203
    %2935 = vmatpush1.msra.mxu0 %v202
    %2936 = vmatprep.subr.mxu0 %v199
    %2937 = vmatpush1.msra.mxu0 %v198
    %2938 = vmatprep.subr.mxu0 %v195
    %2939 = vmatpush1.msra.mxu0 %v194
    %2940 = vmatprep.subr.mxu0 %v319
    %2941 = vmatpush2.msra.mxu0 %v318
    %2942 = vmatprep.subr.mxu0 %v315
    %2943 = vmatpush2.msra.mxu0 %v314
    %2944 = vmatprep.subr.mxu0 %v311
    %2945 = vmatpush2.msra.mxu0 %v310
    %2946 = vmatprep.subr.mxu0 %v307
    %2947 = vmatpush2.msra.mxu0 %v306
    %2948 = vmatprep.subr.mxu0 %v303
    %2949 = vmatpush2.msra.mxu0 %v302
    %2950 = vmatprep.subr.mxu0 %v299
    %2951 = vmatpush2.msra.mxu0 %v298
    %2952 = vmatprep.subr.mxu0 %v295
    %2953 = vmatpush2.msra.mxu0 %v294
    %2954 = vmatprep.subr.mxu0 %v291
    %2955 = vmatpush2.msra.mxu0 %v290
    %2956 = vmatprep.subr.mxu0 %v287
    %2957 = vmatpush2.msra.mxu0 %v286
    %2958 = vmatprep.subr.mxu0 %v283
    %2959 = vmatpush2.msra.mxu0 %v282
    %2960 = vmatprep.subr.mxu0 %v279
    %2961 = vmatpush2.msra.mxu0 %v278
    %2962 = vmatprep.subr.mxu0 %v275
    %2963 = vmatpush2.msra.mxu0 %v274
    %2964 = vmatprep.subr.mxu0 %v271
    %2965 = vmatpush2.msra.mxu0 %v270
    %2966 = vmatprep.subr.mxu0 %v267
    %2967 = vmatpush2.msra.mxu0 %v266
    %2968 = vmatprep.subr.mxu0 %v263
    %2969 = vmatpush2.msra.mxu0 %v262
    %2970 = vmatprep.subr.mxu0 %v259
    %2971 = vmatpush2.msra.mxu0 %v258
    %2972 = vmatprep.mubr.f32.mxu0 %v2735
    %2973 = vmatmul.mubr.f32.gmra.mxu0 %v2907
    %v2974 = vpop.f32.mrf.mxu0
    %v2975 = vadd.f32 %v349, %v2974
    %v2976 = vpop.f32.mrf.mxu0
    %v2977 = vadd.f32 %v353, %v2976
    %2978 = vdwg.mxu0
    %2979 = vmatprep.subr.mxu0 %v257
    %2980 = vmatpush1.msra.mxu0 %v256
    %2981 = vmatprep.subr.mxu0 %v253
    %2982 = vmatpush1.msra.mxu0 %v252
    %2983 = vmatprep.subr.mxu0 %v249
    %2984 = vmatpush1.msra.mxu0 %v248
    %2985 = vmatprep.subr.mxu0 %v245
    %2986 = vmatpush1.msra.mxu0 %v244
    %2987 = vmatprep.subr.mxu0 %v241
    %2988 = vmatpush1.msra.mxu0 %v240
    %2989 = vmatprep.subr.mxu0 %v237
    %2990 = vmatpush1.msra.mxu0 %v236
    %2991 = vmatprep.subr.mxu0 %v233
    %2992 = vmatpush1.msra.mxu0 %v232
    %2993 = vmatprep.subr.mxu0 %v229
    %2994 = vmatpush1.msra.mxu0 %v228
    %2995 = vmatprep.subr.mxu0 %v225
    %2996 = vmatpush1.msra.mxu0 %v224
    %2997 = vmatprep.subr.mxu0 %v221
    %2998 = vmatpush1.msra.mxu0 %v220
    %2999 = vmatprep.subr.mxu0 %v217
    %3000 = vmatpush1.msra.mxu0 %v216
    %3001 = vmatprep.subr.mxu0 %v213
    %3002 = vmatpush1.msra.mxu0 %v212
    %3003 = vmatprep.subr.mxu0 %v209
    %3004 = vmatpush1.msra.mxu0 %v208
    %3005 = vmatprep.subr.mxu0 %v205
    %3006 = vmatpush1.msra.mxu0 %v204
    %3007 = vmatprep.subr.mxu0 %v201
    %3008 = vmatpush1.msra.mxu0 %v200
    %3009 = vmatprep.subr.mxu0 %v197
    %3010 = vmatpush1.msra.mxu0 %v196
    %3011 = vmatprep.subr.mxu0 %v321
    %3012 = vmatpush2.msra.mxu0 %v320
    %3013 = vmatprep.subr.mxu0 %v317
    %3014 = vmatpush2.msra.mxu0 %v316
    %3015 = vmatprep.subr.mxu0 %v313
    %3016 = vmatpush2.msra.mxu0 %v312
    %3017 = vmatprep.subr.mxu0 %v309
    %3018 = vmatpush2.msra.mxu0 %v308
    %3019 = vmatprep.subr.mxu0 %v305
    %3020 = vmatpush2.msra.mxu0 %v304
    %3021 = vmatprep.subr.mxu0 %v301
    %3022 = vmatpush2.msra.mxu0 %v300
    %3023 = vmatprep.subr.mxu0 %v297
    %3024 = vmatpush2.msra.mxu0 %v296
    %3025 = vmatprep.subr.mxu0 %v293
    %3026 = vmatpush2.msra.mxu0 %v292
    %3027 = vmatprep.subr.mxu0 %v289
    %3028 = vmatpush2.msra.mxu0 %v288
    %3029 = vmatprep.subr.mxu0 %v285
    %3030 = vmatpush2.msra.mxu0 %v284
    %3031 = vmatprep.subr.mxu0 %v281
    %3032 = vmatpush2.msra.mxu0 %v280
    %3033 = vmatprep.subr.mxu0 %v277
    %3034 = vmatpush2.msra.mxu0 %v276
    %3035 = vmatprep.subr.mxu0 %v273
    %3036 = vmatpush2.msra.mxu0 %v272
    %3037 = vmatprep.subr.mxu0 %v269
    %3038 = vmatpush2.msra.mxu0 %v268
    %3039 = vmatprep.subr.mxu0 %v265
    %3040 = vmatpush2.msra.mxu0 %v264
    %3041 = vmatprep.subr.mxu0 %v261
    %3042 = vmatpush2.msra.mxu0 %v260
    %3043 = vmatprep.mubr.f32.mxu0 %v2735
    %3044 = vmatmul.mubr.f32.gmra.mxu0 %v2907
    %v3045 = vpop.f32.mrf.mxu0
    %v3046 = vadd.f32 %v357, %v3045
    %v3047 = vpop.f32.mrf.mxu0
    %v3048 = vadd.f32 %v361, %v3047
    %3049 = vdwg.mxu0
    %v3050 = vxor.u32 %v2975, 2147483648
    %v3051 = vmul.f32 %v3050, 1.442695
    %v3052 = vpow.pop %v3051
    %v3053 = vadd.f32 %v3052, 1.0
    %v3054 = vrcp.pop %v3053
    %v3055 = vmul.f32 1.0, %v3054
    %v3056 = vxor.u32 %v2977, 2147483648
    %v3057 = vmul.f32 %v3056, 1.442695
    %v3058 = vpow.pop %v3057
    %v3059 = vadd.f32 %v3058, 1.0
    %v3060 = vrcp.pop %v3059
    %v3061 = vmul.f32 1.0, %v3060
    %v3062 = vtanh.pop %v3046
    %v3063 = vxor.u32 %v3048, 2147483648
    %v3064 = vmul.f32 %v3063, 1.442695
    %v3065 = vpow.pop %v3064
    %v3066 = vadd.f32 %v3065, 1.0
    %v3067 = vrcp.pop %v3066
    %v3068 = vmul.f32 1.0, %v3067
    %v3069 = vmul.f32 %v3061, %v2733
    %v3070 = vmul.f32 %v3055, %v3062
    %v3071 = vadd.f32 %v3069, %v3070
    %v3072 = vtanh.pop %v3071
    %v3073 = vmul.f32 %v3068, %v3072
    %3074 = vst [vmem:[%s10] sm:$0xff] %v3073
    %v3075 = vld [vmem:[%s5] sm:$0xff]
    %v3076 = vld [vmem:[%s5 + $0x8] sm:$0xff]
    %v3077 = vld [vmem:[%s5 + $0x10] sm:$0xff]
    %v3078 = vld [vmem:[%s5 + $0x18] sm:$0xff]
    %v3079 = vld [vmem:[%s5 + $0x20] sm:$0xff]
    %v3080 = vld [vmem:[%s5 + $0x28] sm:$0xff]
    %v3081 = vld [vmem:[%s5 + $0x30] sm:$0xff]
    %v3082 = vld [vmem:[%s5 + $0x38] sm:$0xff]
    %v3083 = vld [vmem:[%s5 + $0x40] sm:$0xff]
    %v3084 = vld [vmem:[%s5 + $0x48] sm:$0xff]
    %v3085 = vld [vmem:[%s5 + $0x50] sm:$0xff]
    %v3086 = vld [vmem:[%s5 + $0x58] sm:$0xff]
    %v3087 = vld [vmem:[%s5 + $0x60] sm:$0xff]
    %v3088 = vld [vmem:[%s5 + $0x68] sm:$0xff]
    %v3089 = vld [vmem:[%s5 + $0x70] sm:$0xff]
    %v3090 = vld [vmem:[%s5 + $0x78] sm:$0xff]
    %v3091 = vld [vmem:[%s5 + $0x80] sm:$0xff]
    %v3092 = vld [vmem:[%s5 + $0x88] sm:$0xff]
    %v3093 = vld [vmem:[%s5 + $0x90] sm:$0xff]
    %v3094 = vld [vmem:[%s5 + $0x98] sm:$0xff]
    %v3095 = vld [vmem:[%s5 + $0xa0] sm:$0xff]
    %v3096 = vld [vmem:[%s5 + $0xa8] sm:$0xff]
    %v3097 = vld [vmem:[%s5 + $0xb0] sm:$0xff]
    %v3098 = vld [vmem:[%s5 + $0xb8] sm:$0xff]
    %v3099 = vld [vmem:[%s5 + $0xc0] sm:$0xff]
    %v3100 = vld [vmem:[%s5 + $0xc8] sm:$0xff]
    %v3101 = vld [vmem:[%s5 + $0xd0] sm:$0xff]
    %v3102 = vld [vmem:[%s5 + $0xd8] sm:$0xff]
    %v3103 = vld [vmem:[%s5 + $0xe0] sm:$0xff]
    %v3104 = vld [vmem:[%s5 + $0xe8] sm:$0xff]
    %v3105 = vld [vmem:[%s5 + $0xf0] sm:$0xff]
    %v3106 = vld [vmem:[%s5 + $0xf8] sm:$0xff]
    %v3107 = vld [vmem:[%s6] sm:$0x1]
    %v3109 = vlaneseq
    %v3110 = vshrl.u32 %v3109, 7
    %v3111 = vsub.s32 0, %v3110
    %v3112 = vrot.slane %v3107, %v3111
    %3114 = vmatprep.subr.mxu0 0.0
    %3115 = vmatpush1.msra.mxu0 %v3090
    %3116 = vmatprep.subr.mxu0 0.0
    %3117 = vmatpush1.msra.mxu0 %v3089
    %3118 = vmatprep.subr.mxu0 0.0
    %3119 = vmatpush1.msra.mxu0 %v3088
    %3120 = vmatprep.subr.mxu0 0.0
    %3121 = vmatpush1.msra.mxu0 %v3087
    %3122 = vmatprep.subr.mxu0 0.0
    %3123 = vmatpush1.msra.mxu0 %v3086
    %3124 = vmatprep.subr.mxu0 0.0
    %3125 = vmatpush1.msra.mxu0 %v3085
    %3126 = vmatprep.subr.mxu0 0.0
    %3127 = vmatpush1.msra.mxu0 %v3084
    %3128 = vmatprep.subr.mxu0 0.0
    %3129 = vmatpush1.msra.mxu0 %v3083
    %3130 = vmatprep.subr.mxu0 0.0
    %3131 = vmatpush1.msra.mxu0 %v3082
    %3132 = vmatprep.subr.mxu0 0.0
    %3133 = vmatpush1.msra.mxu0 %v3081
    %3134 = vmatprep.subr.mxu0 0.0
    %3135 = vmatpush1.msra.mxu0 %v3080
    %3136 = vmatprep.subr.mxu0 0.0
    %3137 = vmatpush1.msra.mxu0 %v3079
    %3138 = vmatprep.subr.mxu0 0.0
    %3139 = vmatpush1.msra.mxu0 %v3078
    %3140 = vmatprep.subr.mxu0 0.0
    %3141 = vmatpush1.msra.mxu0 %v3077
    %3142 = vmatprep.subr.mxu0 0.0
    %3143 = vmatpush1.msra.mxu0 %v3076
    %3144 = vmatprep.subr.mxu0 0.0
    %3145 = vmatpush1.msra.mxu0 %v3075
    %3146 = vmatprep.subr.mxu0 0.0
    %3147 = vmatpush2.msra.mxu0 %v3106
    %3148 = vmatprep.subr.mxu0 0.0
    %3149 = vmatpush2.msra.mxu0 %v3105
    %3150 = vmatprep.subr.mxu0 0.0
    %3151 = vmatpush2.msra.mxu0 %v3104
    %3152 = vmatprep.subr.mxu0 0.0
    %3153 = vmatpush2.msra.mxu0 %v3103
    %3154 = vmatprep.subr.mxu0 0.0
    %3155 = vmatpush2.msra.mxu0 %v3102
    %3156 = vmatprep.subr.mxu0 0.0
    %3157 = vmatpush2.msra.mxu0 %v3101
    %3158 = vmatprep.subr.mxu0 0.0
    %3159 = vmatpush2.msra.mxu0 %v3100
    %3160 = vmatprep.subr.mxu0 0.0
    %3161 = vmatpush2.msra.mxu0 %v3099
    %3162 = vmatprep.subr.mxu0 0.0
    %3163 = vmatpush2.msra.mxu0 %v3098
    %3164 = vmatprep.subr.mxu0 0.0
    %3165 = vmatpush2.msra.mxu0 %v3097
    %3166 = vmatprep.subr.mxu0 0.0
    %3167 = vmatpush2.msra.mxu0 %v3096
    %3168 = vmatprep.subr.mxu0 0.0
    %3169 = vmatpush2.msra.mxu0 %v3095
    %3170 = vmatprep.subr.mxu0 0.0
    %3171 = vmatpush2.msra.mxu0 %v3094
    %3172 = vmatprep.subr.mxu0 0.0
    %3173 = vmatpush2.msra.mxu0 %v3093
    %3174 = vmatprep.subr.mxu0 0.0
    %3175 = vmatpush2.msra.mxu0 %v3092
    %3176 = vmatprep.subr.mxu0 0.0
    %3177 = vmatpush2.msra.mxu0 %v3091
    %3178 = vmatprep.mubr.f32.mxu0 %v3073
    %3179 = vmatmul.mubr.f32.gmra.mxu0 %v2904
    %v3180 = vpop.f32.mrf.mxu0
    %v3181 = vadd.f32 %v3112, %v3180
    %v3182 = vpop.f32.mrf.mxu0
    %3183 = vdwg.mxu0
    %3184 = vst [vmem:[#allocation7] sm:$0xff] %v3181
    %v3185 = vld [vmem:[%s7] sm:$0xff]
    %v3186 = vld [vmem:[%s7 + $0x8] sm:$0xff]
    %v3187 = vld [vmem:[%s7 + $0x10] sm:$0xff]
    %v3188 = vld [vmem:[%s7 + $0x18] sm:$0xff]
    %v3189 = vld [vmem:[%s7 + $0x20] sm:$0xff]
    %v3190 = vld [vmem:[%s7 + $0x28] sm:$0xff]
    %v3191 = vld [vmem:[%s7 + $0x30] sm:$0xff]
    %v3192 = vld [vmem:[%s7 + $0x38] sm:$0xff]
    %v3193 = vld [vmem:[%s7 + $0x40] sm:$0xff]
    %v3194 = vld [vmem:[%s7 + $0x48] sm:$0xff]
    %v3195 = vld [vmem:[%s7 + $0x50] sm:$0xff]
    %v3196 = vld [vmem:[%s7 + $0x58] sm:$0xff]
    %v3197 = vld [vmem:[%s7 + $0x60] sm:$0xff]
    %v3198 = vld [vmem:[%s7 + $0x68] sm:$0xff]
    %v3199 = vld [vmem:[%s7 + $0x70] sm:$0xff]
    %v3200 = vld [vmem:[%s7 + $0x78] sm:$0xff]
    %v3201 = vld [vmem:[%s7 + $0x80] sm:$0xff]
    %v3202 = vld [vmem:[%s7 + $0x88] sm:$0xff]
    %v3203 = vld [vmem:[%s7 + $0x90] sm:$0xff]
    %v3204 = vld [vmem:[%s7 + $0x98] sm:$0xff]
    %v3205 = vld [vmem:[%s7 + $0xa0] sm:$0xff]
    %v3206 = vld [vmem:[%s7 + $0xa8] sm:$0xff]
    %v3207 = vld [vmem:[%s7 + $0xb0] sm:$0xff]
    %v3208 = vld [vmem:[%s7 + $0xb8] sm:$0xff]
    %v3209 = vld [vmem:[%s7 + $0xc0] sm:$0xff]
    %v3210 = vld [vmem:[%s7 + $0xc8] sm:$0xff]
    %v3211 = vld [vmem:[%s7 + $0xd0] sm:$0xff]
    %v3212 = vld [vmem:[%s7 + $0xd8] sm:$0xff]
    %v3213 = vld [vmem:[%s7 + $0xe0] sm:$0xff]
    %v3214 = vld [vmem:[%s7 + $0xe8] sm:$0xff]
    %v3215 = vld [vmem:[%s7 + $0xf0] sm:$0xff]
    %v3216 = vld [vmem:[%s7 + $0xf8] sm:$0xff]
    %v3217 = vld [vmem:[%s8] sm:$0x1]
    %v3219 = vlaneseq
    %v3220 = vshrl.u32 %v3219, 7
    %v3221 = vsub.s32 0, %v3220
    %v3222 = vrot.slane %v3217, %v3221
    %3224 = vmatprep.subr.mxu0 0.0
    %3225 = vmatpush1.msra.mxu0 %v3200
    %3226 = vmatprep.subr.mxu0 0.0
    %3227 = vmatpush1.msra.mxu0 %v3199
    %3228 = vmatprep.subr.mxu0 0.0
    %3229 = vmatpush1.msra.mxu0 %v3198
    %3230 = vmatprep.subr.mxu0 0.0
    %3231 = vmatpush1.msra.mxu0 %v3197
    %3232 = vmatprep.subr.mxu0 0.0
    %3233 = vmatpush1.msra.mxu0 %v3196
    %3234 = vmatprep.subr.mxu0 0.0
    %3235 = vmatpush1.msra.mxu0 %v3195
    %3236 = vmatprep.subr.mxu0 0.0
    %3237 = vmatpush1.msra.mxu0 %v3194
    %3238 = vmatprep.subr.mxu0 0.0
    %3239 = vmatpush1.msra.mxu0 %v3193
    %3240 = vmatprep.subr.mxu0 0.0
    %3241 = vmatpush1.msra.mxu0 %v3192
    %3242 = vmatprep.subr.mxu0 0.0
    %3243 = vmatpush1.msra.mxu0 %v3191
    %3244 = vmatprep.subr.mxu0 0.0
    %3245 = vmatpush1.msra.mxu0 %v3190
    %3246 = vmatprep.subr.mxu0 0.0
    %3247 = vmatpush1.msra.mxu0 %v3189
    %3248 = vmatprep.subr.mxu0 0.0
    %3249 = vmatpush1.msra.mxu0 %v3188
    %3250 = vmatprep.subr.mxu0 0.0
    %3251 = vmatpush1.msra.mxu0 %v3187
    %3252 = vmatprep.subr.mxu0 0.0
    %3253 = vmatpush1.msra.mxu0 %v3186
    %3254 = vmatprep.subr.mxu0 0.0
    %3255 = vmatpush1.msra.mxu0 %v3185
    %3256 = vmatprep.subr.mxu0 0.0
    %3257 = vmatpush2.msra.mxu0 %v3216
    %3258 = vmatprep.subr.mxu0 0.0
    %3259 = vmatpush2.msra.mxu0 %v3215
    %3260 = vmatprep.subr.mxu0 0.0
    %3261 = vmatpush2.msra.mxu0 %v3214
    %3262 = vmatprep.subr.mxu0 0.0
    %3263 = vmatpush2.msra.mxu0 %v3213
    %3264 = vmatprep.subr.mxu0 0.0
    %3265 = vmatpush2.msra.mxu0 %v3212
    %3266 = vmatprep.subr.mxu0 0.0
    %3267 = vmatpush2.msra.mxu0 %v3211
    %3268 = vmatprep.subr.mxu0 0.0
    %3269 = vmatpush2.msra.mxu0 %v3210
    %3270 = vmatprep.subr.mxu0 0.0
    %3271 = vmatpush2.msra.mxu0 %v3209
    %3272 = vmatprep.subr.mxu0 0.0
    %3273 = vmatpush2.msra.mxu0 %v3208
    %3274 = vmatprep.subr.mxu0 0.0
    %3275 = vmatpush2.msra.mxu0 %v3207
    %3276 = vmatprep.subr.mxu0 0.0
    %3277 = vmatpush2.msra.mxu0 %v3206
    %3278 = vmatprep.subr.mxu0 0.0
    %3279 = vmatpush2.msra.mxu0 %v3205
    %3280 = vmatprep.subr.mxu0 0.0
    %3281 = vmatpush2.msra.mxu0 %v3204
    %3282 = vmatprep.subr.mxu0 0.0
    %3283 = vmatpush2.msra.mxu0 %v3203
    %3284 = vmatprep.subr.mxu0 0.0
    %3285 = vmatpush2.msra.mxu0 %v3202
    %3286 = vmatprep.subr.mxu0 0.0
    %3287 = vmatpush2.msra.mxu0 %v3201
    %3288 = vmatprep.mubr.f32.mxu0 %v3071
    %3289 = vmatmul.mubr.f32.gmra.mxu0 %v2902
    %v3290 = vpop.f32.mrf.mxu0
    %v3291 = vadd.f32 %v3222, %v3290
    %v3292 = vpop.f32.mrf.mxu0
    %3293 = vdwg.mxu0
    %3294 = vst [vmem:[#allocation8] sm:$0xff] %v3291
    // Predicated region
    $region46: #{encoder_forward.1} parent=1 // pred_check
      _
    $region47: #{encoder_forward.1} parent=1 // pred_check_branch
      %3296 = sbr.rel (0) target = $region49
    $region48: #{encoder_forward.1} parent=1 // pred_region
      _
    $region49: #{encoder_forward.1} parent=1 // pred_fallthru
      _
    // Predicated region
    $region50: #{encoder_forward.1} parent=1 // pred_check
      _
    $region51: #{encoder_forward.1} parent=1 // pred_check_branch
      %3298 = sbr.rel (0) target = $region53
    $region52: #{encoder_forward.1} parent=1 // pred_region
      _
    $region53: #{encoder_forward.1} parent=1 // pred_fallthru
      _
    // Predicated region
    $region54: #{encoder_forward.1} parent=1 // pred_check
      _
    $region55: #{encoder_forward.1} parent=1 // pred_check_branch
      %3300 = sbr.rel (0) target = $region57
    $region56: #{encoder_forward.1} parent=1 // pred_region
      %s3302 = ssub.s32 128, 128
      %3303 = vsyncadd [#allocation4], %s3302
      %s3305 = sshll.u32 [#allocation7], 4
      %s3306 = int_to_ptr.vmem [resolvable:$true] %s3305
      %3308 = dma.vmem_to_hbm [thread:$0]  %s3306, 128, %s11, [#allocation4]
    $region57: #{encoder_forward.1} parent=1 // pred_fallthru
      _
    // Predicated region
    $region58: #{encoder_forward.1} parent=1 // pred_check
      _
    $region59: #{encoder_forward.1} parent=1 // pred_check_branch
      %3310 = sbr.rel (0) target = $region61
    $region60: #{encoder_forward.1} parent=1 // pred_region
      %s3312 = ssub.s32 128, 128
      %3313 = vsyncadd [#allocation9], %s3312
      %s3315 = sshll.u32 [#allocation8], 4
      %s3316 = int_to_ptr.vmem [resolvable:$true] %s3315
      %3318 = dma.vmem_to_hbm [thread:$0]  %s3316, 128, %s12, [#allocation9]
    $region61: #{encoder_forward.1} parent=1 // pred_fallthru
      _
    // Predicated region
    $region62: #{encoder_forward.1} parent=1 // pred_check
      _
    $region63: #{encoder_forward.1} parent=1 // pred_check_branch
      %3320 = sbr.rel (0) target = $region65
    $region64: #{encoder_forward.1} parent=1 // pred_region
      _
    $region65: #{encoder_forward.1} parent=1 // pred_fallthru
      _
    // Predicated region
    $region66: #{encoder_forward.1} parent=1 // pred_check
      _
    $region67: #{encoder_forward.1} parent=1 // pred_check_branch
      %3322 = sbr.rel (0) target = $region69
    $region68: #{encoder_forward.1} parent=1 // pred_region
      _
    $region69: #{encoder_forward.1} parent=1 // pred_fallthru
      _
    // Predicated region
    $region70: #{encoder_forward.1} parent=1 // pred_check
      _
    $region71: #{encoder_forward.1} parent=1 // pred_check_branch
      %3324 = sbr.rel (0) target = $region73
    $region72: #{encoder_forward.1} parent=1 // pred_region
      %3325 = dma.done [#allocation4], 128
    $region73: #{encoder_forward.1} parent=1 // pred_fallthru
      _
    // Predicated region
    $region74: #{encoder_forward.1} parent=1 // pred_check
      _
    $region75: #{encoder_forward.1} parent=1 // pred_check_branch
      %3327 = sbr.rel (0) target = $region77
    $region76: #{encoder_forward.1} parent=1 // pred_region
      %3328 = dma.done [#allocation9], 128
    $region77: #{encoder_forward.1} parent=1 // pred_fallthru
      _
    %3329 = vsyncpa [#allocation3], 1
    %3330 = vsyncpa [#allocation6], 1
    %3331 = vsyncpa [#allocation4], 1
    %3332 = vsyncpa [#allocation9], 1

</llo_original>
